<compile_context>
chip_gen: v5e
topology: v5e:2x2
jax: 0.10.0
libtpu: 0.0.40
codegen_flags: <defaults>
</compile_context>

<pallas_src>
import numpy as np

import jax
import jax.numpy as jnp
from jax.experimental import pallas as pl
from jax.experimental.pallas import tpu as pltpu


LEAKY_SLOPE = 0.2
DROP_P = 0.3
KEEP_P = 1.0 - DROP_P
INV_KEEP = float(1.0 / KEEP_P)
# uint32 threshold for "keep": keep iff hash_u32 < KEEP_P * 2^32.
KEEP_THRESH = np.uint32(int(KEEP_P * (2 ** 32)))

# Per-layer salts for the dropout hash (constants < 2^31, int32-safe).
_LAYER_SALTS = (0x243F6A88, 0x13198A2E, 0x3707344A)
_BLOCK_SALT = 0x01000193  # FNV prime; decorrelates batch blocks / cores


def _leaky_relu(x):
    # slope < 1  =>  leaky_relu(x) == max(x, slope * x)   (one fewer VPU op)
    return jnp.maximum(x, LEAKY_SLOPE * x)


def _keep_mask(shape, salt_i32):
    """Bernoulli(KEEP_P) keep-mask from an integer hash (lowbias32 mixer).

    Pure VPU integer ops -> lowers on TPU hardware *and* in interpret mode
    (the TPU hardware PRNG primitives have no CPU/interpret lowering).
    """
    r = jax.lax.broadcasted_iota(jnp.int32, shape, 0)
    c = jax.lax.broadcasted_iota(jnp.int32, shape, 1)
    x = (r * shape[1] + c + salt_i32).astype(jnp.uint32)
    x = x * jnp.uint32(0x9E3779B9)
    x = x ^ (x >> 16)
    x = x * jnp.uint32(0x7FEB352D)
    x = x ^ (x >> 15)
    x = x * jnp.uint32(0x846CA68B)
    x = x ^ (x >> 16)
    return x < KEEP_THRESH


def _dropout(x, salt_i32):
    # Inverted dropout with the 1/keep_prob scale folded into the *next*
    # layer's weights (see init_params), so only a masked zero remains here.
    return jnp.where(_keep_mask(x.shape, salt_i32), x, 0.0)


def discriminator_kernel(seed_ref,
                         x_ref,
                         w1_ref, b1_ref,
                         w2_ref, b2_ref,
                         w3_ref, b3_ref,
                         w4_ref, b4_ref,
                         o_ref):
    # Per-block salt so different batch blocks (and v7x cores) get independent
    # dropout masks.
    salt = seed_ref[0] + pl.program_id(0) * _BLOCK_SALT

    x = x_ref[...]
    if x.dtype != jnp.bfloat16:          # accept native bf16 x without a cast
        x = x.astype(jnp.bfloat16)

    # fc1 + leaky_relu + dropout   (bf16 MXU inputs, f32 accumulate/elementwise)
    h = jnp.dot(x, w1_ref[...], preferred_element_type=jnp.float32) + b1_ref[...]
    h = _dropout(_leaky_relu(h), salt ^ _LAYER_SALTS[0])

    # fc2 + leaky_relu + dropout
    h = jnp.dot(h.astype(jnp.bfloat16), w2_ref[...],
                preferred_element_type=jnp.float32) + b2_ref[...]
    h = _dropout(_leaky_relu(h), salt ^ _LAYER_SALTS[1])

    # fc3 + leaky_relu + dropout
    h = jnp.dot(h.astype(jnp.bfloat16), w3_ref[...],
                preferred_element_type=jnp.float32) + b3_ref[...]
    h = _dropout(_leaky_relu(h), salt ^ _LAYER_SALTS[2])

    # fc4 + sigmoid: N=1 matmul as a VPU multiply + lane reduction.
    # w4_ref is [1, 256] (torch layout, f32), broadcasting over batch rows.
    logits = jnp.sum(h * w4_ref[...], axis=-1, keepdims=True) + b4_ref[...]
    o_ref[...] = jax.nn.sigmoid(logits)


def _round_up(n, m):
    return ((n + m - 1) // m) * m


def _choose_block_b(B):
    """Batch rows per grid step.

    Whole batch while tiny; otherwise at least two blocks (so the 'parallel'
    grid axis can shard across v7x's two TensorCores), capped at 1024 rows
    (big tiles amortize the ~0.35 us per-step overhead; weights stay pinned).
    """
    if B <= 64:
        return B
    return min(1024, _round_up((B + 1) // 2, 8))


def _vmem_limit_bytes(block_b, d_in, weight_buffers):
    """Shape-derived VMEM request (instead of a hard-coded constant)."""
    w_bytes = weight_buffers * (
        (d_in * 1024 + 1024 * 512 + 512 * 256) * 2       # bf16 w1..w3
        + 256 * 4                                         # f32 w4 row
        + (1024 + 512 + 256 + 1) * 4)                     # f32 biases
    x_bytes = 2 * block_b * d_in * 4                      # double-buffered x
    o_bytes = 2 * block_b * 4                             # double-buffered out
    act_bytes = block_b * (2 * 1024 + 512 + 256) * 4      # live f32 intermediates (est.)
    total = int((w_bytes + x_bytes + o_bytes + act_bytes) * 1.5) + (4 << 20)
    return max(16 << 20, min(total, 48 << 20))            # <=48 MiB fits v7x's 64 MiB


def _build_call(B, D, block_b, single_buffer_weights):
    grid = (pl.cdiv(B, block_b),)

    pinned_kwargs = {}
    if single_buffer_weights:
        # Pinned blocks never change -> no need for double buffering.
        pinned_kwargs["pipeline_mode"] = pl.Buffered(1)

    def pinned(shape):
        return pl.BlockSpec(shape, lambda i, seed_ref: (0, 0), **pinned_kwargs)

    grid_spec = pltpu.PrefetchScalarGridSpec(
        num_scalar_prefetch=1,                              # seed -> SMEM
        grid=grid,
        in_specs=[
            pl.BlockSpec((block_b, D), lambda i, seed_ref: (i, 0)),   # x
            pinned((D, 1024)), pinned((1, 1024)),
            pinned((1024, 512)), pinned((1, 512)),
            pinned((512, 256)), pinned((1, 256)),
            pinned((1, 256)), pinned((1, 1)),
        ],
        out_specs=pl.BlockSpec((block_b, 1), lambda i, seed_ref: (i, 0)),
    )
    # TODO(synk): on v5e a lane-dense (1, block_b) logits layout would avoid
    # masked vst.msk partial stores; kept (block_b, 1) for simplicity.

    weight_buffers = 1 if single_buffer_weights else 2
    return pl.pallas_call(
        discriminator_kernel,
        out_shape=jax.ShapeDtypeStruct((B, 1), jnp.float32),
        grid_spec=grid_spec,
        compiler_params=pltpu.CompilerParams(
            dimension_semantics=("parallel",),
            vmem_limit_bytes=_vmem_limit_bytes(block_b, D, weight_buffers),
        ),
    )


def discriminator_forward(seed, x, params):
    (w1, b1), (w2, b2), (w3, b3), (w4, b4) = params
    B, D = x.shape
    block_b = _choose_block_b(B)
    args = (seed, x, w1, b1, w2, b2, w3, b3, w4, b4)
    try:
        return _build_call(B, D, block_b, single_buffer_weights=True)(*args)
    except Exception:
        # Fallback for JAX versions that reject pipeline_mode=pl.Buffered(1)
        # on a top-level pallas_call BlockSpec (weights then double-buffered).
        return _build_call(B, D, block_b, single_buffer_weights=False)(*args)


def init_params(key, input_dim):
    """nn.init.normal_(param, mean=0, std=0.01) for every weight and bias.

    * Weights are stored as [in, out] (= torch W.T) so y = x @ W + b.
    * w1..w3 are bf16 (cheap weight streaming to the MXU); w4 is kept in torch
      layout [1, 256] f32 because it is consumed on the VPU (mul + reduce).
    * The inverted-dropout 1/keep_prob scale of the dropout preceding a layer
      is folded into that layer's weights (w2, w3, w4):
          (mask * x / p) @ W + b == (mask * x) @ (W / p) + b     (exact)
      so the in-kernel dropout is a plain masked zero.  Do the same fold when
      importing torch weights.  Valid because dropout is always on in the
      reference forward (F.dropout default training=True).
    * Biases are f32 rows [1, out].
    """
    dims = [(input_dim, 1024), (1024, 512), (512, 256), (256, 1)]
    params = []
    for li, (d_in, d_out) in enumerate(dims):
        key, kw, kb = jax.random.split(key, 3)
        w = 0.01 * jax.random.normal(kw, (d_in, d_out), dtype=jnp.float32)
        b = 0.01 * jax.random.normal(kb, (1, d_out), dtype=jnp.float32)
        if li > 0:
            w = w * INV_KEEP                # fold previous dropout's 1/keep_p
        if li < 3:
            w = w.astype(jnp.bfloat16)      # streamed to the MXU as bf16
        else:
            w = w.reshape(1, d_in)          # [1, 256] torch layout, f32 head
        params.append((w, b))
    return params


if __name__ == "__main__":
    key = jax.random.PRNGKey(0)
    key, k_x = jax.random.split(key)

    B = 8            # small batch
    INPUT_DIM = 64   # discriminator input dimensionality

    x = jax.random.normal(k_x, (B, INPUT_DIM), dtype=jnp.float32)
    params = init_params(key, INPUT_DIM)
    seed = jnp.array([1234], dtype=jnp.int32)

    out = discriminator_forward(seed, x, params)
    out = jax.block_until_ready(out)
    assert out.shape == (B, 1)
    assert bool(jnp.all((out >= 0.0) & (out <= 1.0)))

    # Also exercise the multi-block path (grid=(2,), partial final block).
    B2 = 200
    x2 = jax.random.normal(jax.random.PRNGKey(7), (B2, INPUT_DIM),
                           dtype=jnp.float32)
    out2 = jax.block_until_ready(discriminator_forward(seed, x2, params))
    assert out2.shape == (B2, 1)
    assert bool(jnp.all((out2 >= 0.0) & (out2 <= 1.0)))

    print("KERNEL_OK")
</pallas_src>

<mosaic_0001>
module attributes {stable_mosaic.version = 11 : i64} {
  func.func @discriminator_kernel(%arg0: i32, %arg1: memref<1xi32, #tpu.memory_space<smem>>, %arg2: memref<8x64xf32, #tpu.memory_space<vmem>>, %arg3: memref<64x1024xbf16, #tpu.memory_space<vmem>>, %arg4: memref<1x1024xf32, #tpu.memory_space<vmem>>, %arg5: memref<1024x512xbf16, #tpu.memory_space<vmem>>, %arg6: memref<1x512xf32, #tpu.memory_space<vmem>>, %arg7: memref<512x256xbf16, #tpu.memory_space<vmem>>, %arg8: memref<1x256xf32, #tpu.memory_space<vmem>>, %arg9: memref<1x256xf32, #tpu.memory_space<vmem>>, %arg10: memref<1x1xf32, #tpu.memory_space<vmem>>, %arg11: memref<8x1xf32, #tpu.memory_space<vmem>>) attributes {dimension_semantics = [#tpu.dimension_semantics<parallel>], iteration_bounds = array<i64: 1>, scalar_prefetch = 1 : i64, scratch_operands = 0 : i64, tpu.core_type = #tpu.core_type<tc>, window_params = [{transform_indices = @transform_0, window_bounds = array<i64: 8, 64>}, {pipeline_mode = #tpu.pipeline_mode<synchronous>, transform_indices = @transform_1, window_bounds = array<i64: 64, 1024>}, {pipeline_mode = #tpu.pipeline_mode<synchronous>, transform_indices = @transform_2, window_bounds = array<i64: 1, 1024>}, {pipeline_mode = #tpu.pipeline_mode<synchronous>, transform_indices = @transform_3, window_bounds = array<i64: 1024, 512>}, {pipeline_mode = #tpu.pipeline_mode<synchronous>, transform_indices = @transform_4, window_bounds = array<i64: 1, 512>}, {pipeline_mode = #tpu.pipeline_mode<synchronous>, transform_indices = @transform_5, window_bounds = array<i64: 512, 256>}, {pipeline_mode = #tpu.pipeline_mode<synchronous>, transform_indices = @transform_6, window_bounds = array<i64: 1, 256>}, {pipeline_mode = #tpu.pipeline_mode<synchronous>, transform_indices = @transform_7, window_bounds = array<i64: 1, 256>}, {pipeline_mode = #tpu.pipeline_mode<synchronous>, transform_indices = @transform_8, window_bounds = array<i64: 1, 1>}, {transform_indices = @transform_9, window_bounds = array<i64: 8, 1>}]} {
    %c0 = arith.constant 0 : index
    %0 = memref.load %arg1[%c0] : memref<1xi32, #tpu.memory_space<smem>>
    %c16777619_i32 = arith.constant 16777619 : i32
    %1 = arith.muli %arg0, %c16777619_i32 : i32
    %2 = arith.addi %0, %1 : i32
    %c0_0 = arith.constant 0 : index
    %c0_1 = arith.constant 0 : index
    %3 = vector.load %arg2[%c0_0, %c0_1] : memref<8x64xf32, #tpu.memory_space<vmem>>, vector<8x64xf32>
    %4 = arith.truncf %3 : vector<8x64xf32> to vector<8x64xbf16>
    %c0_2 = arith.constant 0 : index
    %c0_3 = arith.constant 0 : index
    %5 = vector.load %arg3[%c0_2, %c0_3] : memref<64x1024xbf16, #tpu.memory_space<vmem>>, vector<64x1024xbf16>
    %cst = arith.constant dense<0.000000e+00> : vector<8x1024xf32>
    %6 = tpu.matmul %4, %5, %cst {dimension_numbers = #tpu.dot_dimension_numbers<[1], [0], [0], [1], [0, 0, 1, 1], [], []>} : vector<8x64xbf16>, vector<64x1024xbf16>, vector<8x1024xf32> -> vector<8x1024xf32>
    %c0_4 = arith.constant 0 : index
    %c0_5 = arith.constant 0 : index
    %7 = vector.load %arg4[%c0_4, %c0_5] : memref<1x1024xf32, #tpu.memory_space<vmem>>, vector<1x1024xf32>
    %8 = vector.broadcast %7 : vector<1x1024xf32> to vector<8x1024xf32>
    %9 = arith.addf %6, %8 : vector<8x1024xf32>
    %cst_6 = arith.constant 2.000000e-01 : f32
    %10 = vector.broadcast %cst_6 : f32 to vector<8x1024xf32>
    %11 = arith.mulf %10, %9 : vector<8x1024xf32>
    %12 = arith.maximumf %9, %11 : vector<8x1024xf32>
    %c608135816_i32 = arith.constant 608135816 : i32
    %13 = arith.xori %2, %c608135816_i32 : i32
    %14 = tpu.iota {dimensions = array<i32: 0>} : vector<8x1024xi32>
    %15 = tpu.iota {dimensions = array<i32: 1>} : vector<8x1024xi32>
    %c1024_i32 = arith.constant 1024 : i32
    %16 = vector.broadcast %c1024_i32 : i32 to vector<8x1024xi32>
    %17 = arith.muli %14, %16 : vector<8x1024xi32>
    %18 = arith.addi %17, %15 : vector<8x1024xi32>
    %19 = vector.broadcast %13 : i32 to vector<8x1024xi32>
    %20 = arith.addi %18, %19 : vector<8x1024xi32>
    %c-1640531527_i32 = arith.constant -1640531527 : i32
    %21 = vector.broadcast %c-1640531527_i32 : i32 to vector<8x1024xi32>
    %22 = arith.muli %20, %21 : vector<8x1024xi32>
    %c16_i32 = arith.constant 16 : i32
    %23 = vector.broadcast %c16_i32 : i32 to vector<8x1024xi32>
    %24 = arith.shrui %22, %23 : vector<8x1024xi32>
    %25 = arith.xori %22, %24 : vector<8x1024xi32>
    %c2146121005_i32 = arith.constant 2146121005 : i32
    %26 = vector.broadcast %c2146121005_i32 : i32 to vector<8x1024xi32>
    %27 = arith.muli %25, %26 : vector<8x1024xi32>
    %c15_i32 = arith.constant 15 : i32
    %28 = vector.broadcast %c15_i32 : i32 to vector<8x1024xi32>
    %29 = arith.shrui %27, %28 : vector<8x1024xi32>
    %30 = arith.xori %27, %29 : vector<8x1024xi32>
    %c-2073254261_i32 = arith.constant -2073254261 : i32
    %31 = vector.broadcast %c-2073254261_i32 : i32 to vector<8x1024xi32>
    %32 = arith.muli %30, %31 : vector<8x1024xi32>
    %c16_i32_7 = arith.constant 16 : i32
    %33 = vector.broadcast %c16_i32_7 : i32 to vector<8x1024xi32>
    %34 = arith.shrui %32, %33 : vector<8x1024xi32>
    %35 = arith.xori %32, %34 : vector<8x1024xi32>
    %c-1288490189_i32 = arith.constant -1288490189 : i32
    %36 = vector.broadcast %c-1288490189_i32 : i32 to vector<8x1024xi32>
    %37 = arith.cmpi ult, %35, %36 : vector<8x1024xi32>
    %cst_8 = arith.constant 0.000000e+00 : f32
    %38 = vector.broadcast %cst_8 : f32 to vector<8x1024xf32>
    %39 = arith.select %37, %12, %38 : vector<8x1024xi1>, vector<8x1024xf32>
    %40 = arith.truncf %39 : vector<8x1024xf32> to vector<8x1024xbf16>
    %c0_9 = arith.constant 0 : index
    %c0_10 = arith.constant 0 : index
    %41 = vector.load %arg5[%c0_9, %c0_10] : memref<1024x512xbf16, #tpu.memory_space<vmem>>, vector<1024x512xbf16>
    %cst_11 = arith.constant dense<0.000000e+00> : vector<8x512xf32>
    %42 = tpu.matmul %40, %41, %cst_11 {dimension_numbers = #tpu.dot_dimension_numbers<[1], [0], [0], [1], [0, 0, 1, 1], [], []>} : vector<8x1024xbf16>, vector<1024x512xbf16>, vector<8x512xf32> -> vector<8x512xf32>
    %c0_12 = arith.constant 0 : index
    %c0_13 = arith.constant 0 : index
    %43 = vector.load %arg6[%c0_12, %c0_13] : memref<1x512xf32, #tpu.memory_space<vmem>>, vector<1x512xf32>
    %44 = vector.broadcast %43 : vector<1x512xf32> to vector<8x512xf32>
    %45 = arith.addf %42, %44 : vector<8x512xf32>
    %cst_14 = arith.constant 2.000000e-01 : f32
    %46 = vector.broadcast %cst_14 : f32 to vector<8x512xf32>
    %47 = arith.mulf %46, %45 : vector<8x512xf32>
    %48 = arith.maximumf %45, %47 : vector<8x512xf32>
    %c320440878_i32 = arith.constant 320440878 : i32
    %49 = arith.xori %2, %c320440878_i32 : i32
    %50 = tpu.iota {dimensions = array<i32: 0>} : vector<8x512xi32>
    %51 = tpu.iota {dimensions = array<i32: 1>} : vector<8x512xi32>
    %c512_i32 = arith.constant 512 : i32
    %52 = vector.broadcast %c512_i32 : i32 to vector<8x512xi32>
    %53 = arith.muli %50, %52 : vector<8x512xi32>
    %54 = arith.addi %53, %51 : vector<8x512xi32>
    %55 = vector.broadcast %49 : i32 to vector<8x512xi32>
    %56 = arith.addi %54, %55 : vector<8x512xi32>
    %c-1640531527_i32_15 = arith.constant -1640531527 : i32
    %57 = vector.broadcast %c-1640531527_i32_15 : i32 to vector<8x512xi32>
    %58 = arith.muli %56, %57 : vector<8x512xi32>
    %c16_i32_16 = arith.constant 16 : i32
    %59 = vector.broadcast %c16_i32_16 : i32 to vector<8x512xi32>
    %60 = arith.shrui %58, %59 : vector<8x512xi32>
    %61 = arith.xori %58, %60 : vector<8x512xi32>
    %c2146121005_i32_17 = arith.constant 2146121005 : i32
    %62 = vector.broadcast %c2146121005_i32_17 : i32 to vector<8x512xi32>
    %63 = arith.muli %61, %62 : vector<8x512xi32>
    %c15_i32_18 = arith.constant 15 : i32
    %64 = vector.broadcast %c15_i32_18 : i32 to vector<8x512xi32>
    %65 = arith.shrui %63, %64 : vector<8x512xi32>
    %66 = arith.xori %63, %65 : vector<8x512xi32>
    %c-2073254261_i32_19 = arith.constant -2073254261 : i32
    %67 = vector.broadcast %c-2073254261_i32_19 : i32 to vector<8x512xi32>
    %68 = arith.muli %66, %67 : vector<8x512xi32>
    %c16_i32_20 = arith.constant 16 : i32
    %69 = vector.broadcast %c16_i32_20 : i32 to vector<8x512xi32>
    %70 = arith.shrui %68, %69 : vector<8x512xi32>
    %71 = arith.xori %68, %70 : vector<8x512xi32>
    %c-1288490189_i32_21 = arith.constant -1288490189 : i32
    %72 = vector.broadcast %c-1288490189_i32_21 : i32 to vector<8x512xi32>
    %73 = arith.cmpi ult, %71, %72 : vector<8x512xi32>
    %cst_22 = arith.constant 0.000000e+00 : f32
    %74 = vector.broadcast %cst_22 : f32 to vector<8x512xf32>
    %75 = arith.select %73, %48, %74 : vector<8x512xi1>, vector<8x512xf32>
    %76 = arith.truncf %75 : vector<8x512xf32> to vector<8x512xbf16>
    %c0_23 = arith.constant 0 : index
    %c0_24 = arith.constant 0 : index
    %77 = vector.load %arg7[%c0_23, %c0_24] : memref<512x256xbf16, #tpu.memory_space<vmem>>, vector<512x256xbf16>
    %cst_25 = arith.constant dense<0.000000e+00> : vector<8x256xf32>
    %78 = tpu.matmul %76, %77, %cst_25 {dimension_numbers = #tpu.dot_dimension_numbers<[1], [0], [0], [1], [0, 0, 1, 1], [], []>} : vector<8x512xbf16>, vector<512x256xbf16>, vector<8x256xf32> -> vector<8x256xf32>
    %c0_26 = arith.constant 0 : index
    %c0_27 = arith.constant 0 : index
    %79 = vector.load %arg8[%c0_26, %c0_27] : memref<1x256xf32, #tpu.memory_space<vmem>>, vector<1x256xf32>
    %80 = vector.broadcast %79 : vector<1x256xf32> to vector<8x256xf32>
    %81 = arith.addf %78, %80 : vector<8x256xf32>
    %cst_28 = arith.constant 2.000000e-01 : f32
    %82 = vector.broadcast %cst_28 : f32 to vector<8x256xf32>
    %83 = arith.mulf %82, %81 : vector<8x256xf32>
    %84 = arith.maximumf %81, %83 : vector<8x256xf32>
    %c923219018_i32 = arith.constant 923219018 : i32
    %85 = arith.xori %2, %c923219018_i32 : i32
    %86 = tpu.iota {dimensions = array<i32: 0>} : vector<8x256xi32>
    %87 = tpu.iota {dimensions = array<i32: 1>} : vector<8x256xi32>
    %c256_i32 = arith.constant 256 : i32
    %88 = vector.broadcast %c256_i32 : i32 to vector<8x256xi32>
    %89 = arith.muli %86, %88 : vector<8x256xi32>
    %90 = arith.addi %89, %87 : vector<8x256xi32>
    %91 = vector.broadcast %85 : i32 to vector<8x256xi32>
    %92 = arith.addi %90, %91 : vector<8x256xi32>
    %c-1640531527_i32_29 = arith.constant -1640531527 : i32
    %93 = vector.broadcast %c-1640531527_i32_29 : i32 to vector<8x256xi32>
    %94 = arith.muli %92, %93 : vector<8x256xi32>
    %c16_i32_30 = arith.constant 16 : i32
    %95 = vector.broadcast %c16_i32_30 : i32 to vector<8x256xi32>
    %96 = arith.shrui %94, %95 : vector<8x256xi32>
    %97 = arith.xori %94, %96 : vector<8x256xi32>
    %c2146121005_i32_31 = arith.constant 2146121005 : i32
    %98 = vector.broadcast %c2146121005_i32_31 : i32 to vector<8x256xi32>
    %99 = arith.muli %97, %98 : vector<8x256xi32>
    %c15_i32_32 = arith.constant 15 : i32
    %100 = vector.broadcast %c15_i32_32 : i32 to vector<8x256xi32>
    %101 = arith.shrui %99, %100 : vector<8x256xi32>
    %102 = arith.xori %99, %101 : vector<8x256xi32>
    %c-2073254261_i32_33 = arith.constant -2073254261 : i32
    %103 = vector.broadcast %c-2073254261_i32_33 : i32 to vector<8x256xi32>
    %104 = arith.muli %102, %103 : vector<8x256xi32>
    %c16_i32_34 = arith.constant 16 : i32
    %105 = vector.broadcast %c16_i32_34 : i32 to vector<8x256xi32>
    %106 = arith.shrui %104, %105 : vector<8x256xi32>
    %107 = arith.xori %104, %106 : vector<8x256xi32>
    %c-1288490189_i32_35 = arith.constant -1288490189 : i32
    %108 = vector.broadcast %c-1288490189_i32_35 : i32 to vector<8x256xi32>
    %109 = arith.cmpi ult, %107, %108 : vector<8x256xi32>
    %cst_36 = arith.constant 0.000000e+00 : f32
    %110 = vector.broadcast %cst_36 : f32 to vector<8x256xf32>
    %111 = arith.select %109, %84, %110 : vector<8x256xi1>, vector<8x256xf32>
    %c0_37 = arith.constant 0 : index
    %c0_38 = arith.constant 0 : index
    %112 = vector.load %arg9[%c0_37, %c0_38] : memref<1x256xf32, #tpu.memory_space<vmem>>, vector<1x256xf32>
    %113 = vector.broadcast %112 : vector<1x256xf32> to vector<8x256xf32>
    %114 = arith.mulf %111, %113 : vector<8x256xf32>
    %cst_39 = arith.constant dense<0.000000e+00> : vector<8xf32>
    %115 = vector.multi_reduction <add>, %114, %cst_39 [1] : vector<8x256xf32> to vector<8xf32>
    %116 = vector.shape_cast %115 : vector<8xf32> to vector<8x1xf32>
    %c0_40 = arith.constant 0 : index
    %c0_41 = arith.constant 0 : index
    %117 = vector.load %arg10[%c0_40, %c0_41] : memref<1x1xf32, #tpu.memory_space<vmem>>, vector<1x1xf32>
    %118 = vector.broadcast %117 : vector<1x1xf32> to vector<8x1xf32>
    %119 = arith.addf %116, %118 : vector<8x1xf32>
    %120 = arith.negf %119 : vector<8x1xf32>
    %121 = math.exp %120 : vector<8x1xf32>
    %cst_42 = arith.constant 1.000000e+00 : f32
    %122 = vector.broadcast %cst_42 : f32 to vector<8x1xf32>
    %123 = arith.addf %122, %121 : vector<8x1xf32>
    %124 = arith.divf %122, %123 : vector<8x1xf32>
    %c0_43 = arith.constant 0 : index
    %c0_44 = arith.constant 0 : index
    %125 = vector.load %arg11[%c0_43, %c0_44] : memref<8x1xf32, #tpu.memory_space<vmem>>, vector<8x1xf32>
    tpu.vector_store %arg11[%c0_43, %c0_44], %124 {strides = array<i32>} : memref<8x1xf32, #tpu.memory_space<vmem>>, vector<8x1xf32>,
    return
  }
  func.func @transform_0(%arg0: i32, %arg1: memref<1xi32, #tpu.memory_space<smem>>) -> (i32, i32) {
    %c0_i32 = arith.constant 0 : i32
    %c0_i32_0 = arith.constant 0 : i32
    return %arg0, %c0_i32 : i32, i32
  }
  func.func @transform_1(%arg0: i32, %arg1: memref<1xi32, #tpu.memory_space<smem>>) -> (i32, i32) {
    %c0_i32 = arith.constant 0 : i32
    %c0_i32_0 = arith.constant 0 : i32
    %c0_i32_1 = arith.constant 0 : i32
    return %c0_i32, %c0_i32_0 : i32, i32
  }
  func.func @transform_2(%arg0: i32, %arg1: memref<1xi32, #tpu.memory_space<smem>>) -> (i32, i32) {
    %c0_i32 = arith.constant 0 : i32
    %c0_i32_0 = arith.constant 0 : i32
    %c0_i32_1 = arith.constant 0 : i32
    return %c0_i32, %c0_i32_0 : i32, i32
  }
  func.func @transform_3(%arg0: i32, %arg1: memref<1xi32, #tpu.memory_space<smem>>) -> (i32, i32) {
    %c0_i32 = arith.constant 0 : i32
    %c0_i32_0 = arith.constant 0 : i32
    %c0_i32_1 = arith.constant 0 : i32
    return %c0_i32, %c0_i32_0 : i32, i32
  }
  func.func @transform_4(%arg0: i32, %arg1: memref<1xi32, #tpu.memory_space<smem>>) -> (i32, i32) {
    %c0_i32 = arith.constant 0 : i32
    %c0_i32_0 = arith.constant 0 : i32
    %c0_i32_1 = arith.constant 0 : i32
    return %c0_i32, %c0_i32_0 : i32, i32
  }
  func.func @transform_5(%arg0: i32, %arg1: memref<1xi32, #tpu.memory_space<smem>>) -> (i32, i32) {
    %c0_i32 = arith.constant 0 : i32
    %c0_i32_0 = arith.constant 0 : i32
    %c0_i32_1 = arith.constant 0 : i32
    return %c0_i32, %c0_i32_0 : i32, i32
  }
  func.func @transform_6(%arg0: i32, %arg1: memref<1xi32, #tpu.memory_space<smem>>) -> (i32, i32) {
    %c0_i32 = arith.constant 0 : i32
    %c0_i32_0 = arith.constant 0 : i32
    %c0_i32_1 = arith.constant 0 : i32
    return %c0_i32, %c0_i32_0 : i32, i32
  }
  func.func @transform_7(%arg0: i32, %arg1: memref<1xi32, #tpu.memory_space<smem>>) -> (i32, i32) {
    %c0_i32 = arith.constant 0 : i32
    %c0_i32_0 = arith.constant 0 : i32
    %c0_i32_1 = arith.constant 0 : i32
    return %c0_i32, %c0_i32_0 : i32, i32
  }
  func.func @transform_8(%arg0: i32, %arg1: memref<1xi32, #tpu.memory_space<smem>>) -> (i32, i32) {
    %c0_i32 = arith.constant 0 : i32
    %c0_i32_0 = arith.constant 0 : i32
    %c0_i32_1 = arith.constant 0 : i32
    return %c0_i32, %c0_i32_0 : i32, i32
  }
  func.func @transform_9(%arg0: i32, %arg1: memref<1xi32, #tpu.memory_space<smem>>) -> (i32, i32) {
    %c0_i32 = arith.constant 0 : i32
    %c0_i32_0 = arith.constant 0 : i32
    return %arg0, %c0_i32 : i32, i32
  }
}

module attributes {stable_mosaic.version = 11 : i64} {
  func.func @discriminator_kernel(%arg0: i32, %arg1: memref<1xi32, #tpu.memory_space<smem>>, %arg2: memref<8x64xf32, #tpu.memory_space<vmem>>, %arg3: memref<64x1024xbf16, #tpu.memory_space<vmem>>, %arg4: memref<1x1024xf32, #tpu.memory_space<vmem>>, %arg5: memref<1024x512xbf16, #tpu.memory_space<vmem>>, %arg6: memref<1x512xf32, #tpu.memory_space<vmem>>, %arg7: memref<512x256xbf16, #tpu.memory_space<vmem>>, %arg8: memref<1x256xf32, #tpu.memory_space<vmem>>, %arg9: memref<1x256xf32, #tpu.memory_space<vmem>>, %arg10: memref<1x1xf32, #tpu.memory_space<vmem>>, %arg11: memref<8x1xf32, #tpu.memory_space<vmem>>) attributes {dimension_semantics = [#tpu.dimension_semantics<parallel>], iteration_bounds = array<i64: 1>, scalar_prefetch = 1 : i64, scratch_operands = 0 : i64, tpu.core_type = #tpu.core_type<tc>, window_params = [{transform_indices = @transform_0, window_bounds = array<i64: 8, 64>}, {pipeline_mode = #tpu.pipeline_mode<synchronous>, transform_indices = @transform_1, window_bounds = array<i64: 64, 1024>}, {pipeline_mode = #tpu.pipeline_mode<synchronous>, transform_indices = @transform_2, window_bounds = array<i64: 1, 1024>}, {pipeline_mode = #tpu.pipeline_mode<synchronous>, transform_indices = @transform_3, window_bounds = array<i64: 1024, 512>}, {pipeline_mode = #tpu.pipeline_mode<synchronous>, transform_indices = @transform_4, window_bounds = array<i64: 1, 512>}, {pipeline_mode = #tpu.pipeline_mode<synchronous>, transform_indices = @transform_5, window_bounds = array<i64: 512, 256>}, {pipeline_mode = #tpu.pipeline_mode<synchronous>, transform_indices = @transform_6, window_bounds = array<i64: 1, 256>}, {pipeline_mode = #tpu.pipeline_mode<synchronous>, transform_indices = @transform_7, window_bounds = array<i64: 1, 256>}, {pipeline_mode = #tpu.pipeline_mode<synchronous>, transform_indices = @transform_8, window_bounds = array<i64: 1, 1>}, {transform_indices = @transform_9, window_bounds = array<i64: 8, 1>}]} {
    %c0 = arith.constant 0 : index
    %0 = memref.load %arg1[%c0] : memref<1xi32, #tpu.memory_space<smem>>
    %c16777619_i32 = arith.constant 16777619 : i32
    %1 = arith.muli %arg0, %c16777619_i32 : i32
    %2 = arith.addi %0, %1 : i32
    %c0_0 = arith.constant 0 : index
    %c0_1 = arith.constant 0 : index
    %3 = vector.load %arg2[%c0_0, %c0_1] : memref<8x64xf32, #tpu.memory_space<vmem>>, vector<8x64xf32>
    %4 = arith.truncf %3 : vector<8x64xf32> to vector<8x64xbf16>
    %c0_2 = arith.constant 0 : index
    %c0_3 = arith.constant 0 : index
    %5 = vector.load %arg3[%c0_2, %c0_3] : memref<64x1024xbf16, #tpu.memory_space<vmem>>, vector<64x1024xbf16>
    %cst = arith.constant dense<0.000000e+00> : vector<8x1024xf32>
    %6 = tpu.matmul %4, %5, %cst {dimension_numbers = #tpu.dot_dimension_numbers<[1], [0], [0], [1], [0, 0, 1, 1], [], []>} : vector<8x64xbf16>, vector<64x1024xbf16>, vector<8x1024xf32> -> vector<8x1024xf32>
    %c0_4 = arith.constant 0 : index
    %c0_5 = arith.constant 0 : index
    %7 = vector.load %arg4[%c0_4, %c0_5] : memref<1x1024xf32, #tpu.memory_space<vmem>>, vector<1x1024xf32>
    %8 = vector.broadcast %7 : vector<1x1024xf32> to vector<8x1024xf32>
    %9 = arith.addf %6, %8 : vector<8x1024xf32>
    %cst_6 = arith.constant 2.000000e-01 : f32
    %10 = vector.broadcast %cst_6 : f32 to vector<8x1024xf32>
    %11 = arith.mulf %10, %9 : vector<8x1024xf32>
    %12 = arith.maximumf %9, %11 : vector<8x1024xf32>
    %c608135816_i32 = arith.constant 608135816 : i32
    %13 = arith.xori %2, %c608135816_i32 : i32
    %14 = tpu.iota {dimensions = array<i32: 0>} : vector<8x1024xi32>
    %15 = tpu.iota {dimensions = array<i32: 1>} : vector<8x1024xi32>
    %c1024_i32 = arith.constant 1024 : i32
    %16 = vector.broadcast %c1024_i32 : i32 to vector<8x1024xi32>
    %17 = arith.muli %14, %16 : vector<8x1024xi32>
    %18 = arith.addi %17, %15 : vector<8x1024xi32>
    %19 = vector.broadcast %13 : i32 to vector<8x1024xi32>
    %20 = arith.addi %18, %19 : vector<8x1024xi32>
    %c-1640531527_i32 = arith.constant -1640531527 : i32
    %21 = vector.broadcast %c-1640531527_i32 : i32 to vector<8x1024xi32>
    %22 = arith.muli %20, %21 : vector<8x1024xi32>
    %c16_i32 = arith.constant 16 : i32
    %23 = vector.broadcast %c16_i32 : i32 to vector<8x1024xi32>
    %24 = arith.shrui %22, %23 : vector<8x1024xi32>
    %25 = arith.xori %22, %24 : vector<8x1024xi32>
    %c2146121005_i32 = arith.constant 2146121005 : i32
    %26 = vector.broadcast %c2146121005_i32 : i32 to vector<8x1024xi32>
    %27 = arith.muli %25, %26 : vector<8x1024xi32>
    %c15_i32 = arith.constant 15 : i32
    %28 = vector.broadcast %c15_i32 : i32 to vector<8x1024xi32>
    %29 = arith.shrui %27, %28 : vector<8x1024xi32>
    %30 = arith.xori %27, %29 : vector<8x1024xi32>
    %c-2073254261_i32 = arith.constant -2073254261 : i32
    %31 = vector.broadcast %c-2073254261_i32 : i32 to vector<8x1024xi32>
    %32 = arith.muli %30, %31 : vector<8x1024xi32>
    %c16_i32_7 = arith.constant 16 : i32
    %33 = vector.broadcast %c16_i32_7 : i32 to vector<8x1024xi32>
    %34 = arith.shrui %32, %33 : vector<8x1024xi32>
    %35 = arith.xori %32, %34 : vector<8x1024xi32>
    %c-1288490189_i32 = arith.constant -1288490189 : i32
    %36 = vector.broadcast %c-1288490189_i32 : i32 to vector<8x1024xi32>
    %37 = arith.cmpi ult, %35, %36 : vector<8x1024xi32>
    %cst_8 = arith.constant 0.000000e+00 : f32
    %38 = vector.broadcast %cst_8 : f32 to vector<8x1024xf32>
    %39 = arith.select %37, %12, %38 : vector<8x1024xi1>, vector<8x1024xf32>
    %40 = arith.truncf %39 : vector<8x1024xf32> to vector<8x1024xbf16>
    %c0_9 = arith.constant 0 : index
    %c0_10 = arith.constant 0 : index
    %41 = vector.load %arg5[%c0_9, %c0_10] : memref<1024x512xbf16, #tpu.memory_space<vmem>>, vector<1024x512xbf16>
    %cst_11 = arith.constant dense<0.000000e+00> : vector<8x512xf32>
    %42 = tpu.matmul %40, %41, %cst_11 {dimension_numbers = #tpu.dot_dimension_numbers<[1], [0], [0], [1], [0, 0, 1, 1], [], []>} : vector<8x1024xbf16>, vector<1024x512xbf16>, vector<8x512xf32> -> vector<8x512xf32>
    %c0_12 = arith.constant 0 : index
    %c0_13 = arith.constant 0 : index
    %43 = vector.load %arg6[%c0_12, %c0_13] : memref<1x512xf32, #tpu.memory_space<vmem>>, vector<1x512xf32>
    %44 = vector.broadcast %43 : vector<1x512xf32> to vector<8x512xf32>
    %45 = arith.addf %42, %44 : vector<8x512xf32>
    %cst_14 = arith.constant 2.000000e-01 : f32
    %46 = vector.broadcast %cst_14 : f32 to vector<8x512xf32>
    %47 = arith.mulf %46, %45 : vector<8x512xf32>
    %48 = arith.maximumf %45, %47 : vector<8x512xf32>
    %c320440878_i32 = arith.constant 320440878 : i32
    %49 = arith.xori %2, %c320440878_i32 : i32
    %50 = tpu.iota {dimensions = array<i32: 0>} : vector<8x512xi32>
    %51 = tpu.iota {dimensions = array<i32: 1>} : vector<8x512xi32>
    %c512_i32 = arith.constant 512 : i32
    %52 = vector.broadcast %c512_i32 : i32 to vector<8x512xi32>
    %53 = arith.muli %50, %52 : vector<8x512xi32>
    %54 = arith.addi %53, %51 : vector<8x512xi32>
    %55 = vector.broadcast %49 : i32 to vector<8x512xi32>
    %56 = arith.addi %54, %55 : vector<8x512xi32>
    %c-1640531527_i32_15 = arith.constant -1640531527 : i32
    %57 = vector.broadcast %c-1640531527_i32_15 : i32 to vector<8x512xi32>
    %58 = arith.muli %56, %57 : vector<8x512xi32>
    %c16_i32_16 = arith.constant 16 : i32
    %59 = vector.broadcast %c16_i32_16 : i32 to vector<8x512xi32>
    %60 = arith.shrui %58, %59 : vector<8x512xi32>
    %61 = arith.xori %58, %60 : vector<8x512xi32>
    %c2146121005_i32_17 = arith.constant 2146121005 : i32
    %62 = vector.broadcast %c2146121005_i32_17 : i32 to vector<8x512xi32>
    %63 = arith.muli %61, %62 : vector<8x512xi32>
    %c15_i32_18 = arith.constant 15 : i32
    %64 = vector.broadcast %c15_i32_18 : i32 to vector<8x512xi32>
    %65 = arith.shrui %63, %64 : vector<8x512xi32>
    %66 = arith.xori %63, %65 : vector<8x512xi32>
    %c-2073254261_i32_19 = arith.constant -2073254261 : i32
    %67 = vector.broadcast %c-2073254261_i32_19 : i32 to vector<8x512xi32>
    %68 = arith.muli %66, %67 : vector<8x512xi32>
    %c16_i32_20 = arith.constant 16 : i32
    %69 = vector.broadcast %c16_i32_20 : i32 to vector<8x512xi32>
    %70 = arith.shrui %68, %69 : vector<8x512xi32>
    %71 = arith.xori %68, %70 : vector<8x512xi32>
    %c-1288490189_i32_21 = arith.constant -1288490189 : i32
    %72 = vector.broadcast %c-1288490189_i32_21 : i32 to vector<8x512xi32>
    %73 = arith.cmpi ult, %71, %72 : vector<8x512xi32>
    %cst_22 = arith.constant 0.000000e+00 : f32
    %74 = vector.broadcast %cst_22 : f32 to vector<8x512xf32>
    %75 = arith.select %73, %48, %74 : vector<8x512xi1>, vector<8x512xf32>
    %76 = arith.truncf %75 : vector<8x512xf32> to vector<8x512xbf16>
    %c0_23 = arith.constant 0 : index
    %c0_24 = arith.constant 0 : index
    %77 = vector.load %arg7[%c0_23, %c0_24] : memref<512x256xbf16, #tpu.memory_space<vmem>>, vector<512x256xbf16>
    %cst_25 = arith.constant dense<0.000000e+00> : vector<8x256xf32>
    %78 = tpu.matmul %76, %77, %cst_25 {dimension_numbers = #tpu.dot_dimension_numbers<[1], [0], [0], [1], [0, 0, 1, 1], [], []>} : vector<8x512xbf16>, vector<512x256xbf16>, vector<8x256xf32> -> vector<8x256xf32>
    %c0_26 = arith.constant 0 : index
    %c0_27 = arith.constant 0 : index
    %79 = vector.load %arg8[%c0_26, %c0_27] : memref<1x256xf32, #tpu.memory_space<vmem>>, vector<1x256xf32>
    %80 = vector.broadcast %79 : vector<1x256xf32> to vector<8x256xf32>
    %81 = arith.addf %78, %80 : vector<8x256xf32>
    %cst_28 = arith.constant 2.000000e-01 : f32
    %82 = vector.broadcast %cst_28 : f32 to vector<8x256xf32>
    %83 = arith.mulf %82, %81 : vector<8x256xf32>
    %84 = arith.maximumf %81, %83 : vector<8x256xf32>
    %c923219018_i32 = arith.constant 923219018 : i32
    %85 = arith.xori %2, %c923219018_i32 : i32
    %86 = tpu.iota {dimensions = array<i32: 0>} : vector<8x256xi32>
    %87 = tpu.iota {dimensions = array<i32: 1>} : vector<8x256xi32>
    %c256_i32 = arith.constant 256 : i32
    %88 = vector.broadcast %c256_i32 : i32 to vector<8x256xi32>
    %89 = arith.muli %86, %88 : vector<8x256xi32>
    %90 = arith.addi %89, %87 : vector<8x256xi32>
    %91 = vector.broadcast %85 : i32 to vector<8x256xi32>
    %92 = arith.addi %90, %91 : vector<8x256xi32>
    %c-1640531527_i32_29 = arith.constant -1640531527 : i32
    %93 = vector.broadcast %c-1640531527_i32_29 : i32 to vector<8x256xi32>
    %94 = arith.muli %92, %93 : vector<8x256xi32>
    %c16_i32_30 = arith.constant 16 : i32
    %95 = vector.broadcast %c16_i32_30 : i32 to vector<8x256xi32>
    %96 = arith.shrui %94, %95 : vector<8x256xi32>
    %97 = arith.xori %94, %96 : vector<8x256xi32>
    %c2146121005_i32_31 = arith.constant 2146121005 : i32
    %98 = vector.broadcast %c2146121005_i32_31 : i32 to vector<8x256xi32>
    %99 = arith.muli %97, %98 : vector<8x256xi32>
    %c15_i32_32 = arith.constant 15 : i32
    %100 = vector.broadcast %c15_i32_32 : i32 to vector<8x256xi32>
    %101 = arith.shrui %99, %100 : vector<8x256xi32>
    %102 = arith.xori %99, %101 : vector<8x256xi32>
    %c-2073254261_i32_33 = arith.constant -2073254261 : i32
    %103 = vector.broadcast %c-2073254261_i32_33 : i32 to vector<8x256xi32>
    %104 = arith.muli %102, %103 : vector<8x256xi32>
    %c16_i32_34 = arith.constant 16 : i32
    %105 = vector.broadcast %c16_i32_34 : i32 to vector<8x256xi32>
    %106 = arith.shrui %104, %105 : vector<8x256xi32>
    %107 = arith.xori %104, %106 : vector<8x256xi32>
    %c-1288490189_i32_35 = arith.constant -1288490189 : i32
    %108 = vector.broadcast %c-1288490189_i32_35 : i32 to vector<8x256xi32>
    %109 = arith.cmpi ult, %107, %108 : vector<8x256xi32>
    %cst_36 = arith.constant 0.000000e+00 : f32
    %110 = vector.broadcast %cst_36 : f32 to vector<8x256xf32>
    %111 = arith.select %109, %84, %110 : vector<8x256xi1>, vector<8x256xf32>
    %c0_37 = arith.constant 0 : index
    %c0_38 = arith.constant 0 : index
    %112 = vector.load %arg9[%c0_37, %c0_38] : memref<1x256xf32, #tpu.memory_space<vmem>>, vector<1x256xf32>
    %113 = vector.broadcast %112 : vector<1x256xf32> to vector<8x256xf32>
    %114 = arith.mulf %111, %113 : vector<8x256xf32>
    %cst_39 = arith.constant dense<0.000000e+00> : vector<8xf32>
    %115 = vector.multi_reduction <add>, %114, %cst_39 [1] : vector<8x256xf32> to vector<8xf32>
    %116 = vector.shape_cast %115 : vector<8xf32> to vector<8x1xf32>
    %c0_40 = arith.constant 0 : index
    %c0_41 = arith.constant 0 : index
    %117 = vector.load %arg10[%c0_40, %c0_41] : memref<1x1xf32, #tpu.memory_space<vmem>>, vector<1x1xf32>
    %118 = vector.broadcast %117 : vector<1x1xf32> to vector<8x1xf32>
    %119 = arith.addf %116, %118 : vector<8x1xf32>
    %120 = arith.negf %119 : vector<8x1xf32>
    %121 = math.exp %120 : vector<8x1xf32>
    %cst_42 = arith.constant 1.000000e+00 : f32
    %122 = vector.broadcast %cst_42 : f32 to vector<8x1xf32>
    %123 = arith.addf %122, %121 : vector<8x1xf32>
    %124 = arith.divf %122, %123 : vector<8x1xf32>
    %c0_43 = arith.constant 0 : index
    %c0_44 = arith.constant 0 : index
    %125 = vector.load %arg11[%c0_43, %c0_44] : memref<8x1xf32, #tpu.memory_space<vmem>>, vector<8x1xf32>
    tpu.vector_store %arg11[%c0_43, %c0_44], %124 {strides = array<i32>} : memref<8x1xf32, #tpu.memory_space<vmem>>, vector<8x1xf32>,
    return
  }
  func.func @transform_0(%arg0: i32, %arg1: memref<1xi32, #tpu.memory_space<smem>>) -> (i32, i32) {
    %c0_i32 = arith.constant 0 : i32
    %c0_i32_0 = arith.constant 0 : i32
    return %arg0, %c0_i32 : i32, i32
  }
  func.func @transform_1(%arg0: i32, %arg1: memref<1xi32, #tpu.memory_space<smem>>) -> (i32, i32) {
    %c0_i32 = arith.constant 0 : i32
    %c0_i32_0 = arith.constant 0 : i32
    %c0_i32_1 = arith.constant 0 : i32
    return %c0_i32, %c0_i32_0 : i32, i32
  }
  func.func @transform_2(%arg0: i32, %arg1: memref<1xi32, #tpu.memory_space<smem>>) -> (i32, i32) {
    %c0_i32 = arith.constant 0 : i32
    %c0_i32_0 = arith.constant 0 : i32
    %c0_i32_1 = arith.constant 0 : i32
    return %c0_i32, %c0_i32_0 : i32, i32
  }
  func.func @transform_3(%arg0: i32, %arg1: memref<1xi32, #tpu.memory_space<smem>>) -> (i32, i32) {
    %c0_i32 = arith.constant 0 : i32
    %c0_i32_0 = arith.constant 0 : i32
    %c0_i32_1 = arith.constant 0 : i32
    return %c0_i32, %c0_i32_0 : i32, i32
  }
  func.func @transform_4(%arg0: i32, %arg1: memref<1xi32, #tpu.memory_space<smem>>) -> (i32, i32) {
    %c0_i32 = arith.constant 0 : i32
    %c0_i32_0 = arith.constant 0 : i32
    %c0_i32_1 = arith.constant 0 : i32
    return %c0_i32, %c0_i32_0 : i32, i32
  }
  func.func @transform_5(%arg0: i32, %arg1: memref<1xi32, #tpu.memory_space<smem>>) -> (i32, i32) {
    %c0_i32 = arith.constant 0 : i32
    %c0_i32_0 = arith.constant 0 : i32
    %c0_i32_1 = arith.constant 0 : i32
    return %c0_i32, %c0_i32_0 : i32, i32
  }
  func.func @transform_6(%arg0: i32, %arg1: memref<1xi32, #tpu.memory_space<smem>>) -> (i32, i32) {
    %c0_i32 = arith.constant 0 : i32
    %c0_i32_0 = arith.constant 0 : i32
    %c0_i32_1 = arith.constant 0 : i32
    return %c0_i32, %c0_i32_0 : i32, i32
  }
  func.func @transform_7(%arg0: i32, %arg1: memref<1xi32, #tpu.memory_space<smem>>) -> (i32, i32) {
    %c0_i32 = arith.constant 0 : i32
    %c0_i32_0 = arith.constant 0 : i32
    %c0_i32_1 = arith.constant 0 : i32
    return %c0_i32, %c0_i32_0 : i32, i32
  }
  func.func @transform_8(%arg0: i32, %arg1: memref<1xi32, #tpu.memory_space<smem>>) -> (i32, i32) {
    %c0_i32 = arith.constant 0 : i32
    %c0_i32_0 = arith.constant 0 : i32
    %c0_i32_1 = arith.constant 0 : i32
    return %c0_i32, %c0_i32_0 : i32, i32
  }
  func.func @transform_9(%arg0: i32, %arg1: memref<1xi32, #tpu.memory_space<smem>>) -> (i32, i32) {
    %c0_i32 = arith.constant 0 : i32
    %c0_i32_0 = arith.constant 0 : i32
    return %arg0, %c0_i32 : i32, i32
  }
}

</mosaic_0001>

<llo_original>
// kernel: tpu_custom_call.1
$region0: #{tpu_custom_call.1}
  #allocation0 [shape = 'u32[]', space=smem, size = 0x4, offset = 0x4, fixed_abs, tag = 'smem constant byte address 0x4 - core index']
  #allocation1 [shape = 'u32[72,128]{1,0:T(1,128)}', space=vmem, size = 0x9000, scoped, tag = 'internal scratch']
  #allocation2 [shape = 's32[1]{0}', space=sflag, size = 0x4, scoped, tag = 'scoped memory for tpu_custom_call.1']
  #allocation3 [shape = 's32[1]{0:T(128)S(6)}', space=smem, size = 0x200, scoped, tag = 'prefetched SMEM operand 0']
  #allocation4 [shape = 'f32[1,1]{1,0:T(1,128)S(1)}', space=vmem, size = 0x200, scoped, tag = 'scoped memory for tpu_custom_call.1']
  %s0 = inlined_call_operand.<no memory space> [shape: s32[1], index: 0, kind: input, shape index: {}]
  %s1 = inlined_call_operand.hbm [shape: f32[8,64], index: 1, kind: input, shape index: {}]
  %s2 = inlined_call_operand.hbm [shape: bf16[64,1024], index: 2, kind: input, shape index: {}]
  %s3 = inlined_call_operand.hbm [shape: f32[1,1024], index: 3, kind: input, shape index: {}]
  %s4 = inlined_call_operand.hbm [shape: bf16[1024,512], index: 4, kind: input, shape index: {}]
  %s5 = inlined_call_operand.vmem [shape: f32[1,512], index: 5, kind: input, shape index: {}]
  %s6 = inlined_call_operand.hbm [shape: bf16[512,256], index: 6, kind: input, shape index: {}]
  %s7 = inlined_call_operand.vmem [shape: f32[1,256], index: 7, kind: input, shape index: {}]
  %s8 = inlined_call_operand.vmem [shape: f32[1,256], index: 8, kind: input, shape index: {}]
  %s9 = inlined_call_operand.<no memory space> [shape: f32[1,1], index: 9, kind: input, shape index: {}]
  %s10 = inlined_call_operand.vmem [shape: f32[8,1], index: 10, kind: output, shape index: {}]
  %s11 = sld [smem:[#allocation0]]
  $region66: #{tpu_custom_call.1} parent=0
    _
  %s13 = ssub.s32 1, %s11
  %s14 = scalar_select 0, %s13, %s11
  %15 = sst [smem:[#allocation3]] %s0
  %v16 = vstv %s9
  %17 = vst [vmem:[#allocation4] sm:$0x1] %v16
  $region1: #{tpu_custom_call.1} parent=0
    #allocation5 [shape = 'u8[4096]{0}', space=vmem, size = 0x1000, scoped, tag = 'input window, operand 1, single buffered']
    #allocation6 [shape = 's32[1]{0}', space=sflag, size = 0x4, scoped, tag = 'scoped memory for tpu_custom_call.1']
    #allocation7 [shape = 'u8[131072]{0}', space=vmem, size = 0x20000, scoped, tag = 'input window, operand 2, single buffered']
    #allocation8 [shape = 's32[1]{0}', space=sflag, size = 0x4, scoped, tag = 'scoped memory for tpu_custom_call.1']
    #allocation9 [shape = 'u8[4096]{0}', space=vmem, size = 0x1000, scoped, tag = 'input window, operand 3, single buffered']
    #allocation10 [shape = 'u8[1048576]{0}', space=vmem, size = 0x100000, scoped, tag = 'input window, operand 4, single buffered']
    #allocation11 [shape = 's32[1]{0}', space=sflag, size = 0x4, scoped, tag = 'scoped memory for tpu_custom_call.1']
    #allocation12 [shape = 'u8[262144]{0}', space=vmem, size = 0x40000, scoped, tag = 'input window, operand 6, single buffered']
    %18 = vsyncpa [#allocation6], 0
    %19 = vsyncpa [#allocation8], 0
    %20 = vsyncpa [#allocation11], 0
    // Predicated region
    $region2: #{tpu_custom_call.1} parent=1 // pred_check
      _
    $region3: #{tpu_custom_call.1} parent=1 // pred_check_branch
      %22 = sbr.rel (0) target = $region5
    $region4: #{tpu_custom_call.1} parent=1 // pred_region
      %24 = vsyncadd [#allocation6], 0
      %s26 = sshll.u32 %s1, 4
      %s27 = int_to_ptr.hbm [resolvable:$true] %s26
      %s28 = sshll.u32 [#allocation5], 4
      %s29 = int_to_ptr.vmem [resolvable:$true] %s28
      %31 = dma.hbm_to_vmem [thread:$0]  %s27, 128, %s29, [#allocation6]
    $region5: #{tpu_custom_call.1} parent=1 // pred_fallthru
      _
    // Predicated region
    $region6: #{tpu_custom_call.1} parent=1 // pred_check
      _
    $region7: #{tpu_custom_call.1} parent=1 // pred_check_branch
      %33 = sbr.rel (0) target = $region9
    $region8: #{tpu_custom_call.1} parent=1 // pred_region
      %35 = vsyncadd [#allocation8], 0
      %s36 = sshll.u32 %s2, 4
      %s37 = int_to_ptr.hbm [resolvable:$true] %s36
      %s38 = sshll.u32 [#allocation7], 4
      %s39 = int_to_ptr.vmem [resolvable:$true] %s38
      %44 = dma.hbm_to_vmem [thread:$0]  %s37, 4096, %s39, [#allocation8], 512, 512, 32
    $region9: #{tpu_custom_call.1} parent=1 // pred_fallthru
      _
    // Predicated region
    $region10: #{tpu_custom_call.1} parent=1 // pred_check
      _
    $region11: #{tpu_custom_call.1} parent=1 // pred_check_branch
      %46 = sbr.rel (0) target = $region13
    $region12: #{tpu_custom_call.1} parent=1 // pred_region
      %48 = vsyncadd [#allocation8], 0
      %s50 = sshll.u32 %s3, 4
      %s51 = int_to_ptr.hbm [resolvable:$true] %s50
      %s52 = sshll.u32 [#allocation9], 4
      %s53 = int_to_ptr.vmem [resolvable:$true] %s52
      %55 = dma.hbm_to_vmem [thread:$0]  %s51, 128, %s53, [#allocation8]
    $region13: #{tpu_custom_call.1} parent=1 // pred_fallthru
      _
    // Predicated region
    $region14: #{tpu_custom_call.1} parent=1 // pred_check
      _
    $region15: #{tpu_custom_call.1} parent=1 // pred_check_branch
      %57 = sbr.rel (0) target = $region17
    $region16: #{tpu_custom_call.1} parent=1 // pred_region
      %59 = vsyncadd [#allocation11], 0
      %s60 = sshll.u32 %s4, 4
      %s61 = int_to_ptr.hbm [resolvable:$true] %s60
      %s62 = sshll.u32 [#allocation10], 4
      %s63 = int_to_ptr.vmem [resolvable:$true] %s62
      %68 = dma.hbm_to_vmem [thread:$0]  %s61, 32768, %s63, [#allocation11], 256, 256, 16
    $region17: #{tpu_custom_call.1} parent=1 // pred_fallthru
      _
    // Predicated region
    $region18: #{tpu_custom_call.1} parent=1 // pred_check
      _
    $region19: #{tpu_custom_call.1} parent=1 // pred_check_branch
      %70 = sbr.rel (0) target = $region21
    $region20: #{tpu_custom_call.1} parent=1 // pred_region
      _
    $region21: #{tpu_custom_call.1} parent=1 // pred_fallthru
      _
    // Predicated region
    $region22: #{tpu_custom_call.1} parent=1 // pred_check
      _
    $region23: #{tpu_custom_call.1} parent=1 // pred_check_branch
      %72 = sbr.rel (0) target = $region25
    $region24: #{tpu_custom_call.1} parent=1 // pred_region
      %74 = vsyncadd [#allocation11], 0
      %s75 = sshll.u32 %s6, 4
      %s76 = int_to_ptr.hbm [resolvable:$true] %s75
      %s77 = sshll.u32 [#allocation12], 4
      %s78 = int_to_ptr.vmem [resolvable:$true] %s77
      %83 = dma.hbm_to_vmem [thread:$0]  %s76, 8192, %s78, [#allocation11], 128, 128, 8
    $region25: #{tpu_custom_call.1} parent=1 // pred_fallthru
      _
    // Predicated region
    $region26: #{tpu_custom_call.1} parent=1 // pred_check
      _
    $region27: #{tpu_custom_call.1} parent=1 // pred_check_branch
      %85 = sbr.rel (0) target = $region29
    $region28: #{tpu_custom_call.1} parent=1 // pred_region
      _
    $region29: #{tpu_custom_call.1} parent=1 // pred_fallthru
      _
    // Predicated region
    $region30: #{tpu_custom_call.1} parent=1 // pred_check
      _
    $region31: #{tpu_custom_call.1} parent=1 // pred_check_branch
      %87 = sbr.rel (0) target = $region33
    $region32: #{tpu_custom_call.1} parent=1 // pred_region
      _
    $region33: #{tpu_custom_call.1} parent=1 // pred_fallthru
      _
    // Predicated region
    $region34: #{tpu_custom_call.1} parent=1 // pred_check
      _
    $region35: #{tpu_custom_call.1} parent=1 // pred_check_branch
      %89 = sbr.rel (0) target = $region37
    $region36: #{tpu_custom_call.1} parent=1 // pred_region
      _
    $region37: #{tpu_custom_call.1} parent=1 // pred_fallthru
      _
    // Predicated region
    $region38: #{tpu_custom_call.1} parent=1 // pred_check
      _
    $region39: #{tpu_custom_call.1} parent=1 // pred_check_branch
      %91 = sbr.rel (0) target = $region41
    $region40: #{tpu_custom_call.1} parent=1 // pred_region
      %93 = dma.done [#allocation6], 128
    $region41: #{tpu_custom_call.1} parent=1 // pred_fallthru
      _
    // Predicated region
    $region42: #{tpu_custom_call.1} parent=1 // pred_check
      _
    $region43: #{tpu_custom_call.1} parent=1 // pred_check_branch
      %95 = sbr.rel (0) target = $region45
    $region44: #{tpu_custom_call.1} parent=1 // pred_region
      %97 = dma.done [#allocation8], 4096
    $region45: #{tpu_custom_call.1} parent=1 // pred_fallthru
      _
    // Predicated region
    $region46: #{tpu_custom_call.1} parent=1 // pred_check
      _
    $region47: #{tpu_custom_call.1} parent=1 // pred_check_branch
      %99 = sbr.rel (0) target = $region49
    $region48: #{tpu_custom_call.1} parent=1 // pred_region
      %101 = dma.done [#allocation8], 128
    $region49: #{tpu_custom_call.1} parent=1 // pred_fallthru
      _
    // Predicated region
    $region50: #{tpu_custom_call.1} parent=1 // pred_check
      _
    $region51: #{tpu_custom_call.1} parent=1 // pred_check_branch
      %103 = sbr.rel (0) target = $region53
    $region52: #{tpu_custom_call.1} parent=1 // pred_region
      %105 = dma.done [#allocation11], 32768
    $region53: #{tpu_custom_call.1} parent=1 // pred_fallthru
      _
    // Predicated region
    $region54: #{tpu_custom_call.1} parent=1 // pred_check
      _
    $region55: #{tpu_custom_call.1} parent=1 // pred_check_branch
      %107 = sbr.rel (0) target = $region57
    $region56: #{tpu_custom_call.1} parent=1 // pred_region
      %109 = dma.done [#allocation11], 8192
    $region57: #{tpu_custom_call.1} parent=1 // pred_fallthru
      _
    %s111 = sld [smem:[#allocation3]]
    %s112 = smul.u32 0, 16777619
    %s113 = sadd.s32 %s111, %s112
    %v114 = vld [vmem:[#allocation5] sm:$0xff]
    %v115 = vpack.c.bf16 %v114, %v114
    %v116 = vld [vmem:[#allocation7] sm:$0xff]
    %v117 = vld [vmem:[#allocation7 + $0x8] sm:$0xff]
    %v118 = vld [vmem:[#allocation7 + $0x10] sm:$0xff]
    %v119 = vld [vmem:[#allocation7 + $0x18] sm:$0xff]
    %v120 = vld [vmem:[#allocation7 + $0x20] sm:$0xff]
    %v121 = vld [vmem:[#allocation7 + $0x28] sm:$0xff]
    %v122 = vld [vmem:[#allocation7 + $0x30] sm:$0xff]
    %v123 = vld [vmem:[#allocation7 + $0x38] sm:$0xff]
    %v124 = vld [vmem:[#allocation7 + $0x40] sm:$0xff]
    %v125 = vld [vmem:[#allocation7 + $0x48] sm:$0xff]
    %v126 = vld [vmem:[#allocation7 + $0x50] sm:$0xff]
    %v127 = vld [vmem:[#allocation7 + $0x58] sm:$0xff]
    %v128 = vld [vmem:[#allocation7 + $0x60] sm:$0xff]
    %v129 = vld [vmem:[#allocation7 + $0x68] sm:$0xff]
    %v130 = vld [vmem:[#allocation7 + $0x70] sm:$0xff]
    %v131 = vld [vmem:[#allocation7 + $0x78] sm:$0xff]
    %v132 = vld [vmem:[#allocation7 + $0x80] sm:$0xff]
    %v133 = vld [vmem:[#allocation7 + $0x88] sm:$0xff]
    %v134 = vld [vmem:[#allocation7 + $0x90] sm:$0xff]
    %v135 = vld [vmem:[#allocation7 + $0x98] sm:$0xff]
    %v136 = vld [vmem:[#allocation7 + $0xa0] sm:$0xff]
    %v137 = vld [vmem:[#allocation7 + $0xa8] sm:$0xff]
    %v138 = vld [vmem:[#allocation7 + $0xb0] sm:$0xff]
    %v139 = vld [vmem:[#allocation7 + $0xb8] sm:$0xff]
    %v140 = vld [vmem:[#allocation7 + $0xc0] sm:$0xff]
    %v141 = vld [vmem:[#allocation7 + $0xc8] sm:$0xff]
    %v142 = vld [vmem:[#allocation7 + $0xd0] sm:$0xff]
    %v143 = vld [vmem:[#allocation7 + $0xd8] sm:$0xff]
    %v144 = vld [vmem:[#allocation7 + $0xe0] sm:$0xff]
    %v145 = vld [vmem:[#allocation7 + $0xe8] sm:$0xff]
    %v146 = vld [vmem:[#allocation7 + $0xf0] sm:$0xff]
    %v147 = vld [vmem:[#allocation7 + $0xf8] sm:$0xff]
    %v148 = vld [vmem:[#allocation9] sm:$0xff]
    %v150 = vperm.slane %v148, 0
    %v151 = vperm.slane %v148, 1
    %v152 = vperm.slane %v148, 2
    %v153 = vperm.slane %v148, 3
    %v154 = vperm.slane %v148, 4
    %v155 = vperm.slane %v148, 5
    %v156 = vperm.slane %v148, 6
    %v157 = vperm.slane %v148, 7
    %v198 = vunpack.c.l.b16 %v116
    %v199 = vunpack.c.h.b16 %v116
    %v200 = vunpack.c.l.b16 %v117
    %v201 = vunpack.c.h.b16 %v117
    %v202 = vunpack.c.l.b16 %v118
    %v203 = vunpack.c.h.b16 %v118
    %v204 = vunpack.c.l.b16 %v119
    %v205 = vunpack.c.h.b16 %v119
    %v206 = vunpack.c.l.b16 %v120
    %v207 = vunpack.c.h.b16 %v120
    %v208 = vunpack.c.l.b16 %v121
    %v209 = vunpack.c.h.b16 %v121
    %v210 = vunpack.c.l.b16 %v122
    %v211 = vunpack.c.h.b16 %v122
    %v212 = vunpack.c.l.b16 %v123
    %v213 = vunpack.c.h.b16 %v123
    %v214 = vunpack.c.l.b16 %v124
    %v215 = vunpack.c.h.b16 %v124
    %v216 = vunpack.c.l.b16 %v125
    %v217 = vunpack.c.h.b16 %v125
    %v218 = vunpack.c.l.b16 %v126
    %v219 = vunpack.c.h.b16 %v126
    %v220 = vunpack.c.l.b16 %v127
    %v221 = vunpack.c.h.b16 %v127
    %v222 = vunpack.c.l.b16 %v128
    %v223 = vunpack.c.h.b16 %v128
    %v224 = vunpack.c.l.b16 %v129
    %v225 = vunpack.c.h.b16 %v129
    %v226 = vunpack.c.l.b16 %v130
    %v227 = vunpack.c.h.b16 %v130
    %v228 = vunpack.c.l.b16 %v131
    %v229 = vunpack.c.h.b16 %v131
    %v230 = vunpack.c.l.b16 %v132
    %v231 = vunpack.c.h.b16 %v132
    %v232 = vunpack.c.l.b16 %v133
    %v233 = vunpack.c.h.b16 %v133
    %v234 = vunpack.c.l.b16 %v134
    %v235 = vunpack.c.h.b16 %v134
    %v236 = vunpack.c.l.b16 %v135
    %v237 = vunpack.c.h.b16 %v135
    %v238 = vunpack.c.l.b16 %v136
    %v239 = vunpack.c.h.b16 %v136
    %v240 = vunpack.c.l.b16 %v137
    %v241 = vunpack.c.h.b16 %v137
    %v242 = vunpack.c.l.b16 %v138
    %v243 = vunpack.c.h.b16 %v138
    %v244 = vunpack.c.l.b16 %v139
    %v245 = vunpack.c.h.b16 %v139
    %v246 = vunpack.c.l.b16 %v140
    %v247 = vunpack.c.h.b16 %v140
    %v248 = vunpack.c.l.b16 %v141
    %v249 = vunpack.c.h.b16 %v141
    %v250 = vunpack.c.l.b16 %v142
    %v251 = vunpack.c.h.b16 %v142
    %v252 = vunpack.c.l.b16 %v143
    %v253 = vunpack.c.h.b16 %v143
    %v254 = vunpack.c.l.b16 %v144
    %v255 = vunpack.c.h.b16 %v144
    %v256 = vunpack.c.l.b16 %v145
    %v257 = vunpack.c.h.b16 %v145
    %v258 = vunpack.c.l.b16 %v146
    %v259 = vunpack.c.h.b16 %v146
    %v260 = vunpack.c.l.b16 %v147
    %v261 = vunpack.c.h.b16 %v147
    %v262 = vpack.c.b16 %v206, %v198
    %v263 = vpack.c.b16 %v207, %v199
    %v264 = vpack.c.b16 %v208, %v200
    %v265 = vpack.c.b16 %v209, %v201
    %v266 = vpack.c.b16 %v210, %v202
    %v267 = vpack.c.b16 %v211, %v203
    %v268 = vpack.c.b16 %v212, %v204
    %v269 = vpack.c.b16 %v213, %v205
    %v270 = vpack.c.b16 %v222, %v214
    %v271 = vpack.c.b16 %v223, %v215
    %v272 = vpack.c.b16 %v224, %v216
    %v273 = vpack.c.b16 %v225, %v217
    %v274 = vpack.c.b16 %v226, %v218
    %v275 = vpack.c.b16 %v227, %v219
    %v276 = vpack.c.b16 %v228, %v220
    %v277 = vpack.c.b16 %v229, %v221
    %v278 = vpack.c.b16 %v238, %v230
    %v279 = vpack.c.b16 %v239, %v231
    %v280 = vpack.c.b16 %v240, %v232
    %v281 = vpack.c.b16 %v241, %v233
    %v282 = vpack.c.b16 %v242, %v234
    %v283 = vpack.c.b16 %v243, %v235
    %v284 = vpack.c.b16 %v244, %v236
    %v285 = vpack.c.b16 %v245, %v237
    %v286 = vpack.c.b16 %v254, %v246
    %v287 = vpack.c.b16 %v255, %v247
    %v288 = vpack.c.b16 %v256, %v248
    %v289 = vpack.c.b16 %v257, %v249
    %v290 = vpack.c.b16 %v258, %v250
    %v291 = vpack.c.b16 %v259, %v251
    %v292 = vpack.c.b16 %v260, %v252
    %v293 = vpack.c.b16 %v261, %v253
    %vm326 = vcmask 523264
    %v328 = vsel %vm326, %v115, 0
    %330 = vmatpush.bf16.msra.mxu0 0
    %331 = vmatpush.bf16.msra.mxu0 0
    %332 = vmatpush.bf16.msra.mxu0 0
    %333 = vmatpush.bf16.msra.mxu0 0
    %334 = vmatpush.bf16.msra.mxu0 %v286
    %335 = vmatpush.bf16.msra.mxu0 %v278
    %336 = vmatpush.bf16.msra.mxu0 %v270
    %337 = vmatpush.bf16.msra.mxu0 %v262
    %338 = vmatmul.bf16.gmra.mxu0 %v328
    %v339 = vpop.f32.mrf.mxu0
    %v340 = vadd.f32 %v150, %v339
    %v341 = vpop.f32.mrf.mxu0
    %342 = vdwg.mxu0
    %343 = vmatpush.bf16.msra.mxu0 0
    %344 = vmatpush.bf16.msra.mxu0 0
    %345 = vmatpush.bf16.msra.mxu0 0
    %346 = vmatpush.bf16.msra.mxu0 0
    %347 = vmatpush.bf16.msra.mxu0 %v287
    %348 = vmatpush.bf16.msra.mxu0 %v279
    %349 = vmatpush.bf16.msra.mxu0 %v271
    %350 = vmatpush.bf16.msra.mxu0 %v263
    %351 = vmatmul.bf16.gmra.mxu0 %v328
    %v352 = vpop.f32.mrf.mxu0
    %v353 = vadd.f32 %v151, %v352
    %v354 = vpop.f32.mrf.mxu0
    %355 = vdwg.mxu0
    %356 = vmatpush.bf16.msra.mxu0 0
    %357 = vmatpush.bf16.msra.mxu0 0
    %358 = vmatpush.bf16.msra.mxu0 0
    %359 = vmatpush.bf16.msra.mxu0 0
    %360 = vmatpush.bf16.msra.mxu0 %v288
    %361 = vmatpush.bf16.msra.mxu0 %v280
    %362 = vmatpush.bf16.msra.mxu0 %v272
    %363 = vmatpush.bf16.msra.mxu0 %v264
    %364 = vmatmul.bf16.gmra.mxu0 %v328
    %v365 = vpop.f32.mrf.mxu0
    %v366 = vadd.f32 %v152, %v365
    %v367 = vpop.f32.mrf.mxu0
    %368 = vdwg.mxu0
    %369 = vmatpush.bf16.msra.mxu0 0
    %370 = vmatpush.bf16.msra.mxu0 0
    %371 = vmatpush.bf16.msra.mxu0 0
    %372 = vmatpush.bf16.msra.mxu0 0
    %373 = vmatpush.bf16.msra.mxu0 %v289
    %374 = vmatpush.bf16.msra.mxu0 %v281
    %375 = vmatpush.bf16.msra.mxu0 %v273
    %376 = vmatpush.bf16.msra.mxu0 %v265
    %377 = vmatmul.bf16.gmra.mxu0 %v328
    %v378 = vpop.f32.mrf.mxu0
    %v379 = vadd.f32 %v153, %v378
    %v380 = vpop.f32.mrf.mxu0
    %381 = vdwg.mxu0
    %382 = vmatpush.bf16.msra.mxu0 0
    %383 = vmatpush.bf16.msra.mxu0 0
    %384 = vmatpush.bf16.msra.mxu0 0
    %385 = vmatpush.bf16.msra.mxu0 0
    %386 = vmatpush.bf16.msra.mxu0 %v290
    %387 = vmatpush.bf16.msra.mxu0 %v282
    %388 = vmatpush.bf16.msra.mxu0 %v274
    %389 = vmatpush.bf16.msra.mxu0 %v266
    %390 = vmatmul.bf16.gmra.mxu0 %v328
    %v391 = vpop.f32.mrf.mxu0
    %v392 = vadd.f32 %v154, %v391
    %v393 = vpop.f32.mrf.mxu0
    %394 = vdwg.mxu0
    %395 = vmatpush.bf16.msra.mxu0 0
    %396 = vmatpush.bf16.msra.mxu0 0
    %397 = vmatpush.bf16.msra.mxu0 0
    %398 = vmatpush.bf16.msra.mxu0 0
    %399 = vmatpush.bf16.msra.mxu0 %v291
    %400 = vmatpush.bf16.msra.mxu0 %v283
    %401 = vmatpush.bf16.msra.mxu0 %v275
    %402 = vmatpush.bf16.msra.mxu0 %v267
    %403 = vmatmul.bf16.gmra.mxu0 %v328
    %v404 = vpop.f32.mrf.mxu0
    %v405 = vadd.f32 %v155, %v404
    %v406 = vpop.f32.mrf.mxu0
    %407 = vdwg.mxu0
    %408 = vmatpush.bf16.msra.mxu0 0
    %409 = vmatpush.bf16.msra.mxu0 0
    %410 = vmatpush.bf16.msra.mxu0 0
    %411 = vmatpush.bf16.msra.mxu0 0
    %412 = vmatpush.bf16.msra.mxu0 %v292
    %413 = vmatpush.bf16.msra.mxu0 %v284
    %414 = vmatpush.bf16.msra.mxu0 %v276
    %415 = vmatpush.bf16.msra.mxu0 %v268
    %416 = vmatmul.bf16.gmra.mxu0 %v328
    %v417 = vpop.f32.mrf.mxu0
    %v418 = vadd.f32 %v156, %v417
    %v419 = vpop.f32.mrf.mxu0
    %420 = vdwg.mxu0
    %421 = vmatpush.bf16.msra.mxu0 0
    %422 = vmatpush.bf16.msra.mxu0 0
    %423 = vmatpush.bf16.msra.mxu0 0
    %424 = vmatpush.bf16.msra.mxu0 0
    %425 = vmatpush.bf16.msra.mxu0 %v293
    %426 = vmatpush.bf16.msra.mxu0 %v285
    %427 = vmatpush.bf16.msra.mxu0 %v277
    %428 = vmatpush.bf16.msra.mxu0 %v269
    %429 = vmatmul.bf16.gmra.mxu0 %v328
    %v430 = vpop.f32.mrf.mxu0
    %v431 = vadd.f32 %v157, %v430
    %v432 = vpop.f32.mrf.mxu0
    %433 = vdwg.mxu0
    %v434 = vmul.f32 %v340, 0.2
    %v435 = vmul.f32 %v353, 0.2
    %v436 = vmul.f32 %v366, 0.2
    %v437 = vmul.f32 %v379, 0.2
    %v438 = vmul.f32 %v392, 0.2
    %v439 = vmul.f32 %v405, 0.2
    %v440 = vmul.f32 %v418, 0.2
    %v441 = vmul.f32 %v431, 0.2
    %v442 = vmax.f32 %v340, %v434
    %v443 = vmax.f32 %v353, %v435
    %v444 = vmax.f32 %v366, %v436
    %v445 = vmax.f32 %v379, %v437
    %v446 = vmax.f32 %v392, %v438
    %v447 = vmax.f32 %v405, %v439
    %v448 = vmax.f32 %v418, %v440
    %v449 = vmax.f32 %v431, %v441
    %s450 = sxor.u32 %s113, 608135816
    %v451 = vlaneseq
    %v452 = vshrl.u32 %v451, 7
    %v453 = vlaneseq
    %v454 = vand.u32 %v453, 127
    %v455 = vadd.s32 %v454, 128
    %v456 = vadd.s32 %v454, 256
    %v457 = vadd.s32 %v454, 384
    %v458 = vadd.s32 %v454, 512
    %v459 = vadd.s32 %v454, 640
    %v460 = vadd.s32 %v454, 768
    %v461 = vadd.s32 %v454, 896
    %v462 = vmul.u32 %v452, 1024
    %v463 = vadd.s32 %v462, %v454
    %v464 = vadd.s32 %v462, %v455
    %v465 = vadd.s32 %v462, %v456
    %v466 = vadd.s32 %v462, %v457
    %v467 = vadd.s32 %v462, %v458
    %v468 = vadd.s32 %v462, %v459
    %v469 = vadd.s32 %v462, %v460
    %v470 = vadd.s32 %v462, %v461
    %v471 = vstv %s450
    %v472 = vadd.s32 %v463, %v471
    %v473 = vadd.s32 %v464, %v471
    %v474 = vadd.s32 %v465, %v471
    %v475 = vadd.s32 %v466, %v471
    %v476 = vadd.s32 %v467, %v471
    %v477 = vadd.s32 %v468, %v471
    %v478 = vadd.s32 %v469, %v471
    %v479 = vadd.s32 %v470, %v471
    %v480 = vmul.u32 %v472, 2654435769
    %v481 = vmul.u32 %v473, 2654435769
    %v482 = vmul.u32 %v474, 2654435769
    %v483 = vmul.u32 %v475, 2654435769
    %v484 = vmul.u32 %v476, 2654435769
    %v485 = vmul.u32 %v477, 2654435769
    %v486 = vmul.u32 %v478, 2654435769
    %v487 = vmul.u32 %v479, 2654435769
    %v488 = vshrl.u32 %v480, 16
    %v489 = vshrl.u32 %v481, 16
    %v490 = vshrl.u32 %v482, 16
    %v491 = vshrl.u32 %v483, 16
    %v492 = vshrl.u32 %v484, 16
    %v493 = vshrl.u32 %v485, 16
    %v494 = vshrl.u32 %v486, 16
    %v495 = vshrl.u32 %v487, 16
    %v496 = vxor.u32 %v480, %v488
    %v497 = vxor.u32 %v481, %v489
    %v498 = vxor.u32 %v482, %v490
    %v499 = vxor.u32 %v483, %v491
    %v500 = vxor.u32 %v484, %v492
    %v501 = vxor.u32 %v485, %v493
    %v502 = vxor.u32 %v486, %v494
    %v503 = vxor.u32 %v487, %v495
    %v504 = vmul.u32 %v496, 2146121005
    %v505 = vmul.u32 %v497, 2146121005
    %v506 = vmul.u32 %v498, 2146121005
    %v507 = vmul.u32 %v499, 2146121005
    %v508 = vmul.u32 %v500, 2146121005
    %v509 = vmul.u32 %v501, 2146121005
    %v510 = vmul.u32 %v502, 2146121005
    %v511 = vmul.u32 %v503, 2146121005
    %v512 = vshrl.u32 %v504, 15
    %v513 = vshrl.u32 %v505, 15
    %v514 = vshrl.u32 %v506, 15
    %v515 = vshrl.u32 %v507, 15
    %v516 = vshrl.u32 %v508, 15
    %v517 = vshrl.u32 %v509, 15
    %v518 = vshrl.u32 %v510, 15
    %v519 = vshrl.u32 %v511, 15
    %v520 = vxor.u32 %v504, %v512
    %v521 = vxor.u32 %v505, %v513
    %v522 = vxor.u32 %v506, %v514
    %v523 = vxor.u32 %v507, %v515
    %v524 = vxor.u32 %v508, %v516
    %v525 = vxor.u32 %v509, %v517
    %v526 = vxor.u32 %v510, %v518
    %v527 = vxor.u32 %v511, %v519
    %v528 = vmul.u32 %v520, 2221713035
    %v529 = vmul.u32 %v521, 2221713035
    %v530 = vmul.u32 %v522, 2221713035
    %v531 = vmul.u32 %v523, 2221713035
    %v532 = vmul.u32 %v524, 2221713035
    %v533 = vmul.u32 %v525, 2221713035
    %v534 = vmul.u32 %v526, 2221713035
    %v535 = vmul.u32 %v527, 2221713035
    %v536 = vshrl.u32 %v528, 16
    %v537 = vshrl.u32 %v529, 16
    %v538 = vshrl.u32 %v530, 16
    %v539 = vshrl.u32 %v531, 16
    %v540 = vshrl.u32 %v532, 16
    %v541 = vshrl.u32 %v533, 16
    %v542 = vshrl.u32 %v534, 16
    %v543 = vshrl.u32 %v535, 16
    %v544 = vxor.u32 %v528, %v536
    %v545 = vxor.u32 %v529, %v537
    %v546 = vxor.u32 %v530, %v538
    %v547 = vxor.u32 %v531, %v539
    %v548 = vxor.u32 %v532, %v540
    %v549 = vxor.u32 %v533, %v541
    %v550 = vxor.u32 %v534, %v542
    %v551 = vxor.u32 %v535, %v543
    %v552 = vadd.s32 %v544, 2147483648
    %vm554 = vcmp.lt.s32.totalorder %v552, 858993459
    %v555 = vadd.s32 %v545, 2147483648
    %vm557 = vcmp.lt.s32.totalorder %v555, 858993459
    %v558 = vadd.s32 %v546, 2147483648
    %vm560 = vcmp.lt.s32.totalorder %v558, 858993459
    %v561 = vadd.s32 %v547, 2147483648
    %vm563 = vcmp.lt.s32.totalorder %v561, 858993459
    %v564 = vadd.s32 %v548, 2147483648
    %vm566 = vcmp.lt.s32.totalorder %v564, 858993459
    %v567 = vadd.s32 %v549, 2147483648
    %vm569 = vcmp.lt.s32.totalorder %v567, 858993459
    %v570 = vadd.s32 %v550, 2147483648
    %vm572 = vcmp.lt.s32.totalorder %v570, 858993459
    %v573 = vadd.s32 %v551, 2147483648
    %vm575 = vcmp.lt.s32.totalorder %v573, 858993459
    %v576 = vsel %vm554, %v442, 0.0
    %v577 = vsel %vm557, %v443, 0.0
    %v578 = vsel %vm560, %v444, 0.0
    %v579 = vsel %vm563, %v445, 0.0
    %v580 = vsel %vm566, %v446, 0.0
    %v581 = vsel %vm569, %v447, 0.0
    %v582 = vsel %vm572, %v448, 0.0
    %v583 = vsel %vm575, %v449, 0.0
    %v584 = vpack.c.bf16 %v576, %v576
    %v585 = vpack.c.bf16 %v577, %v577
    %v586 = vpack.c.bf16 %v578, %v578
    %v587 = vpack.c.bf16 %v579, %v579
    %v588 = vpack.c.bf16 %v580, %v580
    %v589 = vpack.c.bf16 %v581, %v581
    %v590 = vpack.c.bf16 %v582, %v582
    %v591 = vpack.c.bf16 %v583, %v583
    %v592 = vld [vmem:[#allocation10] sm:$0xff]
    %v593 = vld [vmem:[#allocation10 + $0x8] sm:$0xff]
    %v594 = vld [vmem:[#allocation10 + $0x10] sm:$0xff]
    %v595 = vld [vmem:[#allocation10 + $0x18] sm:$0xff]
    %v596 = vld [vmem:[#allocation10 + $0x20] sm:$0xff]
    %v597 = vld [vmem:[#allocation10 + $0x28] sm:$0xff]
    %v598 = vld [vmem:[#allocation10 + $0x30] sm:$0xff]
    %v599 = vld [vmem:[#allocation10 + $0x38] sm:$0xff]
    %v600 = vld [vmem:[#allocation10 + $0x40] sm:$0xff]
    %v601 = vld [vmem:[#allocation10 + $0x48] sm:$0xff]
    %v602 = vld [vmem:[#allocation10 + $0x50] sm:$0xff]
    %v603 = vld [vmem:[#allocation10 + $0x58] sm:$0xff]
    %v604 = vld [vmem:[#allocation10 + $0x60] sm:$0xff]
    %v605 = vld [vmem:[#allocation10 + $0x68] sm:$0xff]
    %v606 = vld [vmem:[#allocation10 + $0x70] sm:$0xff]
    %v607 = vld [vmem:[#allocation10 + $0x78] sm:$0xff]
    %v608 = vld [vmem:[#allocation10 + $0x80] sm:$0xff]
    %v609 = vld [vmem:[#allocation10 + $0x88] sm:$0xff]
    %v610 = vld [vmem:[#allocation10 + $0x90] sm:$0xff]
    %v611 = vld [vmem:[#allocation10 + $0x98] sm:$0xff]
    %v612 = vld [vmem:[#allocation10 + $0xa0] sm:$0xff]
    %v613 = vld [vmem:[#allocation10 + $0xa8] sm:$0xff]
    %v614 = vld [vmem:[#allocation10 + $0xb0] sm:$0xff]
    %v615 = vld [vmem:[#allocation10 + $0xb8] sm:$0xff]
    %v616 = vld [vmem:[#allocation10 + $0xc0] sm:$0xff]
    %v617 = vld [vmem:[#allocation10 + $0xc8] sm:$0xff]
    %v618 = vld [vmem:[#allocation10 + $0xd0] sm:$0xff]
    %v619 = vld [vmem:[#allocation10 + $0xd8] sm:$0xff]
    %v620 = vld [vmem:[#allocation10 + $0xe0] sm:$0xff]
    %v621 = vld [vmem:[#allocation10 + $0xe8] sm:$0xff]
    %v622 = vld [vmem:[#allocation10 + $0xf0] sm:$0xff]
    %v623 = vld [vmem:[#allocation10 + $0xf8] sm:$0xff]
    %v624 = vld [vmem:[#allocation10 + $0x100] sm:$0xff]
    %v625 = vld [vmem:[#allocation10 + $0x108] sm:$0xff]
    %v626 = vld [vmem:[#allocation10 + $0x110] sm:$0xff]
    %v627 = vld [vmem:[#allocation10 + $0x118] sm:$0xff]
    %v628 = vld [vmem:[#allocation10 + $0x120] sm:$0xff]
    %v629 = vld [vmem:[#allocation10 + $0x128] sm:$0xff]
    %v630 = vld [vmem:[#allocation10 + $0x130] sm:$0xff]
    %v631 = vld [vmem:[#allocation10 + $0x138] sm:$0xff]
    %v632 = vld [vmem:[#allocation10 + $0x140] sm:$0xff]
    %v633 = vld [vmem:[#allocation10 + $0x148] sm:$0xff]
    %v634 = vld [vmem:[#allocation10 + $0x150] sm:$0xff]
    %v635 = vld [vmem:[#allocation10 + $0x158] sm:$0xff]
    %v636 = vld [vmem:[#allocation10 + $0x160] sm:$0xff]
    %v637 = vld [vmem:[#allocation10 + $0x168] sm:$0xff]
    %v638 = vld [vmem:[#allocation10 + $0x170] sm:$0xff]
    %v639 = vld [vmem:[#allocation10 + $0x178] sm:$0xff]
    %v640 = vld [vmem:[#allocation10 + $0x180] sm:$0xff]
    %v641 = vld [vmem:[#allocation10 + $0x188] sm:$0xff]
    %v642 = vld [vmem:[#allocation10 + $0x190] sm:$0xff]
    %v643 = vld [vmem:[#allocation10 + $0x198] sm:$0xff]
    %v644 = vld [vmem:[#allocation10 + $0x1a0] sm:$0xff]
    %v645 = vld [vmem:[#allocation10 + $0x1a8] sm:$0xff]
    %v646 = vld [vmem:[#allocation10 + $0x1b0] sm:$0xff]
    %v647 = vld [vmem:[#allocation10 + $0x1b8] sm:$0xff]
    %v648 = vld [vmem:[#allocation10 + $0x1c0] sm:$0xff]
    %v649 = vld [vmem:[#allocation10 + $0x1c8] sm:$0xff]
    %v650 = vld [vmem:[#allocation10 + $0x1d0] sm:$0xff]
    %v651 = vld [vmem:[#allocation10 + $0x1d8] sm:$0xff]
    %v652 = vld [vmem:[#allocation10 + $0x1e0] sm:$0xff]
    %v653 = vld [vmem:[#allocation10 + $0x1e8] sm:$0xff]
    %v654 = vld [vmem:[#allocation10 + $0x1f0] sm:$0xff]
    %v655 = vld [vmem:[#allocation10 + $0x1f8] sm:$0xff]
    %v656 = vld [vmem:[#allocation10 + $0x200] sm:$0xff]
    %v657 = vld [vmem:[#allocation10 + $0x208] sm:$0xff]
    %v658 = vld [vmem:[#allocation10 + $0x210] sm:$0xff]
    %v659 = vld [vmem:[#allocation10 + $0x218] sm:$0xff]
    %v660 = vld [vmem:[#allocation10 + $0x220] sm:$0xff]
    %v661 = vld [vmem:[#allocation10 + $0x228] sm:$0xff]
    %v662 = vld [vmem:[#allocation10 + $0x230] sm:$0xff]
    %v663 = vld [vmem:[#allocation10 + $0x238] sm:$0xff]
    %v664 = vld [vmem:[#allocation10 + $0x240] sm:$0xff]
    %v665 = vld [vmem:[#allocation10 + $0x248] sm:$0xff]
    %v666 = vld [vmem:[#allocation10 + $0x250] sm:$0xff]
    %v667 = vld [vmem:[#allocation10 + $0x258] sm:$0xff]
    %v668 = vld [vmem:[#allocation10 + $0x260] sm:$0xff]
    %v669 = vld [vmem:[#allocation10 + $0x268] sm:$0xff]
    %v670 = vld [vmem:[#allocation10 + $0x270] sm:$0xff]
    %v671 = vld [vmem:[#allocation10 + $0x278] sm:$0xff]
    %v672 = vld [vmem:[#allocation10 + $0x280] sm:$0xff]
    %v673 = vld [vmem:[#allocation10 + $0x288] sm:$0xff]
    %v674 = vld [vmem:[#allocation10 + $0x290] sm:$0xff]
    %v675 = vld [vmem:[#allocation10 + $0x298] sm:$0xff]
    %v676 = vld [vmem:[#allocation10 + $0x2a0] sm:$0xff]
    %v677 = vld [vmem:[#allocation10 + $0x2a8] sm:$0xff]
    %v678 = vld [vmem:[#allocation10 + $0x2b0] sm:$0xff]
    %v679 = vld [vmem:[#allocation10 + $0x2b8] sm:$0xff]
    %v680 = vld [vmem:[#allocation10 + $0x2c0] sm:$0xff]
    %v681 = vld [vmem:[#allocation10 + $0x2c8] sm:$0xff]
    %v682 = vld [vmem:[#allocation10 + $0x2d0] sm:$0xff]
    %v683 = vld [vmem:[#allocation10 + $0x2d8] sm:$0xff]
    %v684 = vld [vmem:[#allocation10 + $0x2e0] sm:$0xff]
    %v685 = vld [vmem:[#allocation10 + $0x2e8] sm:$0xff]
    %v686 = vld [vmem:[#allocation10 + $0x2f0] sm:$0xff]
    %v687 = vld [vmem:[#allocation10 + $0x2f8] sm:$0xff]
    %v688 = vld [vmem:[#allocation10 + $0x300] sm:$0xff]
    %v689 = vld [vmem:[#allocation10 + $0x308] sm:$0xff]
    %v690 = vld [vmem:[#allocation10 + $0x310] sm:$0xff]
    %v691 = vld [vmem:[#allocation10 + $0x318] sm:$0xff]
    %v692 = vld [vmem:[#allocation10 + $0x320] sm:$0xff]
    %v693 = vld [vmem:[#allocation10 + $0x328] sm:$0xff]
    %v694 = vld [vmem:[#allocation10 + $0x330] sm:$0xff]
    %v695 = vld [vmem:[#allocation10 + $0x338] sm:$0xff]
    %v696 = vld [vmem:[#allocation10 + $0x340] sm:$0xff]
    %v697 = vld [vmem:[#allocation10 + $0x348] sm:$0xff]
    %v698 = vld [vmem:[#allocation10 + $0x350] sm:$0xff]
    %v699 = vld [vmem:[#allocation10 + $0x358] sm:$0xff]
    %v700 = vld [vmem:[#allocation10 + $0x360] sm:$0xff]
    %v701 = vld [vmem:[#allocation10 + $0x368] sm:$0xff]
    %v702 = vld [vmem:[#allocation10 + $0x370] sm:$0xff]
    %v703 = vld [vmem:[#allocation10 + $0x378] sm:$0xff]
    %v704 = vld [vmem:[#allocation10 + $0x380] sm:$0xff]
    %v705 = vld [vmem:[#allocation10 + $0x388] sm:$0xff]
    %v706 = vld [vmem:[#allocation10 + $0x390] sm:$0xff]
    %v707 = vld [vmem:[#allocation10 + $0x398] sm:$0xff]
    %v708 = vld [vmem:[#allocation10 + $0x3a0] sm:$0xff]
    %v709 = vld [vmem:[#allocation10 + $0x3a8] sm:$0xff]
    %v710 = vld [vmem:[#allocation10 + $0x3b0] sm:$0xff]
    %v711 = vld [vmem:[#allocation10 + $0x3b8] sm:$0xff]
    %v712 = vld [vmem:[#allocation10 + $0x3c0] sm:$0xff]
    %v713 = vld [vmem:[#allocation10 + $0x3c8] sm:$0xff]
    %v714 = vld [vmem:[#allocation10 + $0x3d0] sm:$0xff]
    %v715 = vld [vmem:[#allocation10 + $0x3d8] sm:$0xff]
    %v716 = vld [vmem:[#allocation10 + $0x3e0] sm:$0xff]
    %v717 = vld [vmem:[#allocation10 + $0x3e8] sm:$0xff]
    %v718 = vld [vmem:[#allocation10 + $0x3f0] sm:$0xff]
    %v719 = vld [vmem:[#allocation10 + $0x3f8] sm:$0xff]
    %v720 = vld [vmem:[#allocation10 + $0x400] sm:$0xff]
    %v721 = vld [vmem:[#allocation10 + $0x408] sm:$0xff]
    %v722 = vld [vmem:[#allocation10 + $0x410] sm:$0xff]
    %v723 = vld [vmem:[#allocation10 + $0x418] sm:$0xff]
    %v724 = vld [vmem:[#allocation10 + $0x420] sm:$0xff]
    %v725 = vld [vmem:[#allocation10 + $0x428] sm:$0xff]
    %v726 = vld [vmem:[#allocation10 + $0x430] sm:$0xff]
    %v727 = vld [vmem:[#allocation10 + $0x438] sm:$0xff]
    %v728 = vld [vmem:[#allocation10 + $0x440] sm:$0xff]
    %v729 = vld [vmem:[#allocation10 + $0x448] sm:$0xff]
    %v730 = vld [vmem:[#allocation10 + $0x450] sm:$0xff]
    %v731 = vld [vmem:[#allocation10 + $0x458] sm:$0xff]
    %v732 = vld [vmem:[#allocation10 + $0x460] sm:$0xff]
    %v733 = vld [vmem:[#allocation10 + $0x468] sm:$0xff]
    %v734 = vld [vmem:[#allocation10 + $0x470] sm:$0xff]
    %v735 = vld [vmem:[#allocation10 + $0x478] sm:$0xff]
    %v736 = vld [vmem:[#allocation10 + $0x480] sm:$0xff]
    %v737 = vld [vmem:[#allocation10 + $0x488] sm:$0xff]
    %v738 = vld [vmem:[#allocation10 + $0x490] sm:$0xff]
    %v739 = vld [vmem:[#allocation10 + $0x498] sm:$0xff]
    %v740 = vld [vmem:[#allocation10 + $0x4a0] sm:$0xff]
    %v741 = vld [vmem:[#allocation10 + $0x4a8] sm:$0xff]
    %v742 = vld [vmem:[#allocation10 + $0x4b0] sm:$0xff]
    %v743 = vld [vmem:[#allocation10 + $0x4b8] sm:$0xff]
    %v744 = vld [vmem:[#allocation10 + $0x4c0] sm:$0xff]
    %v745 = vld [vmem:[#allocation10 + $0x4c8] sm:$0xff]
    %v746 = vld [vmem:[#allocation10 + $0x4d0] sm:$0xff]
    %v747 = vld [vmem:[#allocation10 + $0x4d8] sm:$0xff]
    %v748 = vld [vmem:[#allocation10 + $0x4e0] sm:$0xff]
    %v749 = vld [vmem:[#allocation10 + $0x4e8] sm:$0xff]
    %v750 = vld [vmem:[#allocation10 + $0x4f0] sm:$0xff]
    %v751 = vld [vmem:[#allocation10 + $0x4f8] sm:$0xff]
    %v752 = vld [vmem:[#allocation10 + $0x500] sm:$0xff]
    %v753 = vld [vmem:[#allocation10 + $0x508] sm:$0xff]
    %v754 = vld [vmem:[#allocation10 + $0x510] sm:$0xff]
    %v755 = vld [vmem:[#allocation10 + $0x518] sm:$0xff]
    %v756 = vld [vmem:[#allocation10 + $0x520] sm:$0xff]
    %v757 = vld [vmem:[#allocation10 + $0x528] sm:$0xff]
    %v758 = vld [vmem:[#allocation10 + $0x530] sm:$0xff]
    %v759 = vld [vmem:[#allocation10 + $0x538] sm:$0xff]
    %v760 = vld [vmem:[#allocation10 + $0x540] sm:$0xff]
    %v761 = vld [vmem:[#allocation10 + $0x548] sm:$0xff]
    %v762 = vld [vmem:[#allocation10 + $0x550] sm:$0xff]
    %v763 = vld [vmem:[#allocation10 + $0x558] sm:$0xff]
    %v764 = vld [vmem:[#allocation10 + $0x560] sm:$0xff]
    %v765 = vld [vmem:[#allocation10 + $0x568] sm:$0xff]
    %v766 = vld [vmem:[#allocation10 + $0x570] sm:$0xff]
    %v767 = vld [vmem:[#allocation10 + $0x578] sm:$0xff]
    %v768 = vld [vmem:[#allocation10 + $0x580] sm:$0xff]
    %v769 = vld [vmem:[#allocation10 + $0x588] sm:$0xff]
    %v770 = vld [vmem:[#allocation10 + $0x590] sm:$0xff]
    %v771 = vld [vmem:[#allocation10 + $0x598] sm:$0xff]
    %v772 = vld [vmem:[#allocation10 + $0x5a0] sm:$0xff]
    %v773 = vld [vmem:[#allocation10 + $0x5a8] sm:$0xff]
    %v774 = vld [vmem:[#allocation10 + $0x5b0] sm:$0xff]
    %v775 = vld [vmem:[#allocation10 + $0x5b8] sm:$0xff]
    %v776 = vld [vmem:[#allocation10 + $0x5c0] sm:$0xff]
    %v777 = vld [vmem:[#allocation10 + $0x5c8] sm:$0xff]
    %v778 = vld [vmem:[#allocation10 + $0x5d0] sm:$0xff]
    %v779 = vld [vmem:[#allocation10 + $0x5d8] sm:$0xff]
    %v780 = vld [vmem:[#allocation10 + $0x5e0] sm:$0xff]
    %v781 = vld [vmem:[#allocation10 + $0x5e8] sm:$0xff]
    %v782 = vld [vmem:[#allocation10 + $0x5f0] sm:$0xff]
    %v783 = vld [vmem:[#allocation10 + $0x5f8] sm:$0xff]
    %v784 = vld [vmem:[#allocation10 + $0x600] sm:$0xff]
    %v785 = vld [vmem:[#allocation10 + $0x608] sm:$0xff]
    %v786 = vld [vmem:[#allocation10 + $0x610] sm:$0xff]
    %v787 = vld [vmem:[#allocation10 + $0x618] sm:$0xff]
    %v788 = vld [vmem:[#allocation10 + $0x620] sm:$0xff]
    %v789 = vld [vmem:[#allocation10 + $0x628] sm:$0xff]
    %v790 = vld [vmem:[#allocation10 + $0x630] sm:$0xff]
    %v791 = vld [vmem:[#allocation10 + $0x638] sm:$0xff]
    %v792 = vld [vmem:[#allocation10 + $0x640] sm:$0xff]
    %v793 = vld [vmem:[#allocation10 + $0x648] sm:$0xff]
    %v794 = vld [vmem:[#allocation10 + $0x650] sm:$0xff]
    %v795 = vld [vmem:[#allocation10 + $0x658] sm:$0xff]
    %v796 = vld [vmem:[#allocation10 + $0x660] sm:$0xff]
    %v797 = vld [vmem:[#allocation10 + $0x668] sm:$0xff]
    %v798 = vld [vmem:[#allocation10 + $0x670] sm:$0xff]
    %v799 = vld [vmem:[#allocation10 + $0x678] sm:$0xff]
    %v800 = vld [vmem:[#allocation10 + $0x680] sm:$0xff]
    %v801 = vld [vmem:[#allocation10 + $0x688] sm:$0xff]
    %v802 = vld [vmem:[#allocation10 + $0x690] sm:$0xff]
    %v803 = vld [vmem:[#allocation10 + $0x698] sm:$0xff]
    %v804 = vld [vmem:[#allocation10 + $0x6a0] sm:$0xff]
    %v805 = vld [vmem:[#allocation10 + $0x6a8] sm:$0xff]
    %v806 = vld [vmem:[#allocation10 + $0x6b0] sm:$0xff]
    %v807 = vld [vmem:[#allocation10 + $0x6b8] sm:$0xff]
    %v808 = vld [vmem:[#allocation10 + $0x6c0] sm:$0xff]
    %v809 = vld [vmem:[#allocation10 + $0x6c8] sm:$0xff]
    %v810 = vld [vmem:[#allocation10 + $0x6d0] sm:$0xff]
    %v811 = vld [vmem:[#allocation10 + $0x6d8] sm:$0xff]
    %v812 = vld [vmem:[#allocation10 + $0x6e0] sm:$0xff]
    %v813 = vld [vmem:[#allocation10 + $0x6e8] sm:$0xff]
    %v814 = vld [vmem:[#allocation10 + $0x6f0] sm:$0xff]
    %v815 = vld [vmem:[#allocation10 + $0x6f8] sm:$0xff]
    %v816 = vld [vmem:[#allocation10 + $0x700] sm:$0xff]
    %v817 = vld [vmem:[#allocation10 + $0x708] sm:$0xff]
    %v818 = vld [vmem:[#allocation10 + $0x710] sm:$0xff]
    %v819 = vld [vmem:[#allocation10 + $0x718] sm:$0xff]
    %v820 = vld [vmem:[#allocation10 + $0x720] sm:$0xff]
    %v821 = vld [vmem:[#allocation10 + $0x728] sm:$0xff]
    %v822 = vld [vmem:[#allocation10 + $0x730] sm:$0xff]
    %v823 = vld [vmem:[#allocation10 + $0x738] sm:$0xff]
    %v824 = vld [vmem:[#allocation10 + $0x740] sm:$0xff]
    %v825 = vld [vmem:[#allocation10 + $0x748] sm:$0xff]
    %v826 = vld [vmem:[#allocation10 + $0x750] sm:$0xff]
    %v827 = vld [vmem:[#allocation10 + $0x758] sm:$0xff]
    %v828 = vld [vmem:[#allocation10 + $0x760] sm:$0xff]
    %v829 = vld [vmem:[#allocation10 + $0x768] sm:$0xff]
    %v830 = vld [vmem:[#allocation10 + $0x770] sm:$0xff]
    %v831 = vld [vmem:[#allocation10 + $0x778] sm:$0xff]
    %v832 = vld [vmem:[#allocation10 + $0x780] sm:$0xff]
    %v833 = vld [vmem:[#allocation10 + $0x788] sm:$0xff]
    %v834 = vld [vmem:[#allocation10 + $0x790] sm:$0xff]
    %v835 = vld [vmem:[#allocation10 + $0x798] sm:$0xff]
    %v836 = vld [vmem:[#allocation10 + $0x7a0] sm:$0xff]
    %v837 = vld [vmem:[#allocation10 + $0x7a8] sm:$0xff]
    %v838 = vld [vmem:[#allocation10 + $0x7b0] sm:$0xff]
    %v839 = vld [vmem:[#allocation10 + $0x7b8] sm:$0xff]
    %v840 = vld [vmem:[#allocation10 + $0x7c0] sm:$0xff]
    %v841 = vld [vmem:[#allocation10 + $0x7c8] sm:$0xff]
    %v842 = vld [vmem:[#allocation10 + $0x7d0] sm:$0xff]
    %v843 = vld [vmem:[#allocation10 + $0x7d8] sm:$0xff]
    %v844 = vld [vmem:[#allocation10 + $0x7e0] sm:$0xff]
    %v845 = vld [vmem:[#allocation10 + $0x7e8] sm:$0xff]
    %v846 = vld [vmem:[#allocation10 + $0x7f0] sm:$0xff]
    %v847 = vld [vmem:[#allocation10 + $0x7f8] sm:$0xff]
    %v848 = vld [vmem:[%s5] sm:$0xf]
    %v850 = vperm.slane %v848, 0
    %v851 = vperm.slane %v848, 1
    %v852 = vperm.slane %v848, 2
    %v853 = vperm.slane %v848, 3
    %v1114 = vunpack.c.l.b16 %v592
    %v1115 = vunpack.c.h.b16 %v592
    %v1116 = vunpack.c.l.b16 %v593
    %v1117 = vunpack.c.h.b16 %v593
    %v1118 = vunpack.c.l.b16 %v594
    %v1119 = vunpack.c.h.b16 %v594
    %v1120 = vunpack.c.l.b16 %v595
    %v1121 = vunpack.c.h.b16 %v595
    %v1122 = vunpack.c.l.b16 %v596
    %v1123 = vunpack.c.h.b16 %v596
    %v1124 = vunpack.c.l.b16 %v597
    %v1125 = vunpack.c.h.b16 %v597
    %v1126 = vunpack.c.l.b16 %v598
    %v1127 = vunpack.c.h.b16 %v598
    %v1128 = vunpack.c.l.b16 %v599
    %v1129 = vunpack.c.h.b16 %v599
    %v1130 = vunpack.c.l.b16 %v600
    %v1131 = vunpack.c.h.b16 %v600
    %v1132 = vunpack.c.l.b16 %v601
    %v1133 = vunpack.c.h.b16 %v601
    %v1134 = vunpack.c.l.b16 %v602
    %v1135 = vunpack.c.h.b16 %v602
    %v1136 = vunpack.c.l.b16 %v603
    %v1137 = vunpack.c.h.b16 %v603
    %v1138 = vunpack.c.l.b16 %v604
    %v1139 = vunpack.c.h.b16 %v604
    %v1140 = vunpack.c.l.b16 %v605
    %v1141 = vunpack.c.h.b16 %v605
    %v1142 = vunpack.c.l.b16 %v606
    %v1143 = vunpack.c.h.b16 %v606
    %v1144 = vunpack.c.l.b16 %v607
    %v1145 = vunpack.c.h.b16 %v607
    %v1146 = vunpack.c.l.b16 %v608
    %v1147 = vunpack.c.h.b16 %v608
    %v1148 = vunpack.c.l.b16 %v609
    %v1149 = vunpack.c.h.b16 %v609
    %v1150 = vunpack.c.l.b16 %v610
    %v1151 = vunpack.c.h.b16 %v610
    %v1152 = vunpack.c.l.b16 %v611
    %v1153 = vunpack.c.h.b16 %v611
    %v1154 = vunpack.c.l.b16 %v612
    %v1155 = vunpack.c.h.b16 %v612
    %v1156 = vunpack.c.l.b16 %v613
    %v1157 = vunpack.c.h.b16 %v613
    %v1158 = vunpack.c.l.b16 %v614
    %v1159 = vunpack.c.h.b16 %v614
    %v1160 = vunpack.c.l.b16 %v615
    %v1161 = vunpack.c.h.b16 %v615
    %v1162 = vunpack.c.l.b16 %v616
    %v1163 = vunpack.c.h.b16 %v616
    %v1164 = vunpack.c.l.b16 %v617
    %v1165 = vunpack.c.h.b16 %v617
    %v1166 = vunpack.c.l.b16 %v618
    %v1167 = vunpack.c.h.b16 %v618
    %v1168 = vunpack.c.l.b16 %v619
    %v1169 = vunpack.c.h.b16 %v619
    %v1170 = vunpack.c.l.b16 %v620
    %v1171 = vunpack.c.h.b16 %v620
    %v1172 = vunpack.c.l.b16 %v621
    %v1173 = vunpack.c.h.b16 %v621
    %v1174 = vunpack.c.l.b16 %v622
    %v1175 = vunpack.c.h.b16 %v622
    %v1176 = vunpack.c.l.b16 %v623
    %v1177 = vunpack.c.h.b16 %v623
    %v1178 = vunpack.c.l.b16 %v624
    %v1179 = vunpack.c.h.b16 %v624
    %v1180 = vunpack.c.l.b16 %v625
    %v1181 = vunpack.c.h.b16 %v625
    %v1182 = vunpack.c.l.b16 %v626
    %v1183 = vunpack.c.h.b16 %v626
    %v1184 = vunpack.c.l.b16 %v627
    %v1185 = vunpack.c.h.b16 %v627
    %v1186 = vunpack.c.l.b16 %v628
    %v1187 = vunpack.c.h.b16 %v628
    %v1188 = vunpack.c.l.b16 %v629
    %v1189 = vunpack.c.h.b16 %v629
    %v1190 = vunpack.c.l.b16 %v630
    %v1191 = vunpack.c.h.b16 %v630
    %v1192 = vunpack.c.l.b16 %v631
    %v1193 = vunpack.c.h.b16 %v631
    %v1194 = vunpack.c.l.b16 %v632
    %v1195 = vunpack.c.h.b16 %v632
    %v1196 = vunpack.c.l.b16 %v633
    %v1197 = vunpack.c.h.b16 %v633
    %v1198 = vunpack.c.l.b16 %v634
    %v1199 = vunpack.c.h.b16 %v634
    %v1200 = vunpack.c.l.b16 %v635
    %v1201 = vunpack.c.h.b16 %v635
    %v1202 = vunpack.c.l.b16 %v636
    %v1203 = vunpack.c.h.b16 %v636
    %v1204 = vunpack.c.l.b16 %v637
    %v1205 = vunpack.c.h.b16 %v637
    %v1206 = vunpack.c.l.b16 %v638
    %v1207 = vunpack.c.h.b16 %v638
    %v1208 = vunpack.c.l.b16 %v639
    %v1209 = vunpack.c.h.b16 %v639
    %v1210 = vunpack.c.l.b16 %v640
    %v1211 = vunpack.c.h.b16 %v640
    %v1212 = vunpack.c.l.b16 %v641
    %v1213 = vunpack.c.h.b16 %v641
    %v1214 = vunpack.c.l.b16 %v642
    %v1215 = vunpack.c.h.b16 %v642
    %v1216 = vunpack.c.l.b16 %v643
    %v1217 = vunpack.c.h.b16 %v643
    %v1218 = vunpack.c.l.b16 %v644
    %v1219 = vunpack.c.h.b16 %v644
    %v1220 = vunpack.c.l.b16 %v645
    %v1221 = vunpack.c.h.b16 %v645
    %v1222 = vunpack.c.l.b16 %v646
    %v1223 = vunpack.c.h.b16 %v646
    %v1224 = vunpack.c.l.b16 %v647
    %v1225 = vunpack.c.h.b16 %v647
    %v1226 = vunpack.c.l.b16 %v648
    %v1227 = vunpack.c.h.b16 %v648
    %v1228 = vunpack.c.l.b16 %v649
    %v1229 = vunpack.c.h.b16 %v649
    %v1230 = vunpack.c.l.b16 %v650
    %v1231 = vunpack.c.h.b16 %v650
    %v1232 = vunpack.c.l.b16 %v651
    %v1233 = vunpack.c.h.b16 %v651
    %v1234 = vunpack.c.l.b16 %v652
    %v1235 = vunpack.c.h.b16 %v652
    %v1236 = vunpack.c.l.b16 %v653
    %v1237 = vunpack.c.h.b16 %v653
    %v1238 = vunpack.c.l.b16 %v654
    %v1239 = vunpack.c.h.b16 %v654
    %v1240 = vunpack.c.l.b16 %v655
    %v1241 = vunpack.c.h.b16 %v655
    %v1242 = vunpack.c.l.b16 %v656
    %v1243 = vunpack.c.h.b16 %v656
    %v1244 = vunpack.c.l.b16 %v657
    %v1245 = vunpack.c.h.b16 %v657
    %v1246 = vunpack.c.l.b16 %v658
    %v1247 = vunpack.c.h.b16 %v658
    %v1248 = vunpack.c.l.b16 %v659
    %v1249 = vunpack.c.h.b16 %v659
    %v1250 = vunpack.c.l.b16 %v660
    %v1251 = vunpack.c.h.b16 %v660
    %v1252 = vunpack.c.l.b16 %v661
    %v1253 = vunpack.c.h.b16 %v661
    %v1254 = vunpack.c.l.b16 %v662
    %v1255 = vunpack.c.h.b16 %v662
    %v1256 = vunpack.c.l.b16 %v663
    %v1257 = vunpack.c.h.b16 %v663
    %v1258 = vunpack.c.l.b16 %v664
    %v1259 = vunpack.c.h.b16 %v664
    %v1260 = vunpack.c.l.b16 %v665
    %v1261 = vunpack.c.h.b16 %v665
    %v1262 = vunpack.c.l.b16 %v666
    %v1263 = vunpack.c.h.b16 %v666
    %v1264 = vunpack.c.l.b16 %v667
    %v1265 = vunpack.c.h.b16 %v667
    %v1266 = vunpack.c.l.b16 %v668
    %v1267 = vunpack.c.h.b16 %v668
    %v1268 = vunpack.c.l.b16 %v669
    %v1269 = vunpack.c.h.b16 %v669
    %v1270 = vunpack.c.l.b16 %v670
    %v1271 = vunpack.c.h.b16 %v670
    %v1272 = vunpack.c.l.b16 %v671
    %v1273 = vunpack.c.h.b16 %v671
    %v1274 = vunpack.c.l.b16 %v672
    %v1275 = vunpack.c.h.b16 %v672
    %v1276 = vunpack.c.l.b16 %v673
    %v1277 = vunpack.c.h.b16 %v673
    %v1278 = vunpack.c.l.b16 %v674
    %v1279 = vunpack.c.h.b16 %v674
    %v1280 = vunpack.c.l.b16 %v675
    %v1281 = vunpack.c.h.b16 %v675
    %v1282 = vunpack.c.l.b16 %v676
    %v1283 = vunpack.c.h.b16 %v676
    %v1284 = vunpack.c.l.b16 %v677
    %v1285 = vunpack.c.h.b16 %v677
    %v1286 = vunpack.c.l.b16 %v678
    %v1287 = vunpack.c.h.b16 %v678
    %v1288 = vunpack.c.l.b16 %v679
    %v1289 = vunpack.c.h.b16 %v679
    %v1290 = vunpack.c.l.b16 %v680
    %v1291 = vunpack.c.h.b16 %v680
    %v1292 = vunpack.c.l.b16 %v681
    %v1293 = vunpack.c.h.b16 %v681
    %v1294 = vunpack.c.l.b16 %v682
    %v1295 = vunpack.c.h.b16 %v682
    %v1296 = vunpack.c.l.b16 %v683
    %v1297 = vunpack.c.h.b16 %v683
    %v1298 = vunpack.c.l.b16 %v684
    %v1299 = vunpack.c.h.b16 %v684
    %v1300 = vunpack.c.l.b16 %v685
    %v1301 = vunpack.c.h.b16 %v685
    %v1302 = vunpack.c.l.b16 %v686
    %v1303 = vunpack.c.h.b16 %v686
    %v1304 = vunpack.c.l.b16 %v687
    %v1305 = vunpack.c.h.b16 %v687
    %v1306 = vunpack.c.l.b16 %v688
    %v1307 = vunpack.c.h.b16 %v688
    %v1308 = vunpack.c.l.b16 %v689
    %v1309 = vunpack.c.h.b16 %v689
    %v1310 = vunpack.c.l.b16 %v690
    %v1311 = vunpack.c.h.b16 %v690
    %v1312 = vunpack.c.l.b16 %v691
    %v1313 = vunpack.c.h.b16 %v691
    %v1314 = vunpack.c.l.b16 %v692
    %v1315 = vunpack.c.h.b16 %v692
    %v1316 = vunpack.c.l.b16 %v693
    %v1317 = vunpack.c.h.b16 %v693
    %v1318 = vunpack.c.l.b16 %v694
    %v1319 = vunpack.c.h.b16 %v694
    %v1320 = vunpack.c.l.b16 %v695
    %v1321 = vunpack.c.h.b16 %v695
    %v1322 = vunpack.c.l.b16 %v696
    %v1323 = vunpack.c.h.b16 %v696
    %v1324 = vunpack.c.l.b16 %v697
    %v1325 = vunpack.c.h.b16 %v697
    %v1326 = vunpack.c.l.b16 %v698
    %v1327 = vunpack.c.h.b16 %v698
    %v1328 = vunpack.c.l.b16 %v699
    %v1329 = vunpack.c.h.b16 %v699
    %v1330 = vunpack.c.l.b16 %v700
    %v1331 = vunpack.c.h.b16 %v700
    %v1332 = vunpack.c.l.b16 %v701
    %v1333 = vunpack.c.h.b16 %v701
    %v1334 = vunpack.c.l.b16 %v702
    %v1335 = vunpack.c.h.b16 %v702
    %v1336 = vunpack.c.l.b16 %v703
    %v1337 = vunpack.c.h.b16 %v703
    %v1338 = vunpack.c.l.b16 %v704
    %v1339 = vunpack.c.h.b16 %v704
    %v1340 = vunpack.c.l.b16 %v705
    %v1341 = vunpack.c.h.b16 %v705
    %v1342 = vunpack.c.l.b16 %v706
    %v1343 = vunpack.c.h.b16 %v706
    %v1344 = vunpack.c.l.b16 %v707
    %v1345 = vunpack.c.h.b16 %v707
    %v1346 = vunpack.c.l.b16 %v708
    %v1347 = vunpack.c.h.b16 %v708
    %v1348 = vunpack.c.l.b16 %v709
    %v1349 = vunpack.c.h.b16 %v709
    %v1350 = vunpack.c.l.b16 %v710
    %v1351 = vunpack.c.h.b16 %v710
    %v1352 = vunpack.c.l.b16 %v711
    %v1353 = vunpack.c.h.b16 %v711
    %v1354 = vunpack.c.l.b16 %v712
    %v1355 = vunpack.c.h.b16 %v712
    %v1356 = vunpack.c.l.b16 %v713
    %v1357 = vunpack.c.h.b16 %v713
    %v1358 = vunpack.c.l.b16 %v714
    %v1359 = vunpack.c.h.b16 %v714
    %v1360 = vunpack.c.l.b16 %v715
    %v1361 = vunpack.c.h.b16 %v715
    %v1362 = vunpack.c.l.b16 %v716
    %v1363 = vunpack.c.h.b16 %v716
    %v1364 = vunpack.c.l.b16 %v717
    %v1365 = vunpack.c.h.b16 %v717
    %v1366 = vunpack.c.l.b16 %v718
    %v1367 = vunpack.c.h.b16 %v718
    %v1368 = vunpack.c.l.b16 %v719
    %v1369 = vunpack.c.h.b16 %v719
    %v1370 = vunpack.c.l.b16 %v720
    %v1371 = vunpack.c.h.b16 %v720
    %v1372 = vunpack.c.l.b16 %v721
    %v1373 = vunpack.c.h.b16 %v721
    %v1374 = vunpack.c.l.b16 %v722
    %v1375 = vunpack.c.h.b16 %v722
    %v1376 = vunpack.c.l.b16 %v723
    %v1377 = vunpack.c.h.b16 %v723
    %v1378 = vunpack.c.l.b16 %v724
    %v1379 = vunpack.c.h.b16 %v724
    %v1380 = vunpack.c.l.b16 %v725
    %v1381 = vunpack.c.h.b16 %v725
    %v1382 = vunpack.c.l.b16 %v726
    %v1383 = vunpack.c.h.b16 %v726
    %v1384 = vunpack.c.l.b16 %v727
    %v1385 = vunpack.c.h.b16 %v727
    %v1386 = vunpack.c.l.b16 %v728
    %v1387 = vunpack.c.h.b16 %v728
    %v1388 = vunpack.c.l.b16 %v729
    %v1389 = vunpack.c.h.b16 %v729
    %v1390 = vunpack.c.l.b16 %v730
    %v1391 = vunpack.c.h.b16 %v730
    %v1392 = vunpack.c.l.b16 %v731
    %v1393 = vunpack.c.h.b16 %v731
    %v1394 = vunpack.c.l.b16 %v732
    %v1395 = vunpack.c.h.b16 %v732
    %v1396 = vunpack.c.l.b16 %v733
    %v1397 = vunpack.c.h.b16 %v733
    %v1398 = vunpack.c.l.b16 %v734
    %v1399 = vunpack.c.h.b16 %v734
    %v1400 = vunpack.c.l.b16 %v735
    %v1401 = vunpack.c.h.b16 %v735
    %v1402 = vunpack.c.l.b16 %v736
    %v1403 = vunpack.c.h.b16 %v736
    %v1404 = vunpack.c.l.b16 %v737
    %v1405 = vunpack.c.h.b16 %v737
    %v1406 = vunpack.c.l.b16 %v738
    %v1407 = vunpack.c.h.b16 %v738
    %v1408 = vunpack.c.l.b16 %v739
    %v1409 = vunpack.c.h.b16 %v739
    %v1410 = vunpack.c.l.b16 %v740
    %v1411 = vunpack.c.h.b16 %v740
    %v1412 = vunpack.c.l.b16 %v741
    %v1413 = vunpack.c.h.b16 %v741
    %v1414 = vunpack.c.l.b16 %v742
    %v1415 = vunpack.c.h.b16 %v742
    %v1416 = vunpack.c.l.b16 %v743
    %v1417 = vunpack.c.h.b16 %v743
    %v1418 = vunpack.c.l.b16 %v744
    %v1419 = vunpack.c.h.b16 %v744
    %v1420 = vunpack.c.l.b16 %v745
    %v1421 = vunpack.c.h.b16 %v745
    %v1422 = vunpack.c.l.b16 %v746
    %v1423 = vunpack.c.h.b16 %v746
    %v1424 = vunpack.c.l.b16 %v747
    %v1425 = vunpack.c.h.b16 %v747
    %v1426 = vunpack.c.l.b16 %v748
    %v1427 = vunpack.c.h.b16 %v748
    %v1428 = vunpack.c.l.b16 %v749
    %v1429 = vunpack.c.h.b16 %v749
    %v1430 = vunpack.c.l.b16 %v750
    %v1431 = vunpack.c.h.b16 %v750
    %v1432 = vunpack.c.l.b16 %v751
    %v1433 = vunpack.c.h.b16 %v751
    %v1434 = vunpack.c.l.b16 %v752
    %v1435 = vunpack.c.h.b16 %v752
    %v1436 = vunpack.c.l.b16 %v753
    %v1437 = vunpack.c.h.b16 %v753
    %v1438 = vunpack.c.l.b16 %v754
    %v1439 = vunpack.c.h.b16 %v754
    %v1440 = vunpack.c.l.b16 %v755
    %v1441 = vunpack.c.h.b16 %v755
    %v1442 = vunpack.c.l.b16 %v756
    %v1443 = vunpack.c.h.b16 %v756
    %v1444 = vunpack.c.l.b16 %v757
    %v1445 = vunpack.c.h.b16 %v757
    %v1446 = vunpack.c.l.b16 %v758
    %v1447 = vunpack.c.h.b16 %v758
    %v1448 = vunpack.c.l.b16 %v759
    %v1449 = vunpack.c.h.b16 %v759
    %v1450 = vunpack.c.l.b16 %v760
    %v1451 = vunpack.c.h.b16 %v760
    %v1452 = vunpack.c.l.b16 %v761
    %v1453 = vunpack.c.h.b16 %v761
    %v1454 = vunpack.c.l.b16 %v762
    %v1455 = vunpack.c.h.b16 %v762
    %v1456 = vunpack.c.l.b16 %v763
    %v1457 = vunpack.c.h.b16 %v763
    %v1458 = vunpack.c.l.b16 %v764
    %v1459 = vunpack.c.h.b16 %v764
    %v1460 = vunpack.c.l.b16 %v765
    %v1461 = vunpack.c.h.b16 %v765
    %v1462 = vunpack.c.l.b16 %v766
    %v1463 = vunpack.c.h.b16 %v766
    %v1464 = vunpack.c.l.b16 %v767
    %v1465 = vunpack.c.h.b16 %v767
    %v1466 = vunpack.c.l.b16 %v768
    %v1467 = vunpack.c.h.b16 %v768
    %v1468 = vunpack.c.l.b16 %v769
    %v1469 = vunpack.c.h.b16 %v769
    %v1470 = vunpack.c.l.b16 %v770
    %v1471 = vunpack.c.h.b16 %v770
    %v1472 = vunpack.c.l.b16 %v771
    %v1473 = vunpack.c.h.b16 %v771
    %v1474 = vunpack.c.l.b16 %v772
    %v1475 = vunpack.c.h.b16 %v772
    %v1476 = vunpack.c.l.b16 %v773
    %v1477 = vunpack.c.h.b16 %v773
    %v1478 = vunpack.c.l.b16 %v774
    %v1479 = vunpack.c.h.b16 %v774
    %v1480 = vunpack.c.l.b16 %v775
    %v1481 = vunpack.c.h.b16 %v775
    %v1482 = vunpack.c.l.b16 %v776
    %v1483 = vunpack.c.h.b16 %v776
    %v1484 = vunpack.c.l.b16 %v777
    %v1485 = vunpack.c.h.b16 %v777
    %v1486 = vunpack.c.l.b16 %v778
    %v1487 = vunpack.c.h.b16 %v778
    %v1488 = vunpack.c.l.b16 %v779
    %v1489 = vunpack.c.h.b16 %v779
    %v1490 = vunpack.c.l.b16 %v780
    %v1491 = vunpack.c.h.b16 %v780
    %v1492 = vunpack.c.l.b16 %v781
    %v1493 = vunpack.c.h.b16 %v781
    %v1494 = vunpack.c.l.b16 %v782
    %v1495 = vunpack.c.h.b16 %v782
    %v1496 = vunpack.c.l.b16 %v783
    %v1497 = vunpack.c.h.b16 %v783
    %v1498 = vunpack.c.l.b16 %v784
    %v1499 = vunpack.c.h.b16 %v784
    %v1500 = vunpack.c.l.b16 %v785
    %v1501 = vunpack.c.h.b16 %v785
    %v1502 = vunpack.c.l.b16 %v786
    %v1503 = vunpack.c.h.b16 %v786
    %v1504 = vunpack.c.l.b16 %v787
    %v1505 = vunpack.c.h.b16 %v787
    %v1506 = vunpack.c.l.b16 %v788
    %v1507 = vunpack.c.h.b16 %v788
    %v1508 = vunpack.c.l.b16 %v789
    %v1509 = vunpack.c.h.b16 %v789
    %v1510 = vunpack.c.l.b16 %v790
    %v1511 = vunpack.c.h.b16 %v790
    %v1512 = vunpack.c.l.b16 %v791
    %v1513 = vunpack.c.h.b16 %v791
    %v1514 = vunpack.c.l.b16 %v792
    %v1515 = vunpack.c.h.b16 %v792
    %v1516 = vunpack.c.l.b16 %v793
    %v1517 = vunpack.c.h.b16 %v793
    %v1518 = vunpack.c.l.b16 %v794
    %v1519 = vunpack.c.h.b16 %v794
    %v1520 = vunpack.c.l.b16 %v795
    %v1521 = vunpack.c.h.b16 %v795
    %v1522 = vunpack.c.l.b16 %v796
    %v1523 = vunpack.c.h.b16 %v796
    %v1524 = vunpack.c.l.b16 %v797
    %v1525 = vunpack.c.h.b16 %v797
    %v1526 = vunpack.c.l.b16 %v798
    %v1527 = vunpack.c.h.b16 %v798
    %v1528 = vunpack.c.l.b16 %v799
    %v1529 = vunpack.c.h.b16 %v799
    %v1530 = vunpack.c.l.b16 %v800
    %v1531 = vunpack.c.h.b16 %v800
    %v1532 = vunpack.c.l.b16 %v801
    %v1533 = vunpack.c.h.b16 %v801
    %v1534 = vunpack.c.l.b16 %v802
    %v1535 = vunpack.c.h.b16 %v802
    %v1536 = vunpack.c.l.b16 %v803
    %v1537 = vunpack.c.h.b16 %v803
    %v1538 = vunpack.c.l.b16 %v804
    %v1539 = vunpack.c.h.b16 %v804
    %v1540 = vunpack.c.l.b16 %v805
    %v1541 = vunpack.c.h.b16 %v805
    %v1542 = vunpack.c.l.b16 %v806
    %v1543 = vunpack.c.h.b16 %v806
    %v1544 = vunpack.c.l.b16 %v807
    %v1545 = vunpack.c.h.b16 %v807
    %v1546 = vunpack.c.l.b16 %v808
    %v1547 = vunpack.c.h.b16 %v808
    %v1548 = vunpack.c.l.b16 %v809
    %v1549 = vunpack.c.h.b16 %v809
    %v1550 = vunpack.c.l.b16 %v810
    %v1551 = vunpack.c.h.b16 %v810
    %v1552 = vunpack.c.l.b16 %v811
    %v1553 = vunpack.c.h.b16 %v811
    %v1554 = vunpack.c.l.b16 %v812
    %v1555 = vunpack.c.h.b16 %v812
    %v1556 = vunpack.c.l.b16 %v813
    %v1557 = vunpack.c.h.b16 %v813
    %v1558 = vunpack.c.l.b16 %v814
    %v1559 = vunpack.c.h.b16 %v814
    %v1560 = vunpack.c.l.b16 %v815
    %v1561 = vunpack.c.h.b16 %v815
    %v1562 = vunpack.c.l.b16 %v816
    %v1563 = vunpack.c.h.b16 %v816
    %v1564 = vunpack.c.l.b16 %v817
    %v1565 = vunpack.c.h.b16 %v817
    %v1566 = vunpack.c.l.b16 %v818
    %v1567 = vunpack.c.h.b16 %v818
    %v1568 = vunpack.c.l.b16 %v819
    %v1569 = vunpack.c.h.b16 %v819
    %v1570 = vunpack.c.l.b16 %v820
    %v1571 = vunpack.c.h.b16 %v820
    %v1572 = vunpack.c.l.b16 %v821
    %v1573 = vunpack.c.h.b16 %v821
    %v1574 = vunpack.c.l.b16 %v822
    %v1575 = vunpack.c.h.b16 %v822
    %v1576 = vunpack.c.l.b16 %v823
    %v1577 = vunpack.c.h.b16 %v823
    %v1578 = vunpack.c.l.b16 %v824
    %v1579 = vunpack.c.h.b16 %v824
    %v1580 = vunpack.c.l.b16 %v825
    %v1581 = vunpack.c.h.b16 %v825
    %v1582 = vunpack.c.l.b16 %v826
    %v1583 = vunpack.c.h.b16 %v826
    %v1584 = vunpack.c.l.b16 %v827
    %v1585 = vunpack.c.h.b16 %v827
    %v1586 = vunpack.c.l.b16 %v828
    %v1587 = vunpack.c.h.b16 %v828
    %v1588 = vunpack.c.l.b16 %v829
    %v1589 = vunpack.c.h.b16 %v829
    %v1590 = vunpack.c.l.b16 %v830
    %v1591 = vunpack.c.h.b16 %v830
    %v1592 = vunpack.c.l.b16 %v831
    %v1593 = vunpack.c.h.b16 %v831
    %v1594 = vunpack.c.l.b16 %v832
    %v1595 = vunpack.c.h.b16 %v832
    %v1596 = vunpack.c.l.b16 %v833
    %v1597 = vunpack.c.h.b16 %v833
    %v1598 = vunpack.c.l.b16 %v834
    %v1599 = vunpack.c.h.b16 %v834
    %v1600 = vunpack.c.l.b16 %v835
    %v1601 = vunpack.c.h.b16 %v835
    %v1602 = vunpack.c.l.b16 %v836
    %v1603 = vunpack.c.h.b16 %v836
    %v1604 = vunpack.c.l.b16 %v837
    %v1605 = vunpack.c.h.b16 %v837
    %v1606 = vunpack.c.l.b16 %v838
    %v1607 = vunpack.c.h.b16 %v838
    %v1608 = vunpack.c.l.b16 %v839
    %v1609 = vunpack.c.h.b16 %v839
    %v1610 = vunpack.c.l.b16 %v840
    %v1611 = vunpack.c.h.b16 %v840
    %v1612 = vunpack.c.l.b16 %v841
    %v1613 = vunpack.c.h.b16 %v841
    %v1614 = vunpack.c.l.b16 %v842
    %v1615 = vunpack.c.h.b16 %v842
    %v1616 = vunpack.c.l.b16 %v843
    %v1617 = vunpack.c.h.b16 %v843
    %v1618 = vunpack.c.l.b16 %v844
    %v1619 = vunpack.c.h.b16 %v844
    %v1620 = vunpack.c.l.b16 %v845
    %v1621 = vunpack.c.h.b16 %v845
    %v1622 = vunpack.c.l.b16 %v846
    %v1623 = vunpack.c.h.b16 %v846
    %v1624 = vunpack.c.l.b16 %v847
    %v1625 = vunpack.c.h.b16 %v847
    %v1626 = vpack.c.b16 %v1118, %v1114
    %v1627 = vpack.c.b16 %v1119, %v1115
    %v1628 = vpack.c.b16 %v1120, %v1116
    %v1629 = vpack.c.b16 %v1121, %v1117
    %v1630 = vpack.c.b16 %v1126, %v1122
    %v1631 = vpack.c.b16 %v1127, %v1123
    %v1632 = vpack.c.b16 %v1128, %v1124
    %v1633 = vpack.c.b16 %v1129, %v1125
    %v1634 = vpack.c.b16 %v1134, %v1130
    %v1635 = vpack.c.b16 %v1135, %v1131
    %v1636 = vpack.c.b16 %v1136, %v1132
    %v1637 = vpack.c.b16 %v1137, %v1133
    %v1638 = vpack.c.b16 %v1142, %v1138
    %v1639 = vpack.c.b16 %v1143, %v1139
    %v1640 = vpack.c.b16 %v1144, %v1140
    %v1641 = vpack.c.b16 %v1145, %v1141
    %v1642 = vpack.c.b16 %v1150, %v1146
    %v1643 = vpack.c.b16 %v1151, %v1147
    %v1644 = vpack.c.b16 %v1152, %v1148
    %v1645 = vpack.c.b16 %v1153, %v1149
    %v1646 = vpack.c.b16 %v1158, %v1154
    %v1647 = vpack.c.b16 %v1159, %v1155
    %v1648 = vpack.c.b16 %v1160, %v1156
    %v1649 = vpack.c.b16 %v1161, %v1157
    %v1650 = vpack.c.b16 %v1166, %v1162
    %v1651 = vpack.c.b16 %v1167, %v1163
    %v1652 = vpack.c.b16 %v1168, %v1164
    %v1653 = vpack.c.b16 %v1169, %v1165
    %v1654 = vpack.c.b16 %v1174, %v1170
    %v1655 = vpack.c.b16 %v1175, %v1171
    %v1656 = vpack.c.b16 %v1176, %v1172
    %v1657 = vpack.c.b16 %v1177, %v1173
    %v1658 = vpack.c.b16 %v1182, %v1178
    %v1659 = vpack.c.b16 %v1183, %v1179
    %v1660 = vpack.c.b16 %v1184, %v1180
    %v1661 = vpack.c.b16 %v1185, %v1181
    %v1662 = vpack.c.b16 %v1190, %v1186
    %v1663 = vpack.c.b16 %v1191, %v1187
    %v1664 = vpack.c.b16 %v1192, %v1188
    %v1665 = vpack.c.b16 %v1193, %v1189
    %v1666 = vpack.c.b16 %v1198, %v1194
    %v1667 = vpack.c.b16 %v1199, %v1195
    %v1668 = vpack.c.b16 %v1200, %v1196
    %v1669 = vpack.c.b16 %v1201, %v1197
    %v1670 = vpack.c.b16 %v1206, %v1202
    %v1671 = vpack.c.b16 %v1207, %v1203
    %v1672 = vpack.c.b16 %v1208, %v1204
    %v1673 = vpack.c.b16 %v1209, %v1205
    %v1674 = vpack.c.b16 %v1214, %v1210
    %v1675 = vpack.c.b16 %v1215, %v1211
    %v1676 = vpack.c.b16 %v1216, %v1212
    %v1677 = vpack.c.b16 %v1217, %v1213
    %v1678 = vpack.c.b16 %v1222, %v1218
    %v1679 = vpack.c.b16 %v1223, %v1219
    %v1680 = vpack.c.b16 %v1224, %v1220
    %v1681 = vpack.c.b16 %v1225, %v1221
    %v1682 = vpack.c.b16 %v1230, %v1226
    %v1683 = vpack.c.b16 %v1231, %v1227
    %v1684 = vpack.c.b16 %v1232, %v1228
    %v1685 = vpack.c.b16 %v1233, %v1229
    %v1686 = vpack.c.b16 %v1238, %v1234
    %v1687 = vpack.c.b16 %v1239, %v1235
    %v1688 = vpack.c.b16 %v1240, %v1236
    %v1689 = vpack.c.b16 %v1241, %v1237
    %v1690 = vpack.c.b16 %v1246, %v1242
    %v1691 = vpack.c.b16 %v1247, %v1243
    %v1692 = vpack.c.b16 %v1248, %v1244
    %v1693 = vpack.c.b16 %v1249, %v1245
    %v1694 = vpack.c.b16 %v1254, %v1250
    %v1695 = vpack.c.b16 %v1255, %v1251
    %v1696 = vpack.c.b16 %v1256, %v1252
    %v1697 = vpack.c.b16 %v1257, %v1253
    %v1698 = vpack.c.b16 %v1262, %v1258
    %v1699 = vpack.c.b16 %v1263, %v1259
    %v1700 = vpack.c.b16 %v1264, %v1260
    %v1701 = vpack.c.b16 %v1265, %v1261
    %v1702 = vpack.c.b16 %v1270, %v1266
    %v1703 = vpack.c.b16 %v1271, %v1267
    %v1704 = vpack.c.b16 %v1272, %v1268
    %v1705 = vpack.c.b16 %v1273, %v1269
    %v1706 = vpack.c.b16 %v1278, %v1274
    %v1707 = vpack.c.b16 %v1279, %v1275
    %v1708 = vpack.c.b16 %v1280, %v1276
    %v1709 = vpack.c.b16 %v1281, %v1277
    %v1710 = vpack.c.b16 %v1286, %v1282
    %v1711 = vpack.c.b16 %v1287, %v1283
    %v1712 = vpack.c.b16 %v1288, %v1284
    %v1713 = vpack.c.b16 %v1289, %v1285
    %v1714 = vpack.c.b16 %v1294, %v1290
    %v1715 = vpack.c.b16 %v1295, %v1291
    %v1716 = vpack.c.b16 %v1296, %v1292
    %v1717 = vpack.c.b16 %v1297, %v1293
    %v1718 = vpack.c.b16 %v1302, %v1298
    %v1719 = vpack.c.b16 %v1303, %v1299
    %v1720 = vpack.c.b16 %v1304, %v1300
    %v1721 = vpack.c.b16 %v1305, %v1301
    %v1722 = vpack.c.b16 %v1310, %v1306
    %v1723 = vpack.c.b16 %v1311, %v1307
    %v1724 = vpack.c.b16 %v1312, %v1308
    %v1725 = vpack.c.b16 %v1313, %v1309
    %v1726 = vpack.c.b16 %v1318, %v1314
    %v1727 = vpack.c.b16 %v1319, %v1315
    %v1728 = vpack.c.b16 %v1320, %v1316
    %v1729 = vpack.c.b16 %v1321, %v1317
    %v1730 = vpack.c.b16 %v1326, %v1322
    %v1731 = vpack.c.b16 %v1327, %v1323
    %v1732 = vpack.c.b16 %v1328, %v1324
    %v1733 = vpack.c.b16 %v1329, %v1325
    %v1734 = vpack.c.b16 %v1334, %v1330
    %v1735 = vpack.c.b16 %v1335, %v1331
    %v1736 = vpack.c.b16 %v1336, %v1332
    %v1737 = vpack.c.b16 %v1337, %v1333
    %v1738 = vpack.c.b16 %v1342, %v1338
    %v1739 = vpack.c.b16 %v1343, %v1339
    %v1740 = vpack.c.b16 %v1344, %v1340
    %v1741 = vpack.c.b16 %v1345, %v1341
    %v1742 = vpack.c.b16 %v1350, %v1346
    %v1743 = vpack.c.b16 %v1351, %v1347
    %v1744 = vpack.c.b16 %v1352, %v1348
    %v1745 = vpack.c.b16 %v1353, %v1349
    %v1746 = vpack.c.b16 %v1358, %v1354
    %v1747 = vpack.c.b16 %v1359, %v1355
    %v1748 = vpack.c.b16 %v1360, %v1356
    %v1749 = vpack.c.b16 %v1361, %v1357
    %v1750 = vpack.c.b16 %v1366, %v1362
    %v1751 = vpack.c.b16 %v1367, %v1363
    %v1752 = vpack.c.b16 %v1368, %v1364
    %v1753 = vpack.c.b16 %v1369, %v1365
    %v1754 = vpack.c.b16 %v1374, %v1370
    %v1755 = vpack.c.b16 %v1375, %v1371
    %v1756 = vpack.c.b16 %v1376, %v1372
    %v1757 = vpack.c.b16 %v1377, %v1373
    %v1758 = vpack.c.b16 %v1382, %v1378
    %v1759 = vpack.c.b16 %v1383, %v1379
    %v1760 = vpack.c.b16 %v1384, %v1380
    %v1761 = vpack.c.b16 %v1385, %v1381
    %v1762 = vpack.c.b16 %v1390, %v1386
    %v1763 = vpack.c.b16 %v1391, %v1387
    %v1764 = vpack.c.b16 %v1392, %v1388
    %v1765 = vpack.c.b16 %v1393, %v1389
    %v1766 = vpack.c.b16 %v1398, %v1394
    %v1767 = vpack.c.b16 %v1399, %v1395
    %v1768 = vpack.c.b16 %v1400, %v1396
    %v1769 = vpack.c.b16 %v1401, %v1397
    %v1770 = vpack.c.b16 %v1406, %v1402
    %v1771 = vpack.c.b16 %v1407, %v1403
    %v1772 = vpack.c.b16 %v1408, %v1404
    %v1773 = vpack.c.b16 %v1409, %v1405
    %v1774 = vpack.c.b16 %v1414, %v1410
    %v1775 = vpack.c.b16 %v1415, %v1411
    %v1776 = vpack.c.b16 %v1416, %v1412
    %v1777 = vpack.c.b16 %v1417, %v1413
    %v1778 = vpack.c.b16 %v1422, %v1418
    %v1779 = vpack.c.b16 %v1423, %v1419
    %v1780 = vpack.c.b16 %v1424, %v1420
    %v1781 = vpack.c.b16 %v1425, %v1421
    %v1782 = vpack.c.b16 %v1430, %v1426
    %v1783 = vpack.c.b16 %v1431, %v1427
    %v1784 = vpack.c.b16 %v1432, %v1428
    %v1785 = vpack.c.b16 %v1433, %v1429
    %v1786 = vpack.c.b16 %v1438, %v1434
    %v1787 = vpack.c.b16 %v1439, %v1435
    %v1788 = vpack.c.b16 %v1440, %v1436
    %v1789 = vpack.c.b16 %v1441, %v1437
    %v1790 = vpack.c.b16 %v1446, %v1442
    %v1791 = vpack.c.b16 %v1447, %v1443
    %v1792 = vpack.c.b16 %v1448, %v1444
    %v1793 = vpack.c.b16 %v1449, %v1445
    %v1794 = vpack.c.b16 %v1454, %v1450
    %v1795 = vpack.c.b16 %v1455, %v1451
    %v1796 = vpack.c.b16 %v1456, %v1452
    %v1797 = vpack.c.b16 %v1457, %v1453
    %v1798 = vpack.c.b16 %v1462, %v1458
    %v1799 = vpack.c.b16 %v1463, %v1459
    %v1800 = vpack.c.b16 %v1464, %v1460
    %v1801 = vpack.c.b16 %v1465, %v1461
    %v1802 = vpack.c.b16 %v1470, %v1466
    %v1803 = vpack.c.b16 %v1471, %v1467
    %v1804 = vpack.c.b16 %v1472, %v1468
    %v1805 = vpack.c.b16 %v1473, %v1469
    %v1806 = vpack.c.b16 %v1478, %v1474
    %v1807 = vpack.c.b16 %v1479, %v1475
    %v1808 = vpack.c.b16 %v1480, %v1476
    %v1809 = vpack.c.b16 %v1481, %v1477
    %v1810 = vpack.c.b16 %v1486, %v1482
    %v1811 = vpack.c.b16 %v1487, %v1483
    %v1812 = vpack.c.b16 %v1488, %v1484
    %v1813 = vpack.c.b16 %v1489, %v1485
    %v1814 = vpack.c.b16 %v1494, %v1490
    %v1815 = vpack.c.b16 %v1495, %v1491
    %v1816 = vpack.c.b16 %v1496, %v1492
    %v1817 = vpack.c.b16 %v1497, %v1493
    %v1818 = vpack.c.b16 %v1502, %v1498
    %v1819 = vpack.c.b16 %v1503, %v1499
    %v1820 = vpack.c.b16 %v1504, %v1500
    %v1821 = vpack.c.b16 %v1505, %v1501
    %v1822 = vpack.c.b16 %v1510, %v1506
    %v1823 = vpack.c.b16 %v1511, %v1507
    %v1824 = vpack.c.b16 %v1512, %v1508
    %v1825 = vpack.c.b16 %v1513, %v1509
    %v1826 = vpack.c.b16 %v1518, %v1514
    %v1827 = vpack.c.b16 %v1519, %v1515
    %v1828 = vpack.c.b16 %v1520, %v1516
    %v1829 = vpack.c.b16 %v1521, %v1517
    %v1830 = vpack.c.b16 %v1526, %v1522
    %v1831 = vpack.c.b16 %v1527, %v1523
    %v1832 = vpack.c.b16 %v1528, %v1524
    %v1833 = vpack.c.b16 %v1529, %v1525
    %v1834 = vpack.c.b16 %v1534, %v1530
    %v1835 = vpack.c.b16 %v1535, %v1531
    %v1836 = vpack.c.b16 %v1536, %v1532
    %v1837 = vpack.c.b16 %v1537, %v1533
    %v1838 = vpack.c.b16 %v1542, %v1538
    %v1839 = vpack.c.b16 %v1543, %v1539
    %v1840 = vpack.c.b16 %v1544, %v1540
    %v1841 = vpack.c.b16 %v1545, %v1541
    %v1842 = vpack.c.b16 %v1550, %v1546
    %v1843 = vpack.c.b16 %v1551, %v1547
    %v1844 = vpack.c.b16 %v1552, %v1548
    %v1845 = vpack.c.b16 %v1553, %v1549
    %v1846 = vpack.c.b16 %v1558, %v1554
    %v1847 = vpack.c.b16 %v1559, %v1555
    %v1848 = vpack.c.b16 %v1560, %v1556
    %v1849 = vpack.c.b16 %v1561, %v1557
    %v1850 = vpack.c.b16 %v1566, %v1562
    %v1851 = vpack.c.b16 %v1567, %v1563
    %v1852 = vpack.c.b16 %v1568, %v1564
    %v1853 = vpack.c.b16 %v1569, %v1565
    %v1854 = vpack.c.b16 %v1574, %v1570
    %v1855 = vpack.c.b16 %v1575, %v1571
    %v1856 = vpack.c.b16 %v1576, %v1572
    %v1857 = vpack.c.b16 %v1577, %v1573
    %v1858 = vpack.c.b16 %v1582, %v1578
    %v1859 = vpack.c.b16 %v1583, %v1579
    %v1860 = vpack.c.b16 %v1584, %v1580
    %v1861 = vpack.c.b16 %v1585, %v1581
    %v1862 = vpack.c.b16 %v1590, %v1586
    %v1863 = vpack.c.b16 %v1591, %v1587
    %v1864 = vpack.c.b16 %v1592, %v1588
    %v1865 = vpack.c.b16 %v1593, %v1589
    %v1866 = vpack.c.b16 %v1598, %v1594
    %v1867 = vpack.c.b16 %v1599, %v1595
    %v1868 = vpack.c.b16 %v1600, %v1596
    %v1869 = vpack.c.b16 %v1601, %v1597
    %v1870 = vpack.c.b16 %v1606, %v1602
    %v1871 = vpack.c.b16 %v1607, %v1603
    %v1872 = vpack.c.b16 %v1608, %v1604
    %v1873 = vpack.c.b16 %v1609, %v1605
    %v1874 = vpack.c.b16 %v1614, %v1610
    %v1875 = vpack.c.b16 %v1615, %v1611
    %v1876 = vpack.c.b16 %v1616, %v1612
    %v1877 = vpack.c.b16 %v1617, %v1613
    %v1878 = vpack.c.b16 %v1622, %v1618
    %v1879 = vpack.c.b16 %v1623, %v1619
    %v1880 = vpack.c.b16 %v1624, %v1620
    %v1881 = vpack.c.b16 %v1625, %v1621
    %2138 = vmatpush.bf16.msra.mxu0 %v1654
    %2139 = vmatpush.bf16.msra.mxu0 %v1650
    %2140 = vmatpush.bf16.msra.mxu0 %v1646
    %2141 = vmatpush.bf16.msra.mxu0 %v1642
    %2142 = vmatpush.bf16.msra.mxu0 %v1638
    %2143 = vmatpush.bf16.msra.mxu0 %v1634
    %2144 = vmatpush.bf16.msra.mxu0 %v1630
    %2145 = vmatpush.bf16.msra.mxu0 %v1626
    %2146 = vmatmul.bf16.gmra.mxu0 %v584
    %v2147 = vpop.f32.mrf.mxu0
    %v2148 = vadd.f32 %v850, %v2147
    %v2149 = vpop.f32.mrf.mxu0
    %2150 = vdwg.mxu0
    %2151 = vmatpush.bf16.msra.mxu0 %v1686
    %2152 = vmatpush.bf16.msra.mxu0 %v1682
    %2153 = vmatpush.bf16.msra.mxu0 %v1678
    %2154 = vmatpush.bf16.msra.mxu0 %v1674
    %2155 = vmatpush.bf16.msra.mxu0 %v1670
    %2156 = vmatpush.bf16.msra.mxu0 %v1666
    %2157 = vmatpush.bf16.msra.mxu0 %v1662
    %2158 = vmatpush.bf16.msra.mxu0 %v1658
    %2159 = vmatmul.bf16.gmra.mxu0 %v585
    %v2160 = vpop.f32.mrf.mxu0
    %v2161 = vadd.f32 %v2148, %v2160
    %v2162 = vpop.f32.mrf.mxu0
    %2163 = vdwg.mxu0
    %2164 = vmatpush.bf16.msra.mxu0 %v1718
    %2165 = vmatpush.bf16.msra.mxu0 %v1714
    %2166 = vmatpush.bf16.msra.mxu0 %v1710
    %2167 = vmatpush.bf16.msra.mxu0 %v1706
    %2168 = vmatpush.bf16.msra.mxu0 %v1702
    %2169 = vmatpush.bf16.msra.mxu0 %v1698
    %2170 = vmatpush.bf16.msra.mxu0 %v1694
    %2171 = vmatpush.bf16.msra.mxu0 %v1690
    %2172 = vmatmul.bf16.gmra.mxu0 %v586
    %v2173 = vpop.f32.mrf.mxu0
    %v2174 = vadd.f32 %v2161, %v2173
    %v2175 = vpop.f32.mrf.mxu0
    %2176 = vdwg.mxu0
    %2177 = vmatpush.bf16.msra.mxu0 %v1750
    %2178 = vmatpush.bf16.msra.mxu0 %v1746
    %2179 = vmatpush.bf16.msra.mxu0 %v1742
    %2180 = vmatpush.bf16.msra.mxu0 %v1738
    %2181 = vmatpush.bf16.msra.mxu0 %v1734
    %2182 = vmatpush.bf16.msra.mxu0 %v1730
    %2183 = vmatpush.bf16.msra.mxu0 %v1726
    %2184 = vmatpush.bf16.msra.mxu0 %v1722
    %2185 = vmatmul.bf16.gmra.mxu0 %v587
    %v2186 = vpop.f32.mrf.mxu0
    %v2187 = vadd.f32 %v2174, %v2186
    %v2188 = vpop.f32.mrf.mxu0
    %2189 = vdwg.mxu0
    %2190 = vmatpush.bf16.msra.mxu0 %v1782
    %2191 = vmatpush.bf16.msra.mxu0 %v1778
    %2192 = vmatpush.bf16.msra.mxu0 %v1774
    %2193 = vmatpush.bf16.msra.mxu0 %v1770
    %2194 = vmatpush.bf16.msra.mxu0 %v1766
    %2195 = vmatpush.bf16.msra.mxu0 %v1762
    %2196 = vmatpush.bf16.msra.mxu0 %v1758
    %2197 = vmatpush.bf16.msra.mxu0 %v1754
    %2198 = vmatmul.bf16.gmra.mxu0 %v588
    %v2199 = vpop.f32.mrf.mxu0
    %v2200 = vadd.f32 %v2187, %v2199
    %v2201 = vpop.f32.mrf.mxu0
    %2202 = vdwg.mxu0
    %2203 = vmatpush.bf16.msra.mxu0 %v1814
    %2204 = vmatpush.bf16.msra.mxu0 %v1810
    %2205 = vmatpush.bf16.msra.mxu0 %v1806
    %2206 = vmatpush.bf16.msra.mxu0 %v1802
    %2207 = vmatpush.bf16.msra.mxu0 %v1798
    %2208 = vmatpush.bf16.msra.mxu0 %v1794
    %2209 = vmatpush.bf16.msra.mxu0 %v1790
    %2210 = vmatpush.bf16.msra.mxu0 %v1786
    %2211 = vmatmul.bf16.gmra.mxu0 %v589
    %v2212 = vpop.f32.mrf.mxu0
    %v2213 = vadd.f32 %v2200, %v2212
    %v2214 = vpop.f32.mrf.mxu0
    %2215 = vdwg.mxu0
    %2216 = vmatpush.bf16.msra.mxu0 %v1846
    %2217 = vmatpush.bf16.msra.mxu0 %v1842
    %2218 = vmatpush.bf16.msra.mxu0 %v1838
    %2219 = vmatpush.bf16.msra.mxu0 %v1834
    %2220 = vmatpush.bf16.msra.mxu0 %v1830
    %2221 = vmatpush.bf16.msra.mxu0 %v1826
    %2222 = vmatpush.bf16.msra.mxu0 %v1822
    %2223 = vmatpush.bf16.msra.mxu0 %v1818
    %2224 = vmatmul.bf16.gmra.mxu0 %v590
    %v2225 = vpop.f32.mrf.mxu0
    %v2226 = vadd.f32 %v2213, %v2225
    %v2227 = vpop.f32.mrf.mxu0
    %2228 = vdwg.mxu0
    %2229 = vmatpush.bf16.msra.mxu0 %v1878
    %2230 = vmatpush.bf16.msra.mxu0 %v1874
    %2231 = vmatpush.bf16.msra.mxu0 %v1870
    %2232 = vmatpush.bf16.msra.mxu0 %v1866
    %2233 = vmatpush.bf16.msra.mxu0 %v1862
    %2234 = vmatpush.bf16.msra.mxu0 %v1858
    %2235 = vmatpush.bf16.msra.mxu0 %v1854
    %2236 = vmatpush.bf16.msra.mxu0 %v1850
    %2237 = vmatmul.bf16.gmra.mxu0 %v591
    %v2238 = vpop.f32.mrf.mxu0
    %v2239 = vadd.f32 %v2226, %v2238
    %v2240 = vpop.f32.mrf.mxu0
    %2241 = vdwg.mxu0
    %2242 = vmatpush.bf16.msra.mxu0 %v1655
    %2243 = vmatpush.bf16.msra.mxu0 %v1651
    %2244 = vmatpush.bf16.msra.mxu0 %v1647
    %2245 = vmatpush.bf16.msra.mxu0 %v1643
    %2246 = vmatpush.bf16.msra.mxu0 %v1639
    %2247 = vmatpush.bf16.msra.mxu0 %v1635
    %2248 = vmatpush.bf16.msra.mxu0 %v1631
    %2249 = vmatpush.bf16.msra.mxu0 %v1627
    %2250 = vmatmul.bf16.gmra.mxu0 %v584
    %v2251 = vpop.f32.mrf.mxu0
    %v2252 = vadd.f32 %v851, %v2251
    %v2253 = vpop.f32.mrf.mxu0
    %2254 = vdwg.mxu0
    %2255 = vmatpush.bf16.msra.mxu0 %v1687
    %2256 = vmatpush.bf16.msra.mxu0 %v1683
    %2257 = vmatpush.bf16.msra.mxu0 %v1679
    %2258 = vmatpush.bf16.msra.mxu0 %v1675
    %2259 = vmatpush.bf16.msra.mxu0 %v1671
    %2260 = vmatpush.bf16.msra.mxu0 %v1667
    %2261 = vmatpush.bf16.msra.mxu0 %v1663
    %2262 = vmatpush.bf16.msra.mxu0 %v1659
    %2263 = vmatmul.bf16.gmra.mxu0 %v585
    %v2264 = vpop.f32.mrf.mxu0
    %v2265 = vadd.f32 %v2252, %v2264
    %v2266 = vpop.f32.mrf.mxu0
    %2267 = vdwg.mxu0
    %2268 = vmatpush.bf16.msra.mxu0 %v1719
    %2269 = vmatpush.bf16.msra.mxu0 %v1715
    %2270 = vmatpush.bf16.msra.mxu0 %v1711
    %2271 = vmatpush.bf16.msra.mxu0 %v1707
    %2272 = vmatpush.bf16.msra.mxu0 %v1703
    %2273 = vmatpush.bf16.msra.mxu0 %v1699
    %2274 = vmatpush.bf16.msra.mxu0 %v1695
    %2275 = vmatpush.bf16.msra.mxu0 %v1691
    %2276 = vmatmul.bf16.gmra.mxu0 %v586
    %v2277 = vpop.f32.mrf.mxu0
    %v2278 = vadd.f32 %v2265, %v2277
    %v2279 = vpop.f32.mrf.mxu0
    %2280 = vdwg.mxu0
    %2281 = vmatpush.bf16.msra.mxu0 %v1751
    %2282 = vmatpush.bf16.msra.mxu0 %v1747
    %2283 = vmatpush.bf16.msra.mxu0 %v1743
    %2284 = vmatpush.bf16.msra.mxu0 %v1739
    %2285 = vmatpush.bf16.msra.mxu0 %v1735
    %2286 = vmatpush.bf16.msra.mxu0 %v1731
    %2287 = vmatpush.bf16.msra.mxu0 %v1727
    %2288 = vmatpush.bf16.msra.mxu0 %v1723
    %2289 = vmatmul.bf16.gmra.mxu0 %v587
    %v2290 = vpop.f32.mrf.mxu0
    %v2291 = vadd.f32 %v2278, %v2290
    %v2292 = vpop.f32.mrf.mxu0
    %2293 = vdwg.mxu0
    %2294 = vmatpush.bf16.msra.mxu0 %v1783
    %2295 = vmatpush.bf16.msra.mxu0 %v1779
    %2296 = vmatpush.bf16.msra.mxu0 %v1775
    %2297 = vmatpush.bf16.msra.mxu0 %v1771
    %2298 = vmatpush.bf16.msra.mxu0 %v1767
    %2299 = vmatpush.bf16.msra.mxu0 %v1763
    %2300 = vmatpush.bf16.msra.mxu0 %v1759
    %2301 = vmatpush.bf16.msra.mxu0 %v1755
    %2302 = vmatmul.bf16.gmra.mxu0 %v588
    %v2303 = vpop.f32.mrf.mxu0
    %v2304 = vadd.f32 %v2291, %v2303
    %v2305 = vpop.f32.mrf.mxu0
    %2306 = vdwg.mxu0
    %2307 = vmatpush.bf16.msra.mxu0 %v1815
    %2308 = vmatpush.bf16.msra.mxu0 %v1811
    %2309 = vmatpush.bf16.msra.mxu0 %v1807
    %2310 = vmatpush.bf16.msra.mxu0 %v1803
    %2311 = vmatpush.bf16.msra.mxu0 %v1799
    %2312 = vmatpush.bf16.msra.mxu0 %v1795
    %2313 = vmatpush.bf16.msra.mxu0 %v1791
    %2314 = vmatpush.bf16.msra.mxu0 %v1787
    %2315 = vmatmul.bf16.gmra.mxu0 %v589
    %v2316 = vpop.f32.mrf.mxu0
    %v2317 = vadd.f32 %v2304, %v2316
    %v2318 = vpop.f32.mrf.mxu0
    %2319 = vdwg.mxu0
    %2320 = vmatpush.bf16.msra.mxu0 %v1847
    %2321 = vmatpush.bf16.msra.mxu0 %v1843
    %2322 = vmatpush.bf16.msra.mxu0 %v1839
    %2323 = vmatpush.bf16.msra.mxu0 %v1835
    %2324 = vmatpush.bf16.msra.mxu0 %v1831
    %2325 = vmatpush.bf16.msra.mxu0 %v1827
    %2326 = vmatpush.bf16.msra.mxu0 %v1823
    %2327 = vmatpush.bf16.msra.mxu0 %v1819
    %2328 = vmatmul.bf16.gmra.mxu0 %v590
    %v2329 = vpop.f32.mrf.mxu0
    %v2330 = vadd.f32 %v2317, %v2329
    %v2331 = vpop.f32.mrf.mxu0
    %2332 = vdwg.mxu0
    %2333 = vmatpush.bf16.msra.mxu0 %v1879
    %2334 = vmatpush.bf16.msra.mxu0 %v1875
    %2335 = vmatpush.bf16.msra.mxu0 %v1871
    %2336 = vmatpush.bf16.msra.mxu0 %v1867
    %2337 = vmatpush.bf16.msra.mxu0 %v1863
    %2338 = vmatpush.bf16.msra.mxu0 %v1859
    %2339 = vmatpush.bf16.msra.mxu0 %v1855
    %2340 = vmatpush.bf16.msra.mxu0 %v1851
    %2341 = vmatmul.bf16.gmra.mxu0 %v591
    %v2342 = vpop.f32.mrf.mxu0
    %v2343 = vadd.f32 %v2330, %v2342
    %v2344 = vpop.f32.mrf.mxu0
    %2345 = vdwg.mxu0
    %2346 = vmatpush.bf16.msra.mxu0 %v1656
    %2347 = vmatpush.bf16.msra.mxu0 %v1652
    %2348 = vmatpush.bf16.msra.mxu0 %v1648
    %2349 = vmatpush.bf16.msra.mxu0 %v1644
    %2350 = vmatpush.bf16.msra.mxu0 %v1640
    %2351 = vmatpush.bf16.msra.mxu0 %v1636
    %2352 = vmatpush.bf16.msra.mxu0 %v1632
    %2353 = vmatpush.bf16.msra.mxu0 %v1628
    %2354 = vmatmul.bf16.gmra.mxu0 %v584
    %v2355 = vpop.f32.mrf.mxu0
    %v2356 = vadd.f32 %v852, %v2355
    %v2357 = vpop.f32.mrf.mxu0
    %2358 = vdwg.mxu0
    %2359 = vmatpush.bf16.msra.mxu0 %v1688
    %2360 = vmatpush.bf16.msra.mxu0 %v1684
    %2361 = vmatpush.bf16.msra.mxu0 %v1680
    %2362 = vmatpush.bf16.msra.mxu0 %v1676
    %2363 = vmatpush.bf16.msra.mxu0 %v1672
    %2364 = vmatpush.bf16.msra.mxu0 %v1668
    %2365 = vmatpush.bf16.msra.mxu0 %v1664
    %2366 = vmatpush.bf16.msra.mxu0 %v1660
    %2367 = vmatmul.bf16.gmra.mxu0 %v585
    %v2368 = vpop.f32.mrf.mxu0
    %v2369 = vadd.f32 %v2356, %v2368
    %v2370 = vpop.f32.mrf.mxu0
    %2371 = vdwg.mxu0
    %2372 = vmatpush.bf16.msra.mxu0 %v1720
    %2373 = vmatpush.bf16.msra.mxu0 %v1716
    %2374 = vmatpush.bf16.msra.mxu0 %v1712
    %2375 = vmatpush.bf16.msra.mxu0 %v1708
    %2376 = vmatpush.bf16.msra.mxu0 %v1704
    %2377 = vmatpush.bf16.msra.mxu0 %v1700
    %2378 = vmatpush.bf16.msra.mxu0 %v1696
    %2379 = vmatpush.bf16.msra.mxu0 %v1692
    %2380 = vmatmul.bf16.gmra.mxu0 %v586
    %v2381 = vpop.f32.mrf.mxu0
    %v2382 = vadd.f32 %v2369, %v2381
    %v2383 = vpop.f32.mrf.mxu0
    %2384 = vdwg.mxu0
    %2385 = vmatpush.bf16.msra.mxu0 %v1752
    %2386 = vmatpush.bf16.msra.mxu0 %v1748
    %2387 = vmatpush.bf16.msra.mxu0 %v1744
    %2388 = vmatpush.bf16.msra.mxu0 %v1740
    %2389 = vmatpush.bf16.msra.mxu0 %v1736
    %2390 = vmatpush.bf16.msra.mxu0 %v1732
    %2391 = vmatpush.bf16.msra.mxu0 %v1728
    %2392 = vmatpush.bf16.msra.mxu0 %v1724
    %2393 = vmatmul.bf16.gmra.mxu0 %v587
    %v2394 = vpop.f32.mrf.mxu0
    %v2395 = vadd.f32 %v2382, %v2394
    %v2396 = vpop.f32.mrf.mxu0
    %2397 = vdwg.mxu0
    %2398 = vmatpush.bf16.msra.mxu0 %v1784
    %2399 = vmatpush.bf16.msra.mxu0 %v1780
    %2400 = vmatpush.bf16.msra.mxu0 %v1776
    %2401 = vmatpush.bf16.msra.mxu0 %v1772
    %2402 = vmatpush.bf16.msra.mxu0 %v1768
    %2403 = vmatpush.bf16.msra.mxu0 %v1764
    %2404 = vmatpush.bf16.msra.mxu0 %v1760
    %2405 = vmatpush.bf16.msra.mxu0 %v1756
    %2406 = vmatmul.bf16.gmra.mxu0 %v588
    %v2407 = vpop.f32.mrf.mxu0
    %v2408 = vadd.f32 %v2395, %v2407
    %v2409 = vpop.f32.mrf.mxu0
    %2410 = vdwg.mxu0
    %2411 = vmatpush.bf16.msra.mxu0 %v1816
    %2412 = vmatpush.bf16.msra.mxu0 %v1812
    %2413 = vmatpush.bf16.msra.mxu0 %v1808
    %2414 = vmatpush.bf16.msra.mxu0 %v1804
    %2415 = vmatpush.bf16.msra.mxu0 %v1800
    %2416 = vmatpush.bf16.msra.mxu0 %v1796
    %2417 = vmatpush.bf16.msra.mxu0 %v1792
    %2418 = vmatpush.bf16.msra.mxu0 %v1788
    %2419 = vmatmul.bf16.gmra.mxu0 %v589
    %v2420 = vpop.f32.mrf.mxu0
    %v2421 = vadd.f32 %v2408, %v2420
    %v2422 = vpop.f32.mrf.mxu0
    %2423 = vdwg.mxu0
    %2424 = vmatpush.bf16.msra.mxu0 %v1848
    %2425 = vmatpush.bf16.msra.mxu0 %v1844
    %2426 = vmatpush.bf16.msra.mxu0 %v1840
    %2427 = vmatpush.bf16.msra.mxu0 %v1836
    %2428 = vmatpush.bf16.msra.mxu0 %v1832
    %2429 = vmatpush.bf16.msra.mxu0 %v1828
    %2430 = vmatpush.bf16.msra.mxu0 %v1824
    %2431 = vmatpush.bf16.msra.mxu0 %v1820
    %2432 = vmatmul.bf16.gmra.mxu0 %v590
    %v2433 = vpop.f32.mrf.mxu0
    %v2434 = vadd.f32 %v2421, %v2433
    %v2435 = vpop.f32.mrf.mxu0
    %2436 = vdwg.mxu0
    %2437 = vmatpush.bf16.msra.mxu0 %v1880
    %2438 = vmatpush.bf16.msra.mxu0 %v1876
    %2439 = vmatpush.bf16.msra.mxu0 %v1872
    %2440 = vmatpush.bf16.msra.mxu0 %v1868
    %2441 = vmatpush.bf16.msra.mxu0 %v1864
    %2442 = vmatpush.bf16.msra.mxu0 %v1860
    %2443 = vmatpush.bf16.msra.mxu0 %v1856
    %2444 = vmatpush.bf16.msra.mxu0 %v1852
    %2445 = vmatmul.bf16.gmra.mxu0 %v591
    %v2446 = vpop.f32.mrf.mxu0
    %v2447 = vadd.f32 %v2434, %v2446
    %v2448 = vpop.f32.mrf.mxu0
    %2449 = vdwg.mxu0
    %2450 = vmatpush.bf16.msra.mxu0 %v1657
    %2451 = vmatpush.bf16.msra.mxu0 %v1653
    %2452 = vmatpush.bf16.msra.mxu0 %v1649
    %2453 = vmatpush.bf16.msra.mxu0 %v1645
    %2454 = vmatpush.bf16.msra.mxu0 %v1641
    %2455 = vmatpush.bf16.msra.mxu0 %v1637
    %2456 = vmatpush.bf16.msra.mxu0 %v1633
    %2457 = vmatpush.bf16.msra.mxu0 %v1629
    %2458 = vmatmul.bf16.gmra.mxu0 %v584
    %v2459 = vpop.f32.mrf.mxu0
    %v2460 = vadd.f32 %v853, %v2459
    %v2461 = vpop.f32.mrf.mxu0
    %2462 = vdwg.mxu0
    %2463 = vmatpush.bf16.msra.mxu0 %v1689
    %2464 = vmatpush.bf16.msra.mxu0 %v1685
    %2465 = vmatpush.bf16.msra.mxu0 %v1681
    %2466 = vmatpush.bf16.msra.mxu0 %v1677
    %2467 = vmatpush.bf16.msra.mxu0 %v1673
    %2468 = vmatpush.bf16.msra.mxu0 %v1669
    %2469 = vmatpush.bf16.msra.mxu0 %v1665
    %2470 = vmatpush.bf16.msra.mxu0 %v1661
    %2471 = vmatmul.bf16.gmra.mxu0 %v585
    %v2472 = vpop.f32.mrf.mxu0
    %v2473 = vadd.f32 %v2460, %v2472
    %v2474 = vpop.f32.mrf.mxu0
    %2475 = vdwg.mxu0
    %2476 = vmatpush.bf16.msra.mxu0 %v1721
    %2477 = vmatpush.bf16.msra.mxu0 %v1717
    %2478 = vmatpush.bf16.msra.mxu0 %v1713
    %2479 = vmatpush.bf16.msra.mxu0 %v1709
    %2480 = vmatpush.bf16.msra.mxu0 %v1705
    %2481 = vmatpush.bf16.msra.mxu0 %v1701
    %2482 = vmatpush.bf16.msra.mxu0 %v1697
    %2483 = vmatpush.bf16.msra.mxu0 %v1693
    %2484 = vmatmul.bf16.gmra.mxu0 %v586
    %v2485 = vpop.f32.mrf.mxu0
    %v2486 = vadd.f32 %v2473, %v2485
    %v2487 = vpop.f32.mrf.mxu0
    %2488 = vdwg.mxu0
    %2489 = vmatpush.bf16.msra.mxu0 %v1753
    %2490 = vmatpush.bf16.msra.mxu0 %v1749
    %2491 = vmatpush.bf16.msra.mxu0 %v1745
    %2492 = vmatpush.bf16.msra.mxu0 %v1741
    %2493 = vmatpush.bf16.msra.mxu0 %v1737
    %2494 = vmatpush.bf16.msra.mxu0 %v1733
    %2495 = vmatpush.bf16.msra.mxu0 %v1729
    %2496 = vmatpush.bf16.msra.mxu0 %v1725
    %2497 = vmatmul.bf16.gmra.mxu0 %v587
    %v2498 = vpop.f32.mrf.mxu0
    %v2499 = vadd.f32 %v2486, %v2498
    %v2500 = vpop.f32.mrf.mxu0
    %2501 = vdwg.mxu0
    %2502 = vmatpush.bf16.msra.mxu0 %v1785
    %2503 = vmatpush.bf16.msra.mxu0 %v1781
    %2504 = vmatpush.bf16.msra.mxu0 %v1777
    %2505 = vmatpush.bf16.msra.mxu0 %v1773
    %2506 = vmatpush.bf16.msra.mxu0 %v1769
    %2507 = vmatpush.bf16.msra.mxu0 %v1765
    %2508 = vmatpush.bf16.msra.mxu0 %v1761
    %2509 = vmatpush.bf16.msra.mxu0 %v1757
    %2510 = vmatmul.bf16.gmra.mxu0 %v588
    %v2511 = vpop.f32.mrf.mxu0
    %v2512 = vadd.f32 %v2499, %v2511
    %v2513 = vpop.f32.mrf.mxu0
    %2514 = vdwg.mxu0
    %2515 = vmatpush.bf16.msra.mxu0 %v1817
    %2516 = vmatpush.bf16.msra.mxu0 %v1813
    %2517 = vmatpush.bf16.msra.mxu0 %v1809
    %2518 = vmatpush.bf16.msra.mxu0 %v1805
    %2519 = vmatpush.bf16.msra.mxu0 %v1801
    %2520 = vmatpush.bf16.msra.mxu0 %v1797
    %2521 = vmatpush.bf16.msra.mxu0 %v1793
    %2522 = vmatpush.bf16.msra.mxu0 %v1789
    %2523 = vmatmul.bf16.gmra.mxu0 %v589
    %v2524 = vpop.f32.mrf.mxu0
    %v2525 = vadd.f32 %v2512, %v2524
    %v2526 = vpop.f32.mrf.mxu0
    %2527 = vdwg.mxu0
    %2528 = vmatpush.bf16.msra.mxu0 %v1849
    %2529 = vmatpush.bf16.msra.mxu0 %v1845
    %2530 = vmatpush.bf16.msra.mxu0 %v1841
    %2531 = vmatpush.bf16.msra.mxu0 %v1837
    %2532 = vmatpush.bf16.msra.mxu0 %v1833
    %2533 = vmatpush.bf16.msra.mxu0 %v1829
    %2534 = vmatpush.bf16.msra.mxu0 %v1825
    %2535 = vmatpush.bf16.msra.mxu0 %v1821
    %2536 = vmatmul.bf16.gmra.mxu0 %v590
    %v2537 = vpop.f32.mrf.mxu0
    %v2538 = vadd.f32 %v2525, %v2537
    %v2539 = vpop.f32.mrf.mxu0
    %2540 = vdwg.mxu0
    %2541 = vmatpush.bf16.msra.mxu0 %v1881
    %2542 = vmatpush.bf16.msra.mxu0 %v1877
    %2543 = vmatpush.bf16.msra.mxu0 %v1873
    %2544 = vmatpush.bf16.msra.mxu0 %v1869
    %2545 = vmatpush.bf16.msra.mxu0 %v1865
    %2546 = vmatpush.bf16.msra.mxu0 %v1861
    %2547 = vmatpush.bf16.msra.mxu0 %v1857
    %2548 = vmatpush.bf16.msra.mxu0 %v1853
    %2549 = vmatmul.bf16.gmra.mxu0 %v591
    %v2550 = vpop.f32.mrf.mxu0
    %v2551 = vadd.f32 %v2538, %v2550
    %v2552 = vpop.f32.mrf.mxu0
    %2553 = vdwg.mxu0
    %v2554 = vmul.f32 %v2239, 0.2
    %v2555 = vmul.f32 %v2343, 0.2
    %v2556 = vmul.f32 %v2447, 0.2
    %v2557 = vmul.f32 %v2551, 0.2
    %v2558 = vmax.f32 %v2239, %v2554
    %v2559 = vmax.f32 %v2343, %v2555
    %v2560 = vmax.f32 %v2447, %v2556
    %v2561 = vmax.f32 %v2551, %v2557
    %s2562 = sxor.u32 %s113, 320440878
    %v2563 = vmul.u32 %v452, 512
    %v2564 = vadd.s32 %v2563, %v454
    %v2565 = vadd.s32 %v2563, %v455
    %v2566 = vadd.s32 %v2563, %v456
    %v2567 = vadd.s32 %v2563, %v457
    %v2568 = vstv %s2562
    %v2569 = vadd.s32 %v2564, %v2568
    %v2570 = vadd.s32 %v2565, %v2568
    %v2571 = vadd.s32 %v2566, %v2568
    %v2572 = vadd.s32 %v2567, %v2568
    %v2573 = vmul.u32 %v2569, 2654435769
    %v2574 = vmul.u32 %v2570, 2654435769
    %v2575 = vmul.u32 %v2571, 2654435769
    %v2576 = vmul.u32 %v2572, 2654435769
    %v2577 = vshrl.u32 %v2573, 16
    %v2578 = vshrl.u32 %v2574, 16
    %v2579 = vshrl.u32 %v2575, 16
    %v2580 = vshrl.u32 %v2576, 16
    %v2581 = vxor.u32 %v2573, %v2577
    %v2582 = vxor.u32 %v2574, %v2578
    %v2583 = vxor.u32 %v2575, %v2579
    %v2584 = vxor.u32 %v2576, %v2580
    %v2585 = vmul.u32 %v2581, 2146121005
    %v2586 = vmul.u32 %v2582, 2146121005
    %v2587 = vmul.u32 %v2583, 2146121005
    %v2588 = vmul.u32 %v2584, 2146121005
    %v2589 = vshrl.u32 %v2585, 15
    %v2590 = vshrl.u32 %v2586, 15
    %v2591 = vshrl.u32 %v2587, 15
    %v2592 = vshrl.u32 %v2588, 15
    %v2593 = vxor.u32 %v2585, %v2589
    %v2594 = vxor.u32 %v2586, %v2590
    %v2595 = vxor.u32 %v2587, %v2591
    %v2596 = vxor.u32 %v2588, %v2592
    %v2597 = vmul.u32 %v2593, 2221713035
    %v2598 = vmul.u32 %v2594, 2221713035
    %v2599 = vmul.u32 %v2595, 2221713035
    %v2600 = vmul.u32 %v2596, 2221713035
    %v2601 = vshrl.u32 %v2597, 16
    %v2602 = vshrl.u32 %v2598, 16
    %v2603 = vshrl.u32 %v2599, 16
    %v2604 = vshrl.u32 %v2600, 16
    %v2605 = vxor.u32 %v2597, %v2601
    %v2606 = vxor.u32 %v2598, %v2602
    %v2607 = vxor.u32 %v2599, %v2603
    %v2608 = vxor.u32 %v2600, %v2604
    %v2609 = vadd.s32 %v2605, 2147483648
    %vm2611 = vcmp.lt.s32.totalorder %v2609, 858993459
    %v2612 = vadd.s32 %v2606, 2147483648
    %vm2614 = vcmp.lt.s32.totalorder %v2612, 858993459
    %v2615 = vadd.s32 %v2607, 2147483648
    %vm2617 = vcmp.lt.s32.totalorder %v2615, 858993459
    %v2618 = vadd.s32 %v2608, 2147483648
    %vm2620 = vcmp.lt.s32.totalorder %v2618, 858993459
    %v2621 = vsel %vm2611, %v2558, 0.0
    %v2622 = vsel %vm2614, %v2559, 0.0
    %v2623 = vsel %vm2617, %v2560, 0.0
    %v2624 = vsel %vm2620, %v2561, 0.0
    %v2625 = vpack.c.bf16 %v2621, %v2621
    %v2626 = vpack.c.bf16 %v2622, %v2622
    %v2627 = vpack.c.bf16 %v2623, %v2623
    %v2628 = vpack.c.bf16 %v2624, %v2624
    %v2629 = vld [vmem:[#allocation12] sm:$0xff]
    %v2630 = vld [vmem:[#allocation12 + $0x8] sm:$0xff]
    %v2631 = vld [vmem:[#allocation12 + $0x10] sm:$0xff]
    %v2632 = vld [vmem:[#allocation12 + $0x18] sm:$0xff]
    %v2633 = vld [vmem:[#allocation12 + $0x20] sm:$0xff]
    %v2634 = vld [vmem:[#allocation12 + $0x28] sm:$0xff]
    %v2635 = vld [vmem:[#allocation12 + $0x30] sm:$0xff]
    %v2636 = vld [vmem:[#allocation12 + $0x38] sm:$0xff]
    %v2637 = vld [vmem:[#allocation12 + $0x40] sm:$0xff]
    %v2638 = vld [vmem:[#allocation12 + $0x48] sm:$0xff]
    %v2639 = vld [vmem:[#allocation12 + $0x50] sm:$0xff]
    %v2640 = vld [vmem:[#allocation12 + $0x58] sm:$0xff]
    %v2641 = vld [vmem:[#allocation12 + $0x60] sm:$0xff]
    %v2642 = vld [vmem:[#allocation12 + $0x68] sm:$0xff]
    %v2643 = vld [vmem:[#allocation12 + $0x70] sm:$0xff]
    %v2644 = vld [vmem:[#allocation12 + $0x78] sm:$0xff]
    %v2645 = vld [vmem:[#allocation12 + $0x80] sm:$0xff]
    %v2646 = vld [vmem:[#allocation12 + $0x88] sm:$0xff]
    %v2647 = vld [vmem:[#allocation12 + $0x90] sm:$0xff]
    %v2648 = vld [vmem:[#allocation12 + $0x98] sm:$0xff]
    %v2649 = vld [vmem:[#allocation12 + $0xa0] sm:$0xff]
    %v2650 = vld [vmem:[#allocation12 + $0xa8] sm:$0xff]
    %v2651 = vld [vmem:[#allocation12 + $0xb0] sm:$0xff]
    %v2652 = vld [vmem:[#allocation12 + $0xb8] sm:$0xff]
    %v2653 = vld [vmem:[#allocation12 + $0xc0] sm:$0xff]
    %v2654 = vld [vmem:[#allocation12 + $0xc8] sm:$0xff]
    %v2655 = vld [vmem:[#allocation12 + $0xd0] sm:$0xff]
    %v2656 = vld [vmem:[#allocation12 + $0xd8] sm:$0xff]
    %v2657 = vld [vmem:[#allocation12 + $0xe0] sm:$0xff]
    %v2658 = vld [vmem:[#allocation12 + $0xe8] sm:$0xff]
    %v2659 = vld [vmem:[#allocation12 + $0xf0] sm:$0xff]
    %v2660 = vld [vmem:[#allocation12 + $0xf8] sm:$0xff]
    %v2661 = vld [vmem:[#allocation12 + $0x100] sm:$0xff]
    %v2662 = vld [vmem:[#allocation12 + $0x108] sm:$0xff]
    %v2663 = vld [vmem:[#allocation12 + $0x110] sm:$0xff]
    %v2664 = vld [vmem:[#allocation12 + $0x118] sm:$0xff]
    %v2665 = vld [vmem:[#allocation12 + $0x120] sm:$0xff]
    %v2666 = vld [vmem:[#allocation12 + $0x128] sm:$0xff]
    %v2667 = vld [vmem:[#allocation12 + $0x130] sm:$0xff]
    %v2668 = vld [vmem:[#allocation12 + $0x138] sm:$0xff]
    %v2669 = vld [vmem:[#allocation12 + $0x140] sm:$0xff]
    %v2670 = vld [vmem:[#allocation12 + $0x148] sm:$0xff]
    %v2671 = vld [vmem:[#allocation12 + $0x150] sm:$0xff]
    %v2672 = vld [vmem:[#allocation12 + $0x158] sm:$0xff]
    %v2673 = vld [vmem:[#allocation12 + $0x160] sm:$0xff]
    %v2674 = vld [vmem:[#allocation12 + $0x168] sm:$0xff]
    %v2675 = vld [vmem:[#allocation12 + $0x170] sm:$0xff]
    %v2676 = vld [vmem:[#allocation12 + $0x178] sm:$0xff]
    %v2677 = vld [vmem:[#allocation12 + $0x180] sm:$0xff]
    %v2678 = vld [vmem:[#allocation12 + $0x188] sm:$0xff]
    %v2679 = vld [vmem:[#allocation12 + $0x190] sm:$0xff]
    %v2680 = vld [vmem:[#allocation12 + $0x198] sm:$0xff]
    %v2681 = vld [vmem:[#allocation12 + $0x1a0] sm:$0xff]
    %v2682 = vld [vmem:[#allocation12 + $0x1a8] sm:$0xff]
    %v2683 = vld [vmem:[#allocation12 + $0x1b0] sm:$0xff]
    %v2684 = vld [vmem:[#allocation12 + $0x1b8] sm:$0xff]
    %v2685 = vld [vmem:[#allocation12 + $0x1c0] sm:$0xff]
    %v2686 = vld [vmem:[#allocation12 + $0x1c8] sm:$0xff]
    %v2687 = vld [vmem:[#allocation12 + $0x1d0] sm:$0xff]
    %v2688 = vld [vmem:[#allocation12 + $0x1d8] sm:$0xff]
    %v2689 = vld [vmem:[#allocation12 + $0x1e0] sm:$0xff]
    %v2690 = vld [vmem:[#allocation12 + $0x1e8] sm:$0xff]
    %v2691 = vld [vmem:[#allocation12 + $0x1f0] sm:$0xff]
    %v2692 = vld [vmem:[#allocation12 + $0x1f8] sm:$0xff]
    %v2693 = vld [vmem:[%s7] sm:$0x3]
    %v2695 = vperm.slane %v2693, 0
    %v2696 = vperm.slane %v2693, 1
    %v2763 = vunpack.c.l.b16 %v2629
    %v2764 = vunpack.c.h.b16 %v2629
    %v2765 = vunpack.c.l.b16 %v2630
    %v2766 = vunpack.c.h.b16 %v2630
    %v2767 = vunpack.c.l.b16 %v2631
    %v2768 = vunpack.c.h.b16 %v2631
    %v2769 = vunpack.c.l.b16 %v2632
    %v2770 = vunpack.c.h.b16 %v2632
    %v2771 = vunpack.c.l.b16 %v2633
    %v2772 = vunpack.c.h.b16 %v2633
    %v2773 = vunpack.c.l.b16 %v2634
    %v2774 = vunpack.c.h.b16 %v2634
    %v2775 = vunpack.c.l.b16 %v2635
    %v2776 = vunpack.c.h.b16 %v2635
    %v2777 = vunpack.c.l.b16 %v2636
    %v2778 = vunpack.c.h.b16 %v2636
    %v2779 = vunpack.c.l.b16 %v2637
    %v2780 = vunpack.c.h.b16 %v2637
    %v2781 = vunpack.c.l.b16 %v2638
    %v2782 = vunpack.c.h.b16 %v2638
    %v2783 = vunpack.c.l.b16 %v2639
    %v2784 = vunpack.c.h.b16 %v2639
    %v2785 = vunpack.c.l.b16 %v2640
    %v2786 = vunpack.c.h.b16 %v2640
    %v2787 = vunpack.c.l.b16 %v2641
    %v2788 = vunpack.c.h.b16 %v2641
    %v2789 = vunpack.c.l.b16 %v2642
    %v2790 = vunpack.c.h.b16 %v2642
    %v2791 = vunpack.c.l.b16 %v2643
    %v2792 = vunpack.c.h.b16 %v2643
    %v2793 = vunpack.c.l.b16 %v2644
    %v2794 = vunpack.c.h.b16 %v2644
    %v2795 = vunpack.c.l.b16 %v2645
    %v2796 = vunpack.c.h.b16 %v2645
    %v2797 = vunpack.c.l.b16 %v2646
    %v2798 = vunpack.c.h.b16 %v2646
    %v2799 = vunpack.c.l.b16 %v2647
    %v2800 = vunpack.c.h.b16 %v2647
    %v2801 = vunpack.c.l.b16 %v2648
    %v2802 = vunpack.c.h.b16 %v2648
    %v2803 = vunpack.c.l.b16 %v2649
    %v2804 = vunpack.c.h.b16 %v2649
    %v2805 = vunpack.c.l.b16 %v2650
    %v2806 = vunpack.c.h.b16 %v2650
    %v2807 = vunpack.c.l.b16 %v2651
    %v2808 = vunpack.c.h.b16 %v2651
    %v2809 = vunpack.c.l.b16 %v2652
    %v2810 = vunpack.c.h.b16 %v2652
    %v2811 = vunpack.c.l.b16 %v2653
    %v2812 = vunpack.c.h.b16 %v2653
    %v2813 = vunpack.c.l.b16 %v2654
    %v2814 = vunpack.c.h.b16 %v2654
    %v2815 = vunpack.c.l.b16 %v2655
    %v2816 = vunpack.c.h.b16 %v2655
    %v2817 = vunpack.c.l.b16 %v2656
    %v2818 = vunpack.c.h.b16 %v2656
    %v2819 = vunpack.c.l.b16 %v2657
    %v2820 = vunpack.c.h.b16 %v2657
    %v2821 = vunpack.c.l.b16 %v2658
    %v2822 = vunpack.c.h.b16 %v2658
    %v2823 = vunpack.c.l.b16 %v2659
    %v2824 = vunpack.c.h.b16 %v2659
    %v2825 = vunpack.c.l.b16 %v2660
    %v2826 = vunpack.c.h.b16 %v2660
    %v2827 = vunpack.c.l.b16 %v2661
    %v2828 = vunpack.c.h.b16 %v2661
    %v2829 = vunpack.c.l.b16 %v2662
    %v2830 = vunpack.c.h.b16 %v2662
    %v2831 = vunpack.c.l.b16 %v2663
    %v2832 = vunpack.c.h.b16 %v2663
    %v2833 = vunpack.c.l.b16 %v2664
    %v2834 = vunpack.c.h.b16 %v2664
    %v2835 = vunpack.c.l.b16 %v2665
    %v2836 = vunpack.c.h.b16 %v2665
    %v2837 = vunpack.c.l.b16 %v2666
    %v2838 = vunpack.c.h.b16 %v2666
    %v2839 = vunpack.c.l.b16 %v2667
    %v2840 = vunpack.c.h.b16 %v2667
    %v2841 = vunpack.c.l.b16 %v2668
    %v2842 = vunpack.c.h.b16 %v2668
    %v2843 = vunpack.c.l.b16 %v2669
    %v2844 = vunpack.c.h.b16 %v2669
    %v2845 = vunpack.c.l.b16 %v2670
    %v2846 = vunpack.c.h.b16 %v2670
    %v2847 = vunpack.c.l.b16 %v2671
    %v2848 = vunpack.c.h.b16 %v2671
    %v2849 = vunpack.c.l.b16 %v2672
    %v2850 = vunpack.c.h.b16 %v2672
    %v2851 = vunpack.c.l.b16 %v2673
    %v2852 = vunpack.c.h.b16 %v2673
    %v2853 = vunpack.c.l.b16 %v2674
    %v2854 = vunpack.c.h.b16 %v2674
    %v2855 = vunpack.c.l.b16 %v2675
    %v2856 = vunpack.c.h.b16 %v2675
    %v2857 = vunpack.c.l.b16 %v2676
    %v2858 = vunpack.c.h.b16 %v2676
    %v2859 = vunpack.c.l.b16 %v2677
    %v2860 = vunpack.c.h.b16 %v2677
    %v2861 = vunpack.c.l.b16 %v2678
    %v2862 = vunpack.c.h.b16 %v2678
    %v2863 = vunpack.c.l.b16 %v2679
    %v2864 = vunpack.c.h.b16 %v2679
    %v2865 = vunpack.c.l.b16 %v2680
    %v2866 = vunpack.c.h.b16 %v2680
    %v2867 = vunpack.c.l.b16 %v2681
    %v2868 = vunpack.c.h.b16 %v2681
    %v2869 = vunpack.c.l.b16 %v2682
    %v2870 = vunpack.c.h.b16 %v2682
    %v2871 = vunpack.c.l.b16 %v2683
    %v2872 = vunpack.c.h.b16 %v2683
    %v2873 = vunpack.c.l.b16 %v2684
    %v2874 = vunpack.c.h.b16 %v2684
    %v2875 = vunpack.c.l.b16 %v2685
    %v2876 = vunpack.c.h.b16 %v2685
    %v2877 = vunpack.c.l.b16 %v2686
    %v2878 = vunpack.c.h.b16 %v2686
    %v2879 = vunpack.c.l.b16 %v2687
    %v2880 = vunpack.c.h.b16 %v2687
    %v2881 = vunpack.c.l.b16 %v2688
    %v2882 = vunpack.c.h.b16 %v2688
    %v2883 = vunpack.c.l.b16 %v2689
    %v2884 = vunpack.c.h.b16 %v2689
    %v2885 = vunpack.c.l.b16 %v2690
    %v2886 = vunpack.c.h.b16 %v2690
    %v2887 = vunpack.c.l.b16 %v2691
    %v2888 = vunpack.c.h.b16 %v2691
    %v2889 = vunpack.c.l.b16 %v2692
    %v2890 = vunpack.c.h.b16 %v2692
    %v2891 = vpack.c.b16 %v2765, %v2763
    %v2892 = vpack.c.b16 %v2766, %v2764
    %v2893 = vpack.c.b16 %v2769, %v2767
    %v2894 = vpack.c.b16 %v2770, %v2768
    %v2895 = vpack.c.b16 %v2773, %v2771
    %v2896 = vpack.c.b16 %v2774, %v2772
    %v2897 = vpack.c.b16 %v2777, %v2775
    %v2898 = vpack.c.b16 %v2778, %v2776
    %v2899 = vpack.c.b16 %v2781, %v2779
    %v2900 = vpack.c.b16 %v2782, %v2780
    %v2901 = vpack.c.b16 %v2785, %v2783
    %v2902 = vpack.c.b16 %v2786, %v2784
    %v2903 = vpack.c.b16 %v2789, %v2787
    %v2904 = vpack.c.b16 %v2790, %v2788
    %v2905 = vpack.c.b16 %v2793, %v2791
    %v2906 = vpack.c.b16 %v2794, %v2792
    %v2907 = vpack.c.b16 %v2797, %v2795
    %v2908 = vpack.c.b16 %v2798, %v2796
    %v2909 = vpack.c.b16 %v2801, %v2799
    %v2910 = vpack.c.b16 %v2802, %v2800
    %v2911 = vpack.c.b16 %v2805, %v2803
    %v2912 = vpack.c.b16 %v2806, %v2804
    %v2913 = vpack.c.b16 %v2809, %v2807
    %v2914 = vpack.c.b16 %v2810, %v2808
    %v2915 = vpack.c.b16 %v2813, %v2811
    %v2916 = vpack.c.b16 %v2814, %v2812
    %v2917 = vpack.c.b16 %v2817, %v2815
    %v2918 = vpack.c.b16 %v2818, %v2816
    %v2919 = vpack.c.b16 %v2821, %v2819
    %v2920 = vpack.c.b16 %v2822, %v2820
    %v2921 = vpack.c.b16 %v2825, %v2823
    %v2922 = vpack.c.b16 %v2826, %v2824
    %v2923 = vpack.c.b16 %v2829, %v2827
    %v2924 = vpack.c.b16 %v2830, %v2828
    %v2925 = vpack.c.b16 %v2833, %v2831
    %v2926 = vpack.c.b16 %v2834, %v2832
    %v2927 = vpack.c.b16 %v2837, %v2835
    %v2928 = vpack.c.b16 %v2838, %v2836
    %v2929 = vpack.c.b16 %v2841, %v2839
    %v2930 = vpack.c.b16 %v2842, %v2840
    %v2931 = vpack.c.b16 %v2845, %v2843
    %v2932 = vpack.c.b16 %v2846, %v2844
    %v2933 = vpack.c.b16 %v2849, %v2847
    %v2934 = vpack.c.b16 %v2850, %v2848
    %v2935 = vpack.c.b16 %v2853, %v2851
    %v2936 = vpack.c.b16 %v2854, %v2852
    %v2937 = vpack.c.b16 %v2857, %v2855
    %v2938 = vpack.c.b16 %v2858, %v2856
    %v2939 = vpack.c.b16 %v2861, %v2859
    %v2940 = vpack.c.b16 %v2862, %v2860
    %v2941 = vpack.c.b16 %v2865, %v2863
    %v2942 = vpack.c.b16 %v2866, %v2864
    %v2943 = vpack.c.b16 %v2869, %v2867
    %v2944 = vpack.c.b16 %v2870, %v2868
    %v2945 = vpack.c.b16 %v2873, %v2871
    %v2946 = vpack.c.b16 %v2874, %v2872
    %v2947 = vpack.c.b16 %v2877, %v2875
    %v2948 = vpack.c.b16 %v2878, %v2876
    %v2949 = vpack.c.b16 %v2881, %v2879
    %v2950 = vpack.c.b16 %v2882, %v2880
    %v2951 = vpack.c.b16 %v2885, %v2883
    %v2952 = vpack.c.b16 %v2886, %v2884
    %v2953 = vpack.c.b16 %v2889, %v2887
    %v2954 = vpack.c.b16 %v2890, %v2888
    %3019 = vmatpush.bf16.msra.mxu0 %v2905
    %3020 = vmatpush.bf16.msra.mxu0 %v2903
    %3021 = vmatpush.bf16.msra.mxu0 %v2901
    %3022 = vmatpush.bf16.msra.mxu0 %v2899
    %3023 = vmatpush.bf16.msra.mxu0 %v2897
    %3024 = vmatpush.bf16.msra.mxu0 %v2895
    %3025 = vmatpush.bf16.msra.mxu0 %v2893
    %3026 = vmatpush.bf16.msra.mxu0 %v2891
    %3027 = vmatmul.bf16.gmra.mxu0 %v2625
    %v3028 = vpop.f32.mrf.mxu0
    %v3029 = vadd.f32 %v2695, %v3028
    %v3030 = vpop.f32.mrf.mxu0
    %3031 = vdwg.mxu0
    %3032 = vmatpush.bf16.msra.mxu0 %v2921
    %3033 = vmatpush.bf16.msra.mxu0 %v2919
    %3034 = vmatpush.bf16.msra.mxu0 %v2917
    %3035 = vmatpush.bf16.msra.mxu0 %v2915
    %3036 = vmatpush.bf16.msra.mxu0 %v2913
    %3037 = vmatpush.bf16.msra.mxu0 %v2911
    %3038 = vmatpush.bf16.msra.mxu0 %v2909
    %3039 = vmatpush.bf16.msra.mxu0 %v2907
    %3040 = vmatmul.bf16.gmra.mxu0 %v2626
    %v3041 = vpop.f32.mrf.mxu0
    %v3042 = vadd.f32 %v3029, %v3041
    %v3043 = vpop.f32.mrf.mxu0
    %3044 = vdwg.mxu0
    %3045 = vmatpush.bf16.msra.mxu0 %v2937
    %3046 = vmatpush.bf16.msra.mxu0 %v2935
    %3047 = vmatpush.bf16.msra.mxu0 %v2933
    %3048 = vmatpush.bf16.msra.mxu0 %v2931
    %3049 = vmatpush.bf16.msra.mxu0 %v2929
    %3050 = vmatpush.bf16.msra.mxu0 %v2927
    %3051 = vmatpush.bf16.msra.mxu0 %v2925
    %3052 = vmatpush.bf16.msra.mxu0 %v2923
    %3053 = vmatmul.bf16.gmra.mxu0 %v2627
    %v3054 = vpop.f32.mrf.mxu0
    %v3055 = vadd.f32 %v3042, %v3054
    %v3056 = vpop.f32.mrf.mxu0
    %3057 = vdwg.mxu0
    %3058 = vmatpush.bf16.msra.mxu0 %v2953
    %3059 = vmatpush.bf16.msra.mxu0 %v2951
    %3060 = vmatpush.bf16.msra.mxu0 %v2949
    %3061 = vmatpush.bf16.msra.mxu0 %v2947
    %3062 = vmatpush.bf16.msra.mxu0 %v2945
    %3063 = vmatpush.bf16.msra.mxu0 %v2943
    %3064 = vmatpush.bf16.msra.mxu0 %v2941
    %3065 = vmatpush.bf16.msra.mxu0 %v2939
    %3066 = vmatmul.bf16.gmra.mxu0 %v2628
    %v3067 = vpop.f32.mrf.mxu0
    %v3068 = vadd.f32 %v3055, %v3067
    %v3069 = vpop.f32.mrf.mxu0
    %3070 = vdwg.mxu0
    %3071 = vmatpush.bf16.msra.mxu0 %v2906
    %3072 = vmatpush.bf16.msra.mxu0 %v2904
    %3073 = vmatpush.bf16.msra.mxu0 %v2902
    %3074 = vmatpush.bf16.msra.mxu0 %v2900
    %3075 = vmatpush.bf16.msra.mxu0 %v2898
    %3076 = vmatpush.bf16.msra.mxu0 %v2896
    %3077 = vmatpush.bf16.msra.mxu0 %v2894
    %3078 = vmatpush.bf16.msra.mxu0 %v2892
    %3079 = vmatmul.bf16.gmra.mxu0 %v2625
    %v3080 = vpop.f32.mrf.mxu0
    %v3081 = vadd.f32 %v2696, %v3080
    %v3082 = vpop.f32.mrf.mxu0
    %3083 = vdwg.mxu0
    %3084 = vmatpush.bf16.msra.mxu0 %v2922
    %3085 = vmatpush.bf16.msra.mxu0 %v2920
    %3086 = vmatpush.bf16.msra.mxu0 %v2918
    %3087 = vmatpush.bf16.msra.mxu0 %v2916
    %3088 = vmatpush.bf16.msra.mxu0 %v2914
    %3089 = vmatpush.bf16.msra.mxu0 %v2912
    %3090 = vmatpush.bf16.msra.mxu0 %v2910
    %3091 = vmatpush.bf16.msra.mxu0 %v2908
    %3092 = vmatmul.bf16.gmra.mxu0 %v2626
    %v3093 = vpop.f32.mrf.mxu0
    %v3094 = vadd.f32 %v3081, %v3093
    %v3095 = vpop.f32.mrf.mxu0
    %3096 = vdwg.mxu0
    %3097 = vmatpush.bf16.msra.mxu0 %v2938
    %3098 = vmatpush.bf16.msra.mxu0 %v2936
    %3099 = vmatpush.bf16.msra.mxu0 %v2934
    %3100 = vmatpush.bf16.msra.mxu0 %v2932
    %3101 = vmatpush.bf16.msra.mxu0 %v2930
    %3102 = vmatpush.bf16.msra.mxu0 %v2928
    %3103 = vmatpush.bf16.msra.mxu0 %v2926
    %3104 = vmatpush.bf16.msra.mxu0 %v2924
    %3105 = vmatmul.bf16.gmra.mxu0 %v2627
    %v3106 = vpop.f32.mrf.mxu0
    %v3107 = vadd.f32 %v3094, %v3106
    %v3108 = vpop.f32.mrf.mxu0
    %3109 = vdwg.mxu0
    %3110 = vmatpush.bf16.msra.mxu0 %v2954
    %3111 = vmatpush.bf16.msra.mxu0 %v2952
    %3112 = vmatpush.bf16.msra.mxu0 %v2950
    %3113 = vmatpush.bf16.msra.mxu0 %v2948
    %3114 = vmatpush.bf16.msra.mxu0 %v2946
    %3115 = vmatpush.bf16.msra.mxu0 %v2944
    %3116 = vmatpush.bf16.msra.mxu0 %v2942
    %3117 = vmatpush.bf16.msra.mxu0 %v2940
    %3118 = vmatmul.bf16.gmra.mxu0 %v2628
    %v3119 = vpop.f32.mrf.mxu0
    %v3120 = vadd.f32 %v3107, %v3119
    %v3121 = vpop.f32.mrf.mxu0
    %3122 = vdwg.mxu0
    %v3123 = vmul.f32 %v3068, 0.2
    %v3124 = vmul.f32 %v3120, 0.2
    %v3125 = vmax.f32 %v3068, %v3123
    %v3126 = vmax.f32 %v3120, %v3124
    %s3127 = sxor.u32 %s113, 923219018
    %v3128 = vmul.u32 %v452, 256
    %v3129 = vadd.s32 %v3128, %v454
    %v3130 = vadd.s32 %v3128, %v455
    %v3131 = vstv %s3127
    %v3132 = vadd.s32 %v3129, %v3131
    %v3133 = vadd.s32 %v3130, %v3131
    %v3134 = vmul.u32 %v3132, 2654435769
    %v3135 = vmul.u32 %v3133, 2654435769
    %v3136 = vshrl.u32 %v3134, 16
    %v3137 = vshrl.u32 %v3135, 16
    %v3138 = vxor.u32 %v3134, %v3136
    %v3139 = vxor.u32 %v3135, %v3137
    %v3140 = vmul.u32 %v3138, 2146121005
    %v3141 = vmul.u32 %v3139, 2146121005
    %v3142 = vshrl.u32 %v3140, 15
    %v3143 = vshrl.u32 %v3141, 15
    %v3144 = vxor.u32 %v3140, %v3142
    %v3145 = vxor.u32 %v3141, %v3143
    %v3146 = vmul.u32 %v3144, 2221713035
    %v3147 = vmul.u32 %v3145, 2221713035
    %v3148 = vshrl.u32 %v3146, 16
    %v3149 = vshrl.u32 %v3147, 16
    %v3150 = vxor.u32 %v3146, %v3148
    %v3151 = vxor.u32 %v3147, %v3149
    %v3152 = vadd.s32 %v3150, 2147483648
    %vm3154 = vcmp.lt.s32.totalorder %v3152, 858993459
    %v3155 = vadd.s32 %v3151, 2147483648
    %vm3157 = vcmp.lt.s32.totalorder %v3155, 858993459
    %v3158 = vsel %vm3154, %v3125, 0.0
    %v3159 = vsel %vm3157, %v3126, 0.0
    %v3160 = vld [vmem:[%s8] sm:$0x3]
    %v3162 = vperm.slane %v3160, 0
    %v3163 = vperm.slane %v3160, 1
    %v3166 = vmul.f32 %v3158, %v3162
    %v3167 = vmul.f32 %v3159, %v3163
    %v3168 = vadd.f32 %v3166, %v3167
    %3169 = vadd.xlane.f32.xlu0 %v3168
    %v3170 = vpop.xlane.xlu0 %3169
    %v3171 = vld [vmem:[#allocation4] sm:$0x1]
    %v3173 = vperm.slane %v3171, 0
    %v3175 = vadd.f32 %v3170, %v3173
    %v3176 = vxor.u32 %v3175, 2147483648
    %v3177 = vmul.f32 %v3176, 1.442695
    %v3178 = vpow.pop %v3177
    %v3179 = vadd.f32 %v3178, 1.0
    %v3180 = vrcp.pop %v3179
    %v3181 = vmul.f32 %v3179, %v3180
    %v3182 = vsub.f32 1.0, %v3181
    %v3183 = vmul.f32 %v3180, %v3182
    %v3184 = vadd.f32 %v3180, %v3183
    %vm3185 = vweird.f32 %v3179
    %vm3186 = vweird.f32 %v3180
    %vm3187 = vmor %vm3185, %vm3186
    %v3188 = vsel %vm3187, %v3180, %v3184
    %v3189 = vand.u32 2147483647, %v3179
    %vm3190 = vcmp.eq.f32.partialorder %v3189, 8.507059e+37
    %v3191 = vand.u32 %v3179, 2147483648
    %v3192 = vor.u32 1.1754944e-38, %v3191
    %v3193 = vsel %vm3190, %v3192, %v3188
    %v3194 = vmul.f32 1.0, %v3193
    %vm3195 = vcmask 7168
    %3196 = vst.msk [vmem:[%s10] sm:$0xff] %vm3195, %v3194
    // Predicated region
    $region58: #{tpu_custom_call.1} parent=1 // pred_check
      _
    $region59: #{tpu_custom_call.1} parent=1 // pred_check_branch
      %3198 = sbr.rel (0) target = $region61
    $region60: #{tpu_custom_call.1} parent=1 // pred_region
      _
    $region61: #{tpu_custom_call.1} parent=1 // pred_fallthru
      _
    // Predicated region
    $region62: #{tpu_custom_call.1} parent=1 // pred_check
      _
    $region63: #{tpu_custom_call.1} parent=1 // pred_check_branch
      %3200 = sbr.rel (0) target = $region65
    $region64: #{tpu_custom_call.1} parent=1 // pred_region
      _
    $region65: #{tpu_custom_call.1} parent=1 // pred_fallthru
      _
    %3201 = vsyncpa [#allocation6], 1
    %3202 = vsyncpa [#allocation8], 1
    %3203 = vsyncpa [#allocation11], 1

// kernel: tpu_custom_call.1
$region0: #{tpu_custom_call.1}
  #allocation0 [shape = 'u32[]', space=smem, size = 0x4, offset = 0x4, fixed_abs, tag = 'smem constant byte address 0x4 - core index']
  #allocation1 [shape = 'u32[72,128]{1,0:T(1,128)}', space=vmem, size = 0x9000, scoped, tag = 'internal scratch']
  #allocation2 [shape = 's32[1]{0}', space=sflag, size = 0x4, scoped, tag = 'scoped memory for tpu_custom_call.1']
  #allocation3 [shape = 's32[1]{0:T(128)S(6)}', space=smem, size = 0x200, scoped, tag = 'prefetched SMEM operand 0']
  #allocation4 [shape = 'f32[1,1]{1,0:T(1,128)S(1)}', space=vmem, size = 0x200, scoped, tag = 'scoped memory for tpu_custom_call.1']
  %s0 = inlined_call_operand.<no memory space> [shape: s32[1], index: 0, kind: input, shape index: {}]
  %s1 = inlined_call_operand.hbm [shape: f32[8,64], index: 1, kind: input, shape index: {}]
  %s2 = inlined_call_operand.hbm [shape: bf16[64,1024], index: 2, kind: input, shape index: {}]
  %s3 = inlined_call_operand.hbm [shape: f32[1,1024], index: 3, kind: input, shape index: {}]
  %s4 = inlined_call_operand.hbm [shape: bf16[1024,512], index: 4, kind: input, shape index: {}]
  %s5 = inlined_call_operand.vmem [shape: f32[1,512], index: 5, kind: input, shape index: {}]
  %s6 = inlined_call_operand.hbm [shape: bf16[512,256], index: 6, kind: input, shape index: {}]
  %s7 = inlined_call_operand.vmem [shape: f32[1,256], index: 7, kind: input, shape index: {}]
  %s8 = inlined_call_operand.vmem [shape: f32[1,256], index: 8, kind: input, shape index: {}]
  %s9 = inlined_call_operand.<no memory space> [shape: f32[1,1], index: 9, kind: input, shape index: {}]
  %s10 = inlined_call_operand.vmem [shape: f32[8,1], index: 10, kind: output, shape index: {}]
  %s11 = sld [smem:[#allocation0]]
  $region66: #{tpu_custom_call.1} parent=0
    _
  %s13 = ssub.s32 1, %s11
  %s14 = scalar_select 0, %s13, %s11
  %15 = sst [smem:[#allocation3]] %s0
  %v16 = vstv %s9
  %17 = vst [vmem:[#allocation4] sm:$0x1] %v16
  $region1: #{tpu_custom_call.1} parent=0
    #allocation5 [shape = 'u8[4096]{0}', space=vmem, size = 0x1000, scoped, tag = 'input window, operand 1, single buffered']
    #allocation6 [shape = 's32[1]{0}', space=sflag, size = 0x4, scoped, tag = 'scoped memory for tpu_custom_call.1']
    #allocation7 [shape = 'u8[131072]{0}', space=vmem, size = 0x20000, scoped, tag = 'input window, operand 2, single buffered']
    #allocation8 [shape = 's32[1]{0}', space=sflag, size = 0x4, scoped, tag = 'scoped memory for tpu_custom_call.1']
    #allocation9 [shape = 'u8[4096]{0}', space=vmem, size = 0x1000, scoped, tag = 'input window, operand 3, single buffered']
    #allocation10 [shape = 'u8[1048576]{0}', space=vmem, size = 0x100000, scoped, tag = 'input window, operand 4, single buffered']
    #allocation11 [shape = 's32[1]{0}', space=sflag, size = 0x4, scoped, tag = 'scoped memory for tpu_custom_call.1']
    #allocation12 [shape = 'u8[262144]{0}', space=vmem, size = 0x40000, scoped, tag = 'input window, operand 6, single buffered']
    %18 = vsyncpa [#allocation6], 0
    %19 = vsyncpa [#allocation8], 0
    %20 = vsyncpa [#allocation11], 0
    // Predicated region
    $region2: #{tpu_custom_call.1} parent=1 // pred_check
      _
    $region3: #{tpu_custom_call.1} parent=1 // pred_check_branch
      %22 = sbr.rel (0) target = $region5
    $region4: #{tpu_custom_call.1} parent=1 // pred_region
      %24 = vsyncadd [#allocation6], 0
      %s26 = sshll.u32 %s1, 4
      %s27 = int_to_ptr.hbm [resolvable:$true] %s26
      %s28 = sshll.u32 [#allocation5], 4
      %s29 = int_to_ptr.vmem [resolvable:$true] %s28
      %31 = dma.hbm_to_vmem [thread:$0]  %s27, 128, %s29, [#allocation6]
    $region5: #{tpu_custom_call.1} parent=1 // pred_fallthru
      _
    // Predicated region
    $region6: #{tpu_custom_call.1} parent=1 // pred_check
      _
    $region7: #{tpu_custom_call.1} parent=1 // pred_check_branch
      %33 = sbr.rel (0) target = $region9
    $region8: #{tpu_custom_call.1} parent=1 // pred_region
      %35 = vsyncadd [#allocation8], 0
      %s36 = sshll.u32 %s2, 4
      %s37 = int_to_ptr.hbm [resolvable:$true] %s36
      %s38 = sshll.u32 [#allocation7], 4
      %s39 = int_to_ptr.vmem [resolvable:$true] %s38
      %44 = dma.hbm_to_vmem [thread:$0]  %s37, 4096, %s39, [#allocation8], 512, 512, 32
    $region9: #{tpu_custom_call.1} parent=1 // pred_fallthru
      _
    // Predicated region
    $region10: #{tpu_custom_call.1} parent=1 // pred_check
      _
    $region11: #{tpu_custom_call.1} parent=1 // pred_check_branch
      %46 = sbr.rel (0) target = $region13
    $region12: #{tpu_custom_call.1} parent=1 // pred_region
      %48 = vsyncadd [#allocation8], 0
      %s50 = sshll.u32 %s3, 4
      %s51 = int_to_ptr.hbm [resolvable:$true] %s50
      %s52 = sshll.u32 [#allocation9], 4
      %s53 = int_to_ptr.vmem [resolvable:$true] %s52
      %55 = dma.hbm_to_vmem [thread:$0]  %s51, 128, %s53, [#allocation8]
    $region13: #{tpu_custom_call.1} parent=1 // pred_fallthru
      _
    // Predicated region
    $region14: #{tpu_custom_call.1} parent=1 // pred_check
      _
    $region15: #{tpu_custom_call.1} parent=1 // pred_check_branch
      %57 = sbr.rel (0) target = $region17
    $region16: #{tpu_custom_call.1} parent=1 // pred_region
      %59 = vsyncadd [#allocation11], 0
      %s60 = sshll.u32 %s4, 4
      %s61 = int_to_ptr.hbm [resolvable:$true] %s60
      %s62 = sshll.u32 [#allocation10], 4
      %s63 = int_to_ptr.vmem [resolvable:$true] %s62
      %68 = dma.hbm_to_vmem [thread:$0]  %s61, 32768, %s63, [#allocation11], 256, 256, 16
    $region17: #{tpu_custom_call.1} parent=1 // pred_fallthru
      _
    // Predicated region
    $region18: #{tpu_custom_call.1} parent=1 // pred_check
      _
    $region19: #{tpu_custom_call.1} parent=1 // pred_check_branch
      %70 = sbr.rel (0) target = $region21
    $region20: #{tpu_custom_call.1} parent=1 // pred_region
      _
    $region21: #{tpu_custom_call.1} parent=1 // pred_fallthru
      _
    // Predicated region
    $region22: #{tpu_custom_call.1} parent=1 // pred_check
      _
    $region23: #{tpu_custom_call.1} parent=1 // pred_check_branch
      %72 = sbr.rel (0) target = $region25
    $region24: #{tpu_custom_call.1} parent=1 // pred_region
      %74 = vsyncadd [#allocation11], 0
      %s75 = sshll.u32 %s6, 4
      %s76 = int_to_ptr.hbm [resolvable:$true] %s75
      %s77 = sshll.u32 [#allocation12], 4
      %s78 = int_to_ptr.vmem [resolvable:$true] %s77
      %83 = dma.hbm_to_vmem [thread:$0]  %s76, 8192, %s78, [#allocation11], 128, 128, 8
    $region25: #{tpu_custom_call.1} parent=1 // pred_fallthru
      _
    // Predicated region
    $region26: #{tpu_custom_call.1} parent=1 // pred_check
      _
    $region27: #{tpu_custom_call.1} parent=1 // pred_check_branch
      %85 = sbr.rel (0) target = $region29
    $region28: #{tpu_custom_call.1} parent=1 // pred_region
      _
    $region29: #{tpu_custom_call.1} parent=1 // pred_fallthru
      _
    // Predicated region
    $region30: #{tpu_custom_call.1} parent=1 // pred_check
      _
    $region31: #{tpu_custom_call.1} parent=1 // pred_check_branch
      %87 = sbr.rel (0) target = $region33
    $region32: #{tpu_custom_call.1} parent=1 // pred_region
      _
    $region33: #{tpu_custom_call.1} parent=1 // pred_fallthru
      _
    // Predicated region
    $region34: #{tpu_custom_call.1} parent=1 // pred_check
      _
    $region35: #{tpu_custom_call.1} parent=1 // pred_check_branch
      %89 = sbr.rel (0) target = $region37
    $region36: #{tpu_custom_call.1} parent=1 // pred_region
      _
    $region37: #{tpu_custom_call.1} parent=1 // pred_fallthru
      _
    // Predicated region
    $region38: #{tpu_custom_call.1} parent=1 // pred_check
      _
    $region39: #{tpu_custom_call.1} parent=1 // pred_check_branch
      %91 = sbr.rel (0) target = $region41
    $region40: #{tpu_custom_call.1} parent=1 // pred_region
      %93 = dma.done [#allocation6], 128
    $region41: #{tpu_custom_call.1} parent=1 // pred_fallthru
      _
    // Predicated region
    $region42: #{tpu_custom_call.1} parent=1 // pred_check
      _
    $region43: #{tpu_custom_call.1} parent=1 // pred_check_branch
      %95 = sbr.rel (0) target = $region45
    $region44: #{tpu_custom_call.1} parent=1 // pred_region
      %97 = dma.done [#allocation8], 4096
    $region45: #{tpu_custom_call.1} parent=1 // pred_fallthru
      _
    // Predicated region
    $region46: #{tpu_custom_call.1} parent=1 // pred_check
      _
    $region47: #{tpu_custom_call.1} parent=1 // pred_check_branch
      %99 = sbr.rel (0) target = $region49
    $region48: #{tpu_custom_call.1} parent=1 // pred_region
      %101 = dma.done [#allocation8], 128
    $region49: #{tpu_custom_call.1} parent=1 // pred_fallthru
      _
    // Predicated region
    $region50: #{tpu_custom_call.1} parent=1 // pred_check
      _
    $region51: #{tpu_custom_call.1} parent=1 // pred_check_branch
      %103 = sbr.rel (0) target = $region53
    $region52: #{tpu_custom_call.1} parent=1 // pred_region
      %105 = dma.done [#allocation11], 32768
    $region53: #{tpu_custom_call.1} parent=1 // pred_fallthru
      _
    // Predicated region
    $region54: #{tpu_custom_call.1} parent=1 // pred_check
      _
    $region55: #{tpu_custom_call.1} parent=1 // pred_check_branch
      %107 = sbr.rel (0) target = $region57
    $region56: #{tpu_custom_call.1} parent=1 // pred_region
      %109 = dma.done [#allocation11], 8192
    $region57: #{tpu_custom_call.1} parent=1 // pred_fallthru
      _
    %s111 = sld [smem:[#allocation3]]
    %s112 = smul.u32 0, 16777619
    %s113 = sadd.s32 %s111, %s112
    %v114 = vld [vmem:[#allocation5] sm:$0xff]
    %v115 = vpack.c.bf16 %v114, %v114
    %v116 = vld [vmem:[#allocation7] sm:$0xff]
    %v117 = vld [vmem:[#allocation7 + $0x8] sm:$0xff]
    %v118 = vld [vmem:[#allocation7 + $0x10] sm:$0xff]
    %v119 = vld [vmem:[#allocation7 + $0x18] sm:$0xff]
    %v120 = vld [vmem:[#allocation7 + $0x20] sm:$0xff]
    %v121 = vld [vmem:[#allocation7 + $0x28] sm:$0xff]
    %v122 = vld [vmem:[#allocation7 + $0x30] sm:$0xff]
    %v123 = vld [vmem:[#allocation7 + $0x38] sm:$0xff]
    %v124 = vld [vmem:[#allocation7 + $0x40] sm:$0xff]
    %v125 = vld [vmem:[#allocation7 + $0x48] sm:$0xff]
    %v126 = vld [vmem:[#allocation7 + $0x50] sm:$0xff]
    %v127 = vld [vmem:[#allocation7 + $0x58] sm:$0xff]
    %v128 = vld [vmem:[#allocation7 + $0x60] sm:$0xff]
    %v129 = vld [vmem:[#allocation7 + $0x68] sm:$0xff]
    %v130 = vld [vmem:[#allocation7 + $0x70] sm:$0xff]
    %v131 = vld [vmem:[#allocation7 + $0x78] sm:$0xff]
    %v132 = vld [vmem:[#allocation7 + $0x80] sm:$0xff]
    %v133 = vld [vmem:[#allocation7 + $0x88] sm:$0xff]
    %v134 = vld [vmem:[#allocation7 + $0x90] sm:$0xff]
    %v135 = vld [vmem:[#allocation7 + $0x98] sm:$0xff]
    %v136 = vld [vmem:[#allocation7 + $0xa0] sm:$0xff]
    %v137 = vld [vmem:[#allocation7 + $0xa8] sm:$0xff]
    %v138 = vld [vmem:[#allocation7 + $0xb0] sm:$0xff]
    %v139 = vld [vmem:[#allocation7 + $0xb8] sm:$0xff]
    %v140 = vld [vmem:[#allocation7 + $0xc0] sm:$0xff]
    %v141 = vld [vmem:[#allocation7 + $0xc8] sm:$0xff]
    %v142 = vld [vmem:[#allocation7 + $0xd0] sm:$0xff]
    %v143 = vld [vmem:[#allocation7 + $0xd8] sm:$0xff]
    %v144 = vld [vmem:[#allocation7 + $0xe0] sm:$0xff]
    %v145 = vld [vmem:[#allocation7 + $0xe8] sm:$0xff]
    %v146 = vld [vmem:[#allocation7 + $0xf0] sm:$0xff]
    %v147 = vld [vmem:[#allocation7 + $0xf8] sm:$0xff]
    %v148 = vld [vmem:[#allocation9] sm:$0xff]
    %v150 = vperm.slane %v148, 0
    %v151 = vperm.slane %v148, 1
    %v152 = vperm.slane %v148, 2
    %v153 = vperm.slane %v148, 3
    %v154 = vperm.slane %v148, 4
    %v155 = vperm.slane %v148, 5
    %v156 = vperm.slane %v148, 6
    %v157 = vperm.slane %v148, 7
    %v198 = vunpack.c.l.b16 %v116
    %v199 = vunpack.c.h.b16 %v116
    %v200 = vunpack.c.l.b16 %v117
    %v201 = vunpack.c.h.b16 %v117
    %v202 = vunpack.c.l.b16 %v118
    %v203 = vunpack.c.h.b16 %v118
    %v204 = vunpack.c.l.b16 %v119
    %v205 = vunpack.c.h.b16 %v119
    %v206 = vunpack.c.l.b16 %v120
    %v207 = vunpack.c.h.b16 %v120
    %v208 = vunpack.c.l.b16 %v121
    %v209 = vunpack.c.h.b16 %v121
    %v210 = vunpack.c.l.b16 %v122
    %v211 = vunpack.c.h.b16 %v122
    %v212 = vunpack.c.l.b16 %v123
    %v213 = vunpack.c.h.b16 %v123
    %v214 = vunpack.c.l.b16 %v124
    %v215 = vunpack.c.h.b16 %v124
    %v216 = vunpack.c.l.b16 %v125
    %v217 = vunpack.c.h.b16 %v125
    %v218 = vunpack.c.l.b16 %v126
    %v219 = vunpack.c.h.b16 %v126
    %v220 = vunpack.c.l.b16 %v127
    %v221 = vunpack.c.h.b16 %v127
    %v222 = vunpack.c.l.b16 %v128
    %v223 = vunpack.c.h.b16 %v128
    %v224 = vunpack.c.l.b16 %v129
    %v225 = vunpack.c.h.b16 %v129
    %v226 = vunpack.c.l.b16 %v130
    %v227 = vunpack.c.h.b16 %v130
    %v228 = vunpack.c.l.b16 %v131
    %v229 = vunpack.c.h.b16 %v131
    %v230 = vunpack.c.l.b16 %v132
    %v231 = vunpack.c.h.b16 %v132
    %v232 = vunpack.c.l.b16 %v133
    %v233 = vunpack.c.h.b16 %v133
    %v234 = vunpack.c.l.b16 %v134
    %v235 = vunpack.c.h.b16 %v134
    %v236 = vunpack.c.l.b16 %v135
    %v237 = vunpack.c.h.b16 %v135
    %v238 = vunpack.c.l.b16 %v136
    %v239 = vunpack.c.h.b16 %v136
    %v240 = vunpack.c.l.b16 %v137
    %v241 = vunpack.c.h.b16 %v137
    %v242 = vunpack.c.l.b16 %v138
    %v243 = vunpack.c.h.b16 %v138
    %v244 = vunpack.c.l.b16 %v139
    %v245 = vunpack.c.h.b16 %v139
    %v246 = vunpack.c.l.b16 %v140
    %v247 = vunpack.c.h.b16 %v140
    %v248 = vunpack.c.l.b16 %v141
    %v249 = vunpack.c.h.b16 %v141
    %v250 = vunpack.c.l.b16 %v142
    %v251 = vunpack.c.h.b16 %v142
    %v252 = vunpack.c.l.b16 %v143
    %v253 = vunpack.c.h.b16 %v143
    %v254 = vunpack.c.l.b16 %v144
    %v255 = vunpack.c.h.b16 %v144
    %v256 = vunpack.c.l.b16 %v145
    %v257 = vunpack.c.h.b16 %v145
    %v258 = vunpack.c.l.b16 %v146
    %v259 = vunpack.c.h.b16 %v146
    %v260 = vunpack.c.l.b16 %v147
    %v261 = vunpack.c.h.b16 %v147
    %v262 = vpack.c.b16 %v206, %v198
    %v263 = vpack.c.b16 %v207, %v199
    %v264 = vpack.c.b16 %v208, %v200
    %v265 = vpack.c.b16 %v209, %v201
    %v266 = vpack.c.b16 %v210, %v202
    %v267 = vpack.c.b16 %v211, %v203
    %v268 = vpack.c.b16 %v212, %v204
    %v269 = vpack.c.b16 %v213, %v205
    %v270 = vpack.c.b16 %v222, %v214
    %v271 = vpack.c.b16 %v223, %v215
    %v272 = vpack.c.b16 %v224, %v216
    %v273 = vpack.c.b16 %v225, %v217
    %v274 = vpack.c.b16 %v226, %v218
    %v275 = vpack.c.b16 %v227, %v219
    %v276 = vpack.c.b16 %v228, %v220
    %v277 = vpack.c.b16 %v229, %v221
    %v278 = vpack.c.b16 %v238, %v230
    %v279 = vpack.c.b16 %v239, %v231
    %v280 = vpack.c.b16 %v240, %v232
    %v281 = vpack.c.b16 %v241, %v233
    %v282 = vpack.c.b16 %v242, %v234
    %v283 = vpack.c.b16 %v243, %v235
    %v284 = vpack.c.b16 %v244, %v236
    %v285 = vpack.c.b16 %v245, %v237
    %v286 = vpack.c.b16 %v254, %v246
    %v287 = vpack.c.b16 %v255, %v247
    %v288 = vpack.c.b16 %v256, %v248
    %v289 = vpack.c.b16 %v257, %v249
    %v290 = vpack.c.b16 %v258, %v250
    %v291 = vpack.c.b16 %v259, %v251
    %v292 = vpack.c.b16 %v260, %v252
    %v293 = vpack.c.b16 %v261, %v253
    %vm326 = vcmask 523264
    %v328 = vsel %vm326, %v115, 0
    %330 = vmatpush.bf16.msra.mxu0 0
    %331 = vmatpush.bf16.msra.mxu0 0
    %332 = vmatpush.bf16.msra.mxu0 0
    %333 = vmatpush.bf16.msra.mxu0 0
    %334 = vmatpush.bf16.msra.mxu0 %v286
    %335 = vmatpush.bf16.msra.mxu0 %v278
    %336 = vmatpush.bf16.msra.mxu0 %v270
    %337 = vmatpush.bf16.msra.mxu0 %v262
    %338 = vmatmul.bf16.gmra.mxu0 %v328
    %v339 = vpop.f32.mrf.mxu0
    %v340 = vadd.f32 %v150, %v339
    %v341 = vpop.f32.mrf.mxu0
    %342 = vdwg.mxu0
    %343 = vmatpush.bf16.msra.mxu0 0
    %344 = vmatpush.bf16.msra.mxu0 0
    %345 = vmatpush.bf16.msra.mxu0 0
    %346 = vmatpush.bf16.msra.mxu0 0
    %347 = vmatpush.bf16.msra.mxu0 %v287
    %348 = vmatpush.bf16.msra.mxu0 %v279
    %349 = vmatpush.bf16.msra.mxu0 %v271
    %350 = vmatpush.bf16.msra.mxu0 %v263
    %351 = vmatmul.bf16.gmra.mxu0 %v328
    %v352 = vpop.f32.mrf.mxu0
    %v353 = vadd.f32 %v151, %v352
    %v354 = vpop.f32.mrf.mxu0
    %355 = vdwg.mxu0
    %356 = vmatpush.bf16.msra.mxu0 0
    %357 = vmatpush.bf16.msra.mxu0 0
    %358 = vmatpush.bf16.msra.mxu0 0
    %359 = vmatpush.bf16.msra.mxu0 0
    %360 = vmatpush.bf16.msra.mxu0 %v288
    %361 = vmatpush.bf16.msra.mxu0 %v280
    %362 = vmatpush.bf16.msra.mxu0 %v272
    %363 = vmatpush.bf16.msra.mxu0 %v264
    %364 = vmatmul.bf16.gmra.mxu0 %v328
    %v365 = vpop.f32.mrf.mxu0
    %v366 = vadd.f32 %v152, %v365
    %v367 = vpop.f32.mrf.mxu0
    %368 = vdwg.mxu0
    %369 = vmatpush.bf16.msra.mxu0 0
    %370 = vmatpush.bf16.msra.mxu0 0
    %371 = vmatpush.bf16.msra.mxu0 0
    %372 = vmatpush.bf16.msra.mxu0 0
    %373 = vmatpush.bf16.msra.mxu0 %v289
    %374 = vmatpush.bf16.msra.mxu0 %v281
    %375 = vmatpush.bf16.msra.mxu0 %v273
    %376 = vmatpush.bf16.msra.mxu0 %v265
    %377 = vmatmul.bf16.gmra.mxu0 %v328
    %v378 = vpop.f32.mrf.mxu0
    %v379 = vadd.f32 %v153, %v378
    %v380 = vpop.f32.mrf.mxu0
    %381 = vdwg.mxu0
    %382 = vmatpush.bf16.msra.mxu0 0
    %383 = vmatpush.bf16.msra.mxu0 0
    %384 = vmatpush.bf16.msra.mxu0 0
    %385 = vmatpush.bf16.msra.mxu0 0
    %386 = vmatpush.bf16.msra.mxu0 %v290
    %387 = vmatpush.bf16.msra.mxu0 %v282
    %388 = vmatpush.bf16.msra.mxu0 %v274
    %389 = vmatpush.bf16.msra.mxu0 %v266
    %390 = vmatmul.bf16.gmra.mxu0 %v328
    %v391 = vpop.f32.mrf.mxu0
    %v392 = vadd.f32 %v154, %v391
    %v393 = vpop.f32.mrf.mxu0
    %394 = vdwg.mxu0
    %395 = vmatpush.bf16.msra.mxu0 0
    %396 = vmatpush.bf16.msra.mxu0 0
    %397 = vmatpush.bf16.msra.mxu0 0
    %398 = vmatpush.bf16.msra.mxu0 0
    %399 = vmatpush.bf16.msra.mxu0 %v291
    %400 = vmatpush.bf16.msra.mxu0 %v283
    %401 = vmatpush.bf16.msra.mxu0 %v275
    %402 = vmatpush.bf16.msra.mxu0 %v267
    %403 = vmatmul.bf16.gmra.mxu0 %v328
    %v404 = vpop.f32.mrf.mxu0
    %v405 = vadd.f32 %v155, %v404
    %v406 = vpop.f32.mrf.mxu0
    %407 = vdwg.mxu0
    %408 = vmatpush.bf16.msra.mxu0 0
    %409 = vmatpush.bf16.msra.mxu0 0
    %410 = vmatpush.bf16.msra.mxu0 0
    %411 = vmatpush.bf16.msra.mxu0 0
    %412 = vmatpush.bf16.msra.mxu0 %v292
    %413 = vmatpush.bf16.msra.mxu0 %v284
    %414 = vmatpush.bf16.msra.mxu0 %v276
    %415 = vmatpush.bf16.msra.mxu0 %v268
    %416 = vmatmul.bf16.gmra.mxu0 %v328
    %v417 = vpop.f32.mrf.mxu0
    %v418 = vadd.f32 %v156, %v417
    %v419 = vpop.f32.mrf.mxu0
    %420 = vdwg.mxu0
    %421 = vmatpush.bf16.msra.mxu0 0
    %422 = vmatpush.bf16.msra.mxu0 0
    %423 = vmatpush.bf16.msra.mxu0 0
    %424 = vmatpush.bf16.msra.mxu0 0
    %425 = vmatpush.bf16.msra.mxu0 %v293
    %426 = vmatpush.bf16.msra.mxu0 %v285
    %427 = vmatpush.bf16.msra.mxu0 %v277
    %428 = vmatpush.bf16.msra.mxu0 %v269
    %429 = vmatmul.bf16.gmra.mxu0 %v328
    %v430 = vpop.f32.mrf.mxu0
    %v431 = vadd.f32 %v157, %v430
    %v432 = vpop.f32.mrf.mxu0
    %433 = vdwg.mxu0
    %v434 = vmul.f32 %v340, 0.2
    %v435 = vmul.f32 %v353, 0.2
    %v436 = vmul.f32 %v366, 0.2
    %v437 = vmul.f32 %v379, 0.2
    %v438 = vmul.f32 %v392, 0.2
    %v439 = vmul.f32 %v405, 0.2
    %v440 = vmul.f32 %v418, 0.2
    %v441 = vmul.f32 %v431, 0.2
    %v442 = vmax.f32 %v340, %v434
    %v443 = vmax.f32 %v353, %v435
    %v444 = vmax.f32 %v366, %v436
    %v445 = vmax.f32 %v379, %v437
    %v446 = vmax.f32 %v392, %v438
    %v447 = vmax.f32 %v405, %v439
    %v448 = vmax.f32 %v418, %v440
    %v449 = vmax.f32 %v431, %v441
    %s450 = sxor.u32 %s113, 608135816
    %v451 = vlaneseq
    %v452 = vshrl.u32 %v451, 7
    %v453 = vlaneseq
    %v454 = vand.u32 %v453, 127
    %v455 = vadd.s32 %v454, 128
    %v456 = vadd.s32 %v454, 256
    %v457 = vadd.s32 %v454, 384
    %v458 = vadd.s32 %v454, 512
    %v459 = vadd.s32 %v454, 640
    %v460 = vadd.s32 %v454, 768
    %v461 = vadd.s32 %v454, 896
    %v462 = vmul.u32 %v452, 1024
    %v463 = vadd.s32 %v462, %v454
    %v464 = vadd.s32 %v462, %v455
    %v465 = vadd.s32 %v462, %v456
    %v466 = vadd.s32 %v462, %v457
    %v467 = vadd.s32 %v462, %v458
    %v468 = vadd.s32 %v462, %v459
    %v469 = vadd.s32 %v462, %v460
    %v470 = vadd.s32 %v462, %v461
    %v471 = vstv %s450
    %v472 = vadd.s32 %v463, %v471
    %v473 = vadd.s32 %v464, %v471
    %v474 = vadd.s32 %v465, %v471
    %v475 = vadd.s32 %v466, %v471
    %v476 = vadd.s32 %v467, %v471
    %v477 = vadd.s32 %v468, %v471
    %v478 = vadd.s32 %v469, %v471
    %v479 = vadd.s32 %v470, %v471
    %v480 = vmul.u32 %v472, 2654435769
    %v481 = vmul.u32 %v473, 2654435769
    %v482 = vmul.u32 %v474, 2654435769
    %v483 = vmul.u32 %v475, 2654435769
    %v484 = vmul.u32 %v476, 2654435769
    %v485 = vmul.u32 %v477, 2654435769
    %v486 = vmul.u32 %v478, 2654435769
    %v487 = vmul.u32 %v479, 2654435769
    %v488 = vshrl.u32 %v480, 16
    %v489 = vshrl.u32 %v481, 16
    %v490 = vshrl.u32 %v482, 16
    %v491 = vshrl.u32 %v483, 16
    %v492 = vshrl.u32 %v484, 16
    %v493 = vshrl.u32 %v485, 16
    %v494 = vshrl.u32 %v486, 16
    %v495 = vshrl.u32 %v487, 16
    %v496 = vxor.u32 %v480, %v488
    %v497 = vxor.u32 %v481, %v489
    %v498 = vxor.u32 %v482, %v490
    %v499 = vxor.u32 %v483, %v491
    %v500 = vxor.u32 %v484, %v492
    %v501 = vxor.u32 %v485, %v493
    %v502 = vxor.u32 %v486, %v494
    %v503 = vxor.u32 %v487, %v495
    %v504 = vmul.u32 %v496, 2146121005
    %v505 = vmul.u32 %v497, 2146121005
    %v506 = vmul.u32 %v498, 2146121005
    %v507 = vmul.u32 %v499, 2146121005
    %v508 = vmul.u32 %v500, 2146121005
    %v509 = vmul.u32 %v501, 2146121005
    %v510 = vmul.u32 %v502, 2146121005
    %v511 = vmul.u32 %v503, 2146121005
    %v512 = vshrl.u32 %v504, 15
    %v513 = vshrl.u32 %v505, 15
    %v514 = vshrl.u32 %v506, 15
    %v515 = vshrl.u32 %v507, 15
    %v516 = vshrl.u32 %v508, 15
    %v517 = vshrl.u32 %v509, 15
    %v518 = vshrl.u32 %v510, 15
    %v519 = vshrl.u32 %v511, 15
    %v520 = vxor.u32 %v504, %v512
    %v521 = vxor.u32 %v505, %v513
    %v522 = vxor.u32 %v506, %v514
    %v523 = vxor.u32 %v507, %v515
    %v524 = vxor.u32 %v508, %v516
    %v525 = vxor.u32 %v509, %v517
    %v526 = vxor.u32 %v510, %v518
    %v527 = vxor.u32 %v511, %v519
    %v528 = vmul.u32 %v520, 2221713035
    %v529 = vmul.u32 %v521, 2221713035
    %v530 = vmul.u32 %v522, 2221713035
    %v531 = vmul.u32 %v523, 2221713035
    %v532 = vmul.u32 %v524, 2221713035
    %v533 = vmul.u32 %v525, 2221713035
    %v534 = vmul.u32 %v526, 2221713035
    %v535 = vmul.u32 %v527, 2221713035
    %v536 = vshrl.u32 %v528, 16
    %v537 = vshrl.u32 %v529, 16
    %v538 = vshrl.u32 %v530, 16
    %v539 = vshrl.u32 %v531, 16
    %v540 = vshrl.u32 %v532, 16
    %v541 = vshrl.u32 %v533, 16
    %v542 = vshrl.u32 %v534, 16
    %v543 = vshrl.u32 %v535, 16
    %v544 = vxor.u32 %v528, %v536
    %v545 = vxor.u32 %v529, %v537
    %v546 = vxor.u32 %v530, %v538
    %v547 = vxor.u32 %v531, %v539
    %v548 = vxor.u32 %v532, %v540
    %v549 = vxor.u32 %v533, %v541
    %v550 = vxor.u32 %v534, %v542
    %v551 = vxor.u32 %v535, %v543
    %v552 = vadd.s32 %v544, 2147483648
    %vm554 = vcmp.lt.s32.totalorder %v552, 858993459
    %v555 = vadd.s32 %v545, 2147483648
    %vm557 = vcmp.lt.s32.totalorder %v555, 858993459
    %v558 = vadd.s32 %v546, 2147483648
    %vm560 = vcmp.lt.s32.totalorder %v558, 858993459
    %v561 = vadd.s32 %v547, 2147483648
    %vm563 = vcmp.lt.s32.totalorder %v561, 858993459
    %v564 = vadd.s32 %v548, 2147483648
    %vm566 = vcmp.lt.s32.totalorder %v564, 858993459
    %v567 = vadd.s32 %v549, 2147483648
    %vm569 = vcmp.lt.s32.totalorder %v567, 858993459
    %v570 = vadd.s32 %v550, 2147483648
    %vm572 = vcmp.lt.s32.totalorder %v570, 858993459
    %v573 = vadd.s32 %v551, 2147483648
    %vm575 = vcmp.lt.s32.totalorder %v573, 858993459
    %v576 = vsel %vm554, %v442, 0.0
    %v577 = vsel %vm557, %v443, 0.0
    %v578 = vsel %vm560, %v444, 0.0
    %v579 = vsel %vm563, %v445, 0.0
    %v580 = vsel %vm566, %v446, 0.0
    %v581 = vsel %vm569, %v447, 0.0
    %v582 = vsel %vm572, %v448, 0.0
    %v583 = vsel %vm575, %v449, 0.0
    %v584 = vpack.c.bf16 %v576, %v576
    %v585 = vpack.c.bf16 %v577, %v577
    %v586 = vpack.c.bf16 %v578, %v578
    %v587 = vpack.c.bf16 %v579, %v579
    %v588 = vpack.c.bf16 %v580, %v580
    %v589 = vpack.c.bf16 %v581, %v581
    %v590 = vpack.c.bf16 %v582, %v582
    %v591 = vpack.c.bf16 %v583, %v583
    %v592 = vld [vmem:[#allocation10] sm:$0xff]
    %v593 = vld [vmem:[#allocation10 + $0x8] sm:$0xff]
    %v594 = vld [vmem:[#allocation10 + $0x10] sm:$0xff]
    %v595 = vld [vmem:[#allocation10 + $0x18] sm:$0xff]
    %v596 = vld [vmem:[#allocation10 + $0x20] sm:$0xff]
    %v597 = vld [vmem:[#allocation10 + $0x28] sm:$0xff]
    %v598 = vld [vmem:[#allocation10 + $0x30] sm:$0xff]
    %v599 = vld [vmem:[#allocation10 + $0x38] sm:$0xff]
    %v600 = vld [vmem:[#allocation10 + $0x40] sm:$0xff]
    %v601 = vld [vmem:[#allocation10 + $0x48] sm:$0xff]
    %v602 = vld [vmem:[#allocation10 + $0x50] sm:$0xff]
    %v603 = vld [vmem:[#allocation10 + $0x58] sm:$0xff]
    %v604 = vld [vmem:[#allocation10 + $0x60] sm:$0xff]
    %v605 = vld [vmem:[#allocation10 + $0x68] sm:$0xff]
    %v606 = vld [vmem:[#allocation10 + $0x70] sm:$0xff]
    %v607 = vld [vmem:[#allocation10 + $0x78] sm:$0xff]
    %v608 = vld [vmem:[#allocation10 + $0x80] sm:$0xff]
    %v609 = vld [vmem:[#allocation10 + $0x88] sm:$0xff]
    %v610 = vld [vmem:[#allocation10 + $0x90] sm:$0xff]
    %v611 = vld [vmem:[#allocation10 + $0x98] sm:$0xff]
    %v612 = vld [vmem:[#allocation10 + $0xa0] sm:$0xff]
    %v613 = vld [vmem:[#allocation10 + $0xa8] sm:$0xff]
    %v614 = vld [vmem:[#allocation10 + $0xb0] sm:$0xff]
    %v615 = vld [vmem:[#allocation10 + $0xb8] sm:$0xff]
    %v616 = vld [vmem:[#allocation10 + $0xc0] sm:$0xff]
    %v617 = vld [vmem:[#allocation10 + $0xc8] sm:$0xff]
    %v618 = vld [vmem:[#allocation10 + $0xd0] sm:$0xff]
    %v619 = vld [vmem:[#allocation10 + $0xd8] sm:$0xff]
    %v620 = vld [vmem:[#allocation10 + $0xe0] sm:$0xff]
    %v621 = vld [vmem:[#allocation10 + $0xe8] sm:$0xff]
    %v622 = vld [vmem:[#allocation10 + $0xf0] sm:$0xff]
    %v623 = vld [vmem:[#allocation10 + $0xf8] sm:$0xff]
    %v624 = vld [vmem:[#allocation10 + $0x100] sm:$0xff]
    %v625 = vld [vmem:[#allocation10 + $0x108] sm:$0xff]
    %v626 = vld [vmem:[#allocation10 + $0x110] sm:$0xff]
    %v627 = vld [vmem:[#allocation10 + $0x118] sm:$0xff]
    %v628 = vld [vmem:[#allocation10 + $0x120] sm:$0xff]
    %v629 = vld [vmem:[#allocation10 + $0x128] sm:$0xff]
    %v630 = vld [vmem:[#allocation10 + $0x130] sm:$0xff]
    %v631 = vld [vmem:[#allocation10 + $0x138] sm:$0xff]
    %v632 = vld [vmem:[#allocation10 + $0x140] sm:$0xff]
    %v633 = vld [vmem:[#allocation10 + $0x148] sm:$0xff]
    %v634 = vld [vmem:[#allocation10 + $0x150] sm:$0xff]
    %v635 = vld [vmem:[#allocation10 + $0x158] sm:$0xff]
    %v636 = vld [vmem:[#allocation10 + $0x160] sm:$0xff]
    %v637 = vld [vmem:[#allocation10 + $0x168] sm:$0xff]
    %v638 = vld [vmem:[#allocation10 + $0x170] sm:$0xff]
    %v639 = vld [vmem:[#allocation10 + $0x178] sm:$0xff]
    %v640 = vld [vmem:[#allocation10 + $0x180] sm:$0xff]
    %v641 = vld [vmem:[#allocation10 + $0x188] sm:$0xff]
    %v642 = vld [vmem:[#allocation10 + $0x190] sm:$0xff]
    %v643 = vld [vmem:[#allocation10 + $0x198] sm:$0xff]
    %v644 = vld [vmem:[#allocation10 + $0x1a0] sm:$0xff]
    %v645 = vld [vmem:[#allocation10 + $0x1a8] sm:$0xff]
    %v646 = vld [vmem:[#allocation10 + $0x1b0] sm:$0xff]
    %v647 = vld [vmem:[#allocation10 + $0x1b8] sm:$0xff]
    %v648 = vld [vmem:[#allocation10 + $0x1c0] sm:$0xff]
    %v649 = vld [vmem:[#allocation10 + $0x1c8] sm:$0xff]
    %v650 = vld [vmem:[#allocation10 + $0x1d0] sm:$0xff]
    %v651 = vld [vmem:[#allocation10 + $0x1d8] sm:$0xff]
    %v652 = vld [vmem:[#allocation10 + $0x1e0] sm:$0xff]
    %v653 = vld [vmem:[#allocation10 + $0x1e8] sm:$0xff]
    %v654 = vld [vmem:[#allocation10 + $0x1f0] sm:$0xff]
    %v655 = vld [vmem:[#allocation10 + $0x1f8] sm:$0xff]
    %v656 = vld [vmem:[#allocation10 + $0x200] sm:$0xff]
    %v657 = vld [vmem:[#allocation10 + $0x208] sm:$0xff]
    %v658 = vld [vmem:[#allocation10 + $0x210] sm:$0xff]
    %v659 = vld [vmem:[#allocation10 + $0x218] sm:$0xff]
    %v660 = vld [vmem:[#allocation10 + $0x220] sm:$0xff]
    %v661 = vld [vmem:[#allocation10 + $0x228] sm:$0xff]
    %v662 = vld [vmem:[#allocation10 + $0x230] sm:$0xff]
    %v663 = vld [vmem:[#allocation10 + $0x238] sm:$0xff]
    %v664 = vld [vmem:[#allocation10 + $0x240] sm:$0xff]
    %v665 = vld [vmem:[#allocation10 + $0x248] sm:$0xff]
    %v666 = vld [vmem:[#allocation10 + $0x250] sm:$0xff]
    %v667 = vld [vmem:[#allocation10 + $0x258] sm:$0xff]
    %v668 = vld [vmem:[#allocation10 + $0x260] sm:$0xff]
    %v669 = vld [vmem:[#allocation10 + $0x268] sm:$0xff]
    %v670 = vld [vmem:[#allocation10 + $0x270] sm:$0xff]
    %v671 = vld [vmem:[#allocation10 + $0x278] sm:$0xff]
    %v672 = vld [vmem:[#allocation10 + $0x280] sm:$0xff]
    %v673 = vld [vmem:[#allocation10 + $0x288] sm:$0xff]
    %v674 = vld [vmem:[#allocation10 + $0x290] sm:$0xff]
    %v675 = vld [vmem:[#allocation10 + $0x298] sm:$0xff]
    %v676 = vld [vmem:[#allocation10 + $0x2a0] sm:$0xff]
    %v677 = vld [vmem:[#allocation10 + $0x2a8] sm:$0xff]
    %v678 = vld [vmem:[#allocation10 + $0x2b0] sm:$0xff]
    %v679 = vld [vmem:[#allocation10 + $0x2b8] sm:$0xff]
    %v680 = vld [vmem:[#allocation10 + $0x2c0] sm:$0xff]
    %v681 = vld [vmem:[#allocation10 + $0x2c8] sm:$0xff]
    %v682 = vld [vmem:[#allocation10 + $0x2d0] sm:$0xff]
    %v683 = vld [vmem:[#allocation10 + $0x2d8] sm:$0xff]
    %v684 = vld [vmem:[#allocation10 + $0x2e0] sm:$0xff]
    %v685 = vld [vmem:[#allocation10 + $0x2e8] sm:$0xff]
    %v686 = vld [vmem:[#allocation10 + $0x2f0] sm:$0xff]
    %v687 = vld [vmem:[#allocation10 + $0x2f8] sm:$0xff]
    %v688 = vld [vmem:[#allocation10 + $0x300] sm:$0xff]
    %v689 = vld [vmem:[#allocation10 + $0x308] sm:$0xff]
    %v690 = vld [vmem:[#allocation10 + $0x310] sm:$0xff]
    %v691 = vld [vmem:[#allocation10 + $0x318] sm:$0xff]
    %v692 = vld [vmem:[#allocation10 + $0x320] sm:$0xff]
    %v693 = vld [vmem:[#allocation10 + $0x328] sm:$0xff]
    %v694 = vld [vmem:[#allocation10 + $0x330] sm:$0xff]
    %v695 = vld [vmem:[#allocation10 + $0x338] sm:$0xff]
    %v696 = vld [vmem:[#allocation10 + $0x340] sm:$0xff]
    %v697 = vld [vmem:[#allocation10 + $0x348] sm:$0xff]
    %v698 = vld [vmem:[#allocation10 + $0x350] sm:$0xff]
    %v699 = vld [vmem:[#allocation10 + $0x358] sm:$0xff]
    %v700 = vld [vmem:[#allocation10 + $0x360] sm:$0xff]
    %v701 = vld [vmem:[#allocation10 + $0x368] sm:$0xff]
    %v702 = vld [vmem:[#allocation10 + $0x370] sm:$0xff]
    %v703 = vld [vmem:[#allocation10 + $0x378] sm:$0xff]
    %v704 = vld [vmem:[#allocation10 + $0x380] sm:$0xff]
    %v705 = vld [vmem:[#allocation10 + $0x388] sm:$0xff]
    %v706 = vld [vmem:[#allocation10 + $0x390] sm:$0xff]
    %v707 = vld [vmem:[#allocation10 + $0x398] sm:$0xff]
    %v708 = vld [vmem:[#allocation10 + $0x3a0] sm:$0xff]
    %v709 = vld [vmem:[#allocation10 + $0x3a8] sm:$0xff]
    %v710 = vld [vmem:[#allocation10 + $0x3b0] sm:$0xff]
    %v711 = vld [vmem:[#allocation10 + $0x3b8] sm:$0xff]
    %v712 = vld [vmem:[#allocation10 + $0x3c0] sm:$0xff]
    %v713 = vld [vmem:[#allocation10 + $0x3c8] sm:$0xff]
    %v714 = vld [vmem:[#allocation10 + $0x3d0] sm:$0xff]
    %v715 = vld [vmem:[#allocation10 + $0x3d8] sm:$0xff]
    %v716 = vld [vmem:[#allocation10 + $0x3e0] sm:$0xff]
    %v717 = vld [vmem:[#allocation10 + $0x3e8] sm:$0xff]
    %v718 = vld [vmem:[#allocation10 + $0x3f0] sm:$0xff]
    %v719 = vld [vmem:[#allocation10 + $0x3f8] sm:$0xff]
    %v720 = vld [vmem:[#allocation10 + $0x400] sm:$0xff]
    %v721 = vld [vmem:[#allocation10 + $0x408] sm:$0xff]
    %v722 = vld [vmem:[#allocation10 + $0x410] sm:$0xff]
    %v723 = vld [vmem:[#allocation10 + $0x418] sm:$0xff]
    %v724 = vld [vmem:[#allocation10 + $0x420] sm:$0xff]
    %v725 = vld [vmem:[#allocation10 + $0x428] sm:$0xff]
    %v726 = vld [vmem:[#allocation10 + $0x430] sm:$0xff]
    %v727 = vld [vmem:[#allocation10 + $0x438] sm:$0xff]
    %v728 = vld [vmem:[#allocation10 + $0x440] sm:$0xff]
    %v729 = vld [vmem:[#allocation10 + $0x448] sm:$0xff]
    %v730 = vld [vmem:[#allocation10 + $0x450] sm:$0xff]
    %v731 = vld [vmem:[#allocation10 + $0x458] sm:$0xff]
    %v732 = vld [vmem:[#allocation10 + $0x460] sm:$0xff]
    %v733 = vld [vmem:[#allocation10 + $0x468] sm:$0xff]
    %v734 = vld [vmem:[#allocation10 + $0x470] sm:$0xff]
    %v735 = vld [vmem:[#allocation10 + $0x478] sm:$0xff]
    %v736 = vld [vmem:[#allocation10 + $0x480] sm:$0xff]
    %v737 = vld [vmem:[#allocation10 + $0x488] sm:$0xff]
    %v738 = vld [vmem:[#allocation10 + $0x490] sm:$0xff]
    %v739 = vld [vmem:[#allocation10 + $0x498] sm:$0xff]
    %v740 = vld [vmem:[#allocation10 + $0x4a0] sm:$0xff]
    %v741 = vld [vmem:[#allocation10 + $0x4a8] sm:$0xff]
    %v742 = vld [vmem:[#allocation10 + $0x4b0] sm:$0xff]
    %v743 = vld [vmem:[#allocation10 + $0x4b8] sm:$0xff]
    %v744 = vld [vmem:[#allocation10 + $0x4c0] sm:$0xff]
    %v745 = vld [vmem:[#allocation10 + $0x4c8] sm:$0xff]
    %v746 = vld [vmem:[#allocation10 + $0x4d0] sm:$0xff]
    %v747 = vld [vmem:[#allocation10 + $0x4d8] sm:$0xff]
    %v748 = vld [vmem:[#allocation10 + $0x4e0] sm:$0xff]
    %v749 = vld [vmem:[#allocation10 + $0x4e8] sm:$0xff]
    %v750 = vld [vmem:[#allocation10 + $0x4f0] sm:$0xff]
    %v751 = vld [vmem:[#allocation10 + $0x4f8] sm:$0xff]
    %v752 = vld [vmem:[#allocation10 + $0x500] sm:$0xff]
    %v753 = vld [vmem:[#allocation10 + $0x508] sm:$0xff]
    %v754 = vld [vmem:[#allocation10 + $0x510] sm:$0xff]
    %v755 = vld [vmem:[#allocation10 + $0x518] sm:$0xff]
    %v756 = vld [vmem:[#allocation10 + $0x520] sm:$0xff]
    %v757 = vld [vmem:[#allocation10 + $0x528] sm:$0xff]
    %v758 = vld [vmem:[#allocation10 + $0x530] sm:$0xff]
    %v759 = vld [vmem:[#allocation10 + $0x538] sm:$0xff]
    %v760 = vld [vmem:[#allocation10 + $0x540] sm:$0xff]
    %v761 = vld [vmem:[#allocation10 + $0x548] sm:$0xff]
    %v762 = vld [vmem:[#allocation10 + $0x550] sm:$0xff]
    %v763 = vld [vmem:[#allocation10 + $0x558] sm:$0xff]
    %v764 = vld [vmem:[#allocation10 + $0x560] sm:$0xff]
    %v765 = vld [vmem:[#allocation10 + $0x568] sm:$0xff]
    %v766 = vld [vmem:[#allocation10 + $0x570] sm:$0xff]
    %v767 = vld [vmem:[#allocation10 + $0x578] sm:$0xff]
    %v768 = vld [vmem:[#allocation10 + $0x580] sm:$0xff]
    %v769 = vld [vmem:[#allocation10 + $0x588] sm:$0xff]
    %v770 = vld [vmem:[#allocation10 + $0x590] sm:$0xff]
    %v771 = vld [vmem:[#allocation10 + $0x598] sm:$0xff]
    %v772 = vld [vmem:[#allocation10 + $0x5a0] sm:$0xff]
    %v773 = vld [vmem:[#allocation10 + $0x5a8] sm:$0xff]
    %v774 = vld [vmem:[#allocation10 + $0x5b0] sm:$0xff]
    %v775 = vld [vmem:[#allocation10 + $0x5b8] sm:$0xff]
    %v776 = vld [vmem:[#allocation10 + $0x5c0] sm:$0xff]
    %v777 = vld [vmem:[#allocation10 + $0x5c8] sm:$0xff]
    %v778 = vld [vmem:[#allocation10 + $0x5d0] sm:$0xff]
    %v779 = vld [vmem:[#allocation10 + $0x5d8] sm:$0xff]
    %v780 = vld [vmem:[#allocation10 + $0x5e0] sm:$0xff]
    %v781 = vld [vmem:[#allocation10 + $0x5e8] sm:$0xff]
    %v782 = vld [vmem:[#allocation10 + $0x5f0] sm:$0xff]
    %v783 = vld [vmem:[#allocation10 + $0x5f8] sm:$0xff]
    %v784 = vld [vmem:[#allocation10 + $0x600] sm:$0xff]
    %v785 = vld [vmem:[#allocation10 + $0x608] sm:$0xff]
    %v786 = vld [vmem:[#allocation10 + $0x610] sm:$0xff]
    %v787 = vld [vmem:[#allocation10 + $0x618] sm:$0xff]
    %v788 = vld [vmem:[#allocation10 + $0x620] sm:$0xff]
    %v789 = vld [vmem:[#allocation10 + $0x628] sm:$0xff]
    %v790 = vld [vmem:[#allocation10 + $0x630] sm:$0xff]
    %v791 = vld [vmem:[#allocation10 + $0x638] sm:$0xff]
    %v792 = vld [vmem:[#allocation10 + $0x640] sm:$0xff]
    %v793 = vld [vmem:[#allocation10 + $0x648] sm:$0xff]
    %v794 = vld [vmem:[#allocation10 + $0x650] sm:$0xff]
    %v795 = vld [vmem:[#allocation10 + $0x658] sm:$0xff]
    %v796 = vld [vmem:[#allocation10 + $0x660] sm:$0xff]
    %v797 = vld [vmem:[#allocation10 + $0x668] sm:$0xff]
    %v798 = vld [vmem:[#allocation10 + $0x670] sm:$0xff]
    %v799 = vld [vmem:[#allocation10 + $0x678] sm:$0xff]
    %v800 = vld [vmem:[#allocation10 + $0x680] sm:$0xff]
    %v801 = vld [vmem:[#allocation10 + $0x688] sm:$0xff]
    %v802 = vld [vmem:[#allocation10 + $0x690] sm:$0xff]
    %v803 = vld [vmem:[#allocation10 + $0x698] sm:$0xff]
    %v804 = vld [vmem:[#allocation10 + $0x6a0] sm:$0xff]
    %v805 = vld [vmem:[#allocation10 + $0x6a8] sm:$0xff]
    %v806 = vld [vmem:[#allocation10 + $0x6b0] sm:$0xff]
    %v807 = vld [vmem:[#allocation10 + $0x6b8] sm:$0xff]
    %v808 = vld [vmem:[#allocation10 + $0x6c0] sm:$0xff]
    %v809 = vld [vmem:[#allocation10 + $0x6c8] sm:$0xff]
    %v810 = vld [vmem:[#allocation10 + $0x6d0] sm:$0xff]
    %v811 = vld [vmem:[#allocation10 + $0x6d8] sm:$0xff]
    %v812 = vld [vmem:[#allocation10 + $0x6e0] sm:$0xff]
    %v813 = vld [vmem:[#allocation10 + $0x6e8] sm:$0xff]
    %v814 = vld [vmem:[#allocation10 + $0x6f0] sm:$0xff]
    %v815 = vld [vmem:[#allocation10 + $0x6f8] sm:$0xff]
    %v816 = vld [vmem:[#allocation10 + $0x700] sm:$0xff]
    %v817 = vld [vmem:[#allocation10 + $0x708] sm:$0xff]
    %v818 = vld [vmem:[#allocation10 + $0x710] sm:$0xff]
    %v819 = vld [vmem:[#allocation10 + $0x718] sm:$0xff]
    %v820 = vld [vmem:[#allocation10 + $0x720] sm:$0xff]
    %v821 = vld [vmem:[#allocation10 + $0x728] sm:$0xff]
    %v822 = vld [vmem:[#allocation10 + $0x730] sm:$0xff]
    %v823 = vld [vmem:[#allocation10 + $0x738] sm:$0xff]
    %v824 = vld [vmem:[#allocation10 + $0x740] sm:$0xff]
    %v825 = vld [vmem:[#allocation10 + $0x748] sm:$0xff]
    %v826 = vld [vmem:[#allocation10 + $0x750] sm:$0xff]
    %v827 = vld [vmem:[#allocation10 + $0x758] sm:$0xff]
    %v828 = vld [vmem:[#allocation10 + $0x760] sm:$0xff]
    %v829 = vld [vmem:[#allocation10 + $0x768] sm:$0xff]
    %v830 = vld [vmem:[#allocation10 + $0x770] sm:$0xff]
    %v831 = vld [vmem:[#allocation10 + $0x778] sm:$0xff]
    %v832 = vld [vmem:[#allocation10 + $0x780] sm:$0xff]
    %v833 = vld [vmem:[#allocation10 + $0x788] sm:$0xff]
    %v834 = vld [vmem:[#allocation10 + $0x790] sm:$0xff]
    %v835 = vld [vmem:[#allocation10 + $0x798] sm:$0xff]
    %v836 = vld [vmem:[#allocation10 + $0x7a0] sm:$0xff]
    %v837 = vld [vmem:[#allocation10 + $0x7a8] sm:$0xff]
    %v838 = vld [vmem:[#allocation10 + $0x7b0] sm:$0xff]
    %v839 = vld [vmem:[#allocation10 + $0x7b8] sm:$0xff]
    %v840 = vld [vmem:[#allocation10 + $0x7c0] sm:$0xff]
    %v841 = vld [vmem:[#allocation10 + $0x7c8] sm:$0xff]
    %v842 = vld [vmem:[#allocation10 + $0x7d0] sm:$0xff]
    %v843 = vld [vmem:[#allocation10 + $0x7d8] sm:$0xff]
    %v844 = vld [vmem:[#allocation10 + $0x7e0] sm:$0xff]
    %v845 = vld [vmem:[#allocation10 + $0x7e8] sm:$0xff]
    %v846 = vld [vmem:[#allocation10 + $0x7f0] sm:$0xff]
    %v847 = vld [vmem:[#allocation10 + $0x7f8] sm:$0xff]
    %v848 = vld [vmem:[%s5] sm:$0xf]
    %v850 = vperm.slane %v848, 0
    %v851 = vperm.slane %v848, 1
    %v852 = vperm.slane %v848, 2
    %v853 = vperm.slane %v848, 3
    %v1114 = vunpack.c.l.b16 %v592
    %v1115 = vunpack.c.h.b16 %v592
    %v1116 = vunpack.c.l.b16 %v593
    %v1117 = vunpack.c.h.b16 %v593
    %v1118 = vunpack.c.l.b16 %v594
    %v1119 = vunpack.c.h.b16 %v594
    %v1120 = vunpack.c.l.b16 %v595
    %v1121 = vunpack.c.h.b16 %v595
    %v1122 = vunpack.c.l.b16 %v596
    %v1123 = vunpack.c.h.b16 %v596
    %v1124 = vunpack.c.l.b16 %v597
    %v1125 = vunpack.c.h.b16 %v597
    %v1126 = vunpack.c.l.b16 %v598
    %v1127 = vunpack.c.h.b16 %v598
    %v1128 = vunpack.c.l.b16 %v599
    %v1129 = vunpack.c.h.b16 %v599
    %v1130 = vunpack.c.l.b16 %v600
    %v1131 = vunpack.c.h.b16 %v600
    %v1132 = vunpack.c.l.b16 %v601
    %v1133 = vunpack.c.h.b16 %v601
    %v1134 = vunpack.c.l.b16 %v602
    %v1135 = vunpack.c.h.b16 %v602
    %v1136 = vunpack.c.l.b16 %v603
    %v1137 = vunpack.c.h.b16 %v603
    %v1138 = vunpack.c.l.b16 %v604
    %v1139 = vunpack.c.h.b16 %v604
    %v1140 = vunpack.c.l.b16 %v605
    %v1141 = vunpack.c.h.b16 %v605
    %v1142 = vunpack.c.l.b16 %v606
    %v1143 = vunpack.c.h.b16 %v606
    %v1144 = vunpack.c.l.b16 %v607
    %v1145 = vunpack.c.h.b16 %v607
    %v1146 = vunpack.c.l.b16 %v608
    %v1147 = vunpack.c.h.b16 %v608
    %v1148 = vunpack.c.l.b16 %v609
    %v1149 = vunpack.c.h.b16 %v609
    %v1150 = vunpack.c.l.b16 %v610
    %v1151 = vunpack.c.h.b16 %v610
    %v1152 = vunpack.c.l.b16 %v611
    %v1153 = vunpack.c.h.b16 %v611
    %v1154 = vunpack.c.l.b16 %v612
    %v1155 = vunpack.c.h.b16 %v612
    %v1156 = vunpack.c.l.b16 %v613
    %v1157 = vunpack.c.h.b16 %v613
    %v1158 = vunpack.c.l.b16 %v614
    %v1159 = vunpack.c.h.b16 %v614
    %v1160 = vunpack.c.l.b16 %v615
    %v1161 = vunpack.c.h.b16 %v615
    %v1162 = vunpack.c.l.b16 %v616
    %v1163 = vunpack.c.h.b16 %v616
    %v1164 = vunpack.c.l.b16 %v617
    %v1165 = vunpack.c.h.b16 %v617
    %v1166 = vunpack.c.l.b16 %v618
    %v1167 = vunpack.c.h.b16 %v618
    %v1168 = vunpack.c.l.b16 %v619
    %v1169 = vunpack.c.h.b16 %v619
    %v1170 = vunpack.c.l.b16 %v620
    %v1171 = vunpack.c.h.b16 %v620
    %v1172 = vunpack.c.l.b16 %v621
    %v1173 = vunpack.c.h.b16 %v621
    %v1174 = vunpack.c.l.b16 %v622
    %v1175 = vunpack.c.h.b16 %v622
    %v1176 = vunpack.c.l.b16 %v623
    %v1177 = vunpack.c.h.b16 %v623
    %v1178 = vunpack.c.l.b16 %v624
    %v1179 = vunpack.c.h.b16 %v624
    %v1180 = vunpack.c.l.b16 %v625
    %v1181 = vunpack.c.h.b16 %v625
    %v1182 = vunpack.c.l.b16 %v626
    %v1183 = vunpack.c.h.b16 %v626
    %v1184 = vunpack.c.l.b16 %v627
    %v1185 = vunpack.c.h.b16 %v627
    %v1186 = vunpack.c.l.b16 %v628
    %v1187 = vunpack.c.h.b16 %v628
    %v1188 = vunpack.c.l.b16 %v629
    %v1189 = vunpack.c.h.b16 %v629
    %v1190 = vunpack.c.l.b16 %v630
    %v1191 = vunpack.c.h.b16 %v630
    %v1192 = vunpack.c.l.b16 %v631
    %v1193 = vunpack.c.h.b16 %v631
    %v1194 = vunpack.c.l.b16 %v632
    %v1195 = vunpack.c.h.b16 %v632
    %v1196 = vunpack.c.l.b16 %v633
    %v1197 = vunpack.c.h.b16 %v633
    %v1198 = vunpack.c.l.b16 %v634
    %v1199 = vunpack.c.h.b16 %v634
    %v1200 = vunpack.c.l.b16 %v635
    %v1201 = vunpack.c.h.b16 %v635
    %v1202 = vunpack.c.l.b16 %v636
    %v1203 = vunpack.c.h.b16 %v636
    %v1204 = vunpack.c.l.b16 %v637
    %v1205 = vunpack.c.h.b16 %v637
    %v1206 = vunpack.c.l.b16 %v638
    %v1207 = vunpack.c.h.b16 %v638
    %v1208 = vunpack.c.l.b16 %v639
    %v1209 = vunpack.c.h.b16 %v639
    %v1210 = vunpack.c.l.b16 %v640
    %v1211 = vunpack.c.h.b16 %v640
    %v1212 = vunpack.c.l.b16 %v641
    %v1213 = vunpack.c.h.b16 %v641
    %v1214 = vunpack.c.l.b16 %v642
    %v1215 = vunpack.c.h.b16 %v642
    %v1216 = vunpack.c.l.b16 %v643
    %v1217 = vunpack.c.h.b16 %v643
    %v1218 = vunpack.c.l.b16 %v644
    %v1219 = vunpack.c.h.b16 %v644
    %v1220 = vunpack.c.l.b16 %v645
    %v1221 = vunpack.c.h.b16 %v645
    %v1222 = vunpack.c.l.b16 %v646
    %v1223 = vunpack.c.h.b16 %v646
    %v1224 = vunpack.c.l.b16 %v647
    %v1225 = vunpack.c.h.b16 %v647
    %v1226 = vunpack.c.l.b16 %v648
    %v1227 = vunpack.c.h.b16 %v648
    %v1228 = vunpack.c.l.b16 %v649
    %v1229 = vunpack.c.h.b16 %v649
    %v1230 = vunpack.c.l.b16 %v650
    %v1231 = vunpack.c.h.b16 %v650
    %v1232 = vunpack.c.l.b16 %v651
    %v1233 = vunpack.c.h.b16 %v651
    %v1234 = vunpack.c.l.b16 %v652
    %v1235 = vunpack.c.h.b16 %v652
    %v1236 = vunpack.c.l.b16 %v653
    %v1237 = vunpack.c.h.b16 %v653
    %v1238 = vunpack.c.l.b16 %v654
    %v1239 = vunpack.c.h.b16 %v654
    %v1240 = vunpack.c.l.b16 %v655
    %v1241 = vunpack.c.h.b16 %v655
    %v1242 = vunpack.c.l.b16 %v656
    %v1243 = vunpack.c.h.b16 %v656
    %v1244 = vunpack.c.l.b16 %v657
    %v1245 = vunpack.c.h.b16 %v657
    %v1246 = vunpack.c.l.b16 %v658
    %v1247 = vunpack.c.h.b16 %v658
    %v1248 = vunpack.c.l.b16 %v659
    %v1249 = vunpack.c.h.b16 %v659
    %v1250 = vunpack.c.l.b16 %v660
    %v1251 = vunpack.c.h.b16 %v660
    %v1252 = vunpack.c.l.b16 %v661
    %v1253 = vunpack.c.h.b16 %v661
    %v1254 = vunpack.c.l.b16 %v662
    %v1255 = vunpack.c.h.b16 %v662
    %v1256 = vunpack.c.l.b16 %v663
    %v1257 = vunpack.c.h.b16 %v663
    %v1258 = vunpack.c.l.b16 %v664
    %v1259 = vunpack.c.h.b16 %v664
    %v1260 = vunpack.c.l.b16 %v665
    %v1261 = vunpack.c.h.b16 %v665
    %v1262 = vunpack.c.l.b16 %v666
    %v1263 = vunpack.c.h.b16 %v666
    %v1264 = vunpack.c.l.b16 %v667
    %v1265 = vunpack.c.h.b16 %v667
    %v1266 = vunpack.c.l.b16 %v668
    %v1267 = vunpack.c.h.b16 %v668
    %v1268 = vunpack.c.l.b16 %v669
    %v1269 = vunpack.c.h.b16 %v669
    %v1270 = vunpack.c.l.b16 %v670
    %v1271 = vunpack.c.h.b16 %v670
    %v1272 = vunpack.c.l.b16 %v671
    %v1273 = vunpack.c.h.b16 %v671
    %v1274 = vunpack.c.l.b16 %v672
    %v1275 = vunpack.c.h.b16 %v672
    %v1276 = vunpack.c.l.b16 %v673
    %v1277 = vunpack.c.h.b16 %v673
    %v1278 = vunpack.c.l.b16 %v674
    %v1279 = vunpack.c.h.b16 %v674
    %v1280 = vunpack.c.l.b16 %v675
    %v1281 = vunpack.c.h.b16 %v675
    %v1282 = vunpack.c.l.b16 %v676
    %v1283 = vunpack.c.h.b16 %v676
    %v1284 = vunpack.c.l.b16 %v677
    %v1285 = vunpack.c.h.b16 %v677
    %v1286 = vunpack.c.l.b16 %v678
    %v1287 = vunpack.c.h.b16 %v678
    %v1288 = vunpack.c.l.b16 %v679
    %v1289 = vunpack.c.h.b16 %v679
    %v1290 = vunpack.c.l.b16 %v680
    %v1291 = vunpack.c.h.b16 %v680
    %v1292 = vunpack.c.l.b16 %v681
    %v1293 = vunpack.c.h.b16 %v681
    %v1294 = vunpack.c.l.b16 %v682
    %v1295 = vunpack.c.h.b16 %v682
    %v1296 = vunpack.c.l.b16 %v683
    %v1297 = vunpack.c.h.b16 %v683
    %v1298 = vunpack.c.l.b16 %v684
    %v1299 = vunpack.c.h.b16 %v684
    %v1300 = vunpack.c.l.b16 %v685
    %v1301 = vunpack.c.h.b16 %v685
    %v1302 = vunpack.c.l.b16 %v686
    %v1303 = vunpack.c.h.b16 %v686
    %v1304 = vunpack.c.l.b16 %v687
    %v1305 = vunpack.c.h.b16 %v687
    %v1306 = vunpack.c.l.b16 %v688
    %v1307 = vunpack.c.h.b16 %v688
    %v1308 = vunpack.c.l.b16 %v689
    %v1309 = vunpack.c.h.b16 %v689
    %v1310 = vunpack.c.l.b16 %v690
    %v1311 = vunpack.c.h.b16 %v690
    %v1312 = vunpack.c.l.b16 %v691
    %v1313 = vunpack.c.h.b16 %v691
    %v1314 = vunpack.c.l.b16 %v692
    %v1315 = vunpack.c.h.b16 %v692
    %v1316 = vunpack.c.l.b16 %v693
    %v1317 = vunpack.c.h.b16 %v693
    %v1318 = vunpack.c.l.b16 %v694
    %v1319 = vunpack.c.h.b16 %v694
    %v1320 = vunpack.c.l.b16 %v695
    %v1321 = vunpack.c.h.b16 %v695
    %v1322 = vunpack.c.l.b16 %v696
    %v1323 = vunpack.c.h.b16 %v696
    %v1324 = vunpack.c.l.b16 %v697
    %v1325 = vunpack.c.h.b16 %v697
    %v1326 = vunpack.c.l.b16 %v698
    %v1327 = vunpack.c.h.b16 %v698
    %v1328 = vunpack.c.l.b16 %v699
    %v1329 = vunpack.c.h.b16 %v699
    %v1330 = vunpack.c.l.b16 %v700
    %v1331 = vunpack.c.h.b16 %v700
    %v1332 = vunpack.c.l.b16 %v701
    %v1333 = vunpack.c.h.b16 %v701
    %v1334 = vunpack.c.l.b16 %v702
    %v1335 = vunpack.c.h.b16 %v702
    %v1336 = vunpack.c.l.b16 %v703
    %v1337 = vunpack.c.h.b16 %v703
    %v1338 = vunpack.c.l.b16 %v704
    %v1339 = vunpack.c.h.b16 %v704
    %v1340 = vunpack.c.l.b16 %v705
    %v1341 = vunpack.c.h.b16 %v705
    %v1342 = vunpack.c.l.b16 %v706
    %v1343 = vunpack.c.h.b16 %v706
    %v1344 = vunpack.c.l.b16 %v707
    %v1345 = vunpack.c.h.b16 %v707
    %v1346 = vunpack.c.l.b16 %v708
    %v1347 = vunpack.c.h.b16 %v708
    %v1348 = vunpack.c.l.b16 %v709
    %v1349 = vunpack.c.h.b16 %v709
    %v1350 = vunpack.c.l.b16 %v710
    %v1351 = vunpack.c.h.b16 %v710
    %v1352 = vunpack.c.l.b16 %v711
    %v1353 = vunpack.c.h.b16 %v711
    %v1354 = vunpack.c.l.b16 %v712
    %v1355 = vunpack.c.h.b16 %v712
    %v1356 = vunpack.c.l.b16 %v713
    %v1357 = vunpack.c.h.b16 %v713
    %v1358 = vunpack.c.l.b16 %v714
    %v1359 = vunpack.c.h.b16 %v714
    %v1360 = vunpack.c.l.b16 %v715
    %v1361 = vunpack.c.h.b16 %v715
    %v1362 = vunpack.c.l.b16 %v716
    %v1363 = vunpack.c.h.b16 %v716
    %v1364 = vunpack.c.l.b16 %v717
    %v1365 = vunpack.c.h.b16 %v717
    %v1366 = vunpack.c.l.b16 %v718
    %v1367 = vunpack.c.h.b16 %v718
    %v1368 = vunpack.c.l.b16 %v719
    %v1369 = vunpack.c.h.b16 %v719
    %v1370 = vunpack.c.l.b16 %v720
    %v1371 = vunpack.c.h.b16 %v720
    %v1372 = vunpack.c.l.b16 %v721
    %v1373 = vunpack.c.h.b16 %v721
    %v1374 = vunpack.c.l.b16 %v722
    %v1375 = vunpack.c.h.b16 %v722
    %v1376 = vunpack.c.l.b16 %v723
    %v1377 = vunpack.c.h.b16 %v723
    %v1378 = vunpack.c.l.b16 %v724
    %v1379 = vunpack.c.h.b16 %v724
    %v1380 = vunpack.c.l.b16 %v725
    %v1381 = vunpack.c.h.b16 %v725
    %v1382 = vunpack.c.l.b16 %v726
    %v1383 = vunpack.c.h.b16 %v726
    %v1384 = vunpack.c.l.b16 %v727
    %v1385 = vunpack.c.h.b16 %v727
    %v1386 = vunpack.c.l.b16 %v728
    %v1387 = vunpack.c.h.b16 %v728
    %v1388 = vunpack.c.l.b16 %v729
    %v1389 = vunpack.c.h.b16 %v729
    %v1390 = vunpack.c.l.b16 %v730
    %v1391 = vunpack.c.h.b16 %v730
    %v1392 = vunpack.c.l.b16 %v731
    %v1393 = vunpack.c.h.b16 %v731
    %v1394 = vunpack.c.l.b16 %v732
    %v1395 = vunpack.c.h.b16 %v732
    %v1396 = vunpack.c.l.b16 %v733
    %v1397 = vunpack.c.h.b16 %v733
    %v1398 = vunpack.c.l.b16 %v734
    %v1399 = vunpack.c.h.b16 %v734
    %v1400 = vunpack.c.l.b16 %v735
    %v1401 = vunpack.c.h.b16 %v735
    %v1402 = vunpack.c.l.b16 %v736
    %v1403 = vunpack.c.h.b16 %v736
    %v1404 = vunpack.c.l.b16 %v737
    %v1405 = vunpack.c.h.b16 %v737
    %v1406 = vunpack.c.l.b16 %v738
    %v1407 = vunpack.c.h.b16 %v738
    %v1408 = vunpack.c.l.b16 %v739
    %v1409 = vunpack.c.h.b16 %v739
    %v1410 = vunpack.c.l.b16 %v740
    %v1411 = vunpack.c.h.b16 %v740
    %v1412 = vunpack.c.l.b16 %v741
    %v1413 = vunpack.c.h.b16 %v741
    %v1414 = vunpack.c.l.b16 %v742
    %v1415 = vunpack.c.h.b16 %v742
    %v1416 = vunpack.c.l.b16 %v743
    %v1417 = vunpack.c.h.b16 %v743
    %v1418 = vunpack.c.l.b16 %v744
    %v1419 = vunpack.c.h.b16 %v744
    %v1420 = vunpack.c.l.b16 %v745
    %v1421 = vunpack.c.h.b16 %v745
    %v1422 = vunpack.c.l.b16 %v746
    %v1423 = vunpack.c.h.b16 %v746
    %v1424 = vunpack.c.l.b16 %v747
    %v1425 = vunpack.c.h.b16 %v747
    %v1426 = vunpack.c.l.b16 %v748
    %v1427 = vunpack.c.h.b16 %v748
    %v1428 = vunpack.c.l.b16 %v749
    %v1429 = vunpack.c.h.b16 %v749
    %v1430 = vunpack.c.l.b16 %v750
    %v1431 = vunpack.c.h.b16 %v750
    %v1432 = vunpack.c.l.b16 %v751
    %v1433 = vunpack.c.h.b16 %v751
    %v1434 = vunpack.c.l.b16 %v752
    %v1435 = vunpack.c.h.b16 %v752
    %v1436 = vunpack.c.l.b16 %v753
    %v1437 = vunpack.c.h.b16 %v753
    %v1438 = vunpack.c.l.b16 %v754
    %v1439 = vunpack.c.h.b16 %v754
    %v1440 = vunpack.c.l.b16 %v755
    %v1441 = vunpack.c.h.b16 %v755
    %v1442 = vunpack.c.l.b16 %v756
    %v1443 = vunpack.c.h.b16 %v756
    %v1444 = vunpack.c.l.b16 %v757
    %v1445 = vunpack.c.h.b16 %v757
    %v1446 = vunpack.c.l.b16 %v758
    %v1447 = vunpack.c.h.b16 %v758
    %v1448 = vunpack.c.l.b16 %v759
    %v1449 = vunpack.c.h.b16 %v759
    %v1450 = vunpack.c.l.b16 %v760
    %v1451 = vunpack.c.h.b16 %v760
    %v1452 = vunpack.c.l.b16 %v761
    %v1453 = vunpack.c.h.b16 %v761
    %v1454 = vunpack.c.l.b16 %v762
    %v1455 = vunpack.c.h.b16 %v762
    %v1456 = vunpack.c.l.b16 %v763
    %v1457 = vunpack.c.h.b16 %v763
    %v1458 = vunpack.c.l.b16 %v764
    %v1459 = vunpack.c.h.b16 %v764
    %v1460 = vunpack.c.l.b16 %v765
    %v1461 = vunpack.c.h.b16 %v765
    %v1462 = vunpack.c.l.b16 %v766
    %v1463 = vunpack.c.h.b16 %v766
    %v1464 = vunpack.c.l.b16 %v767
    %v1465 = vunpack.c.h.b16 %v767
    %v1466 = vunpack.c.l.b16 %v768
    %v1467 = vunpack.c.h.b16 %v768
    %v1468 = vunpack.c.l.b16 %v769
    %v1469 = vunpack.c.h.b16 %v769
    %v1470 = vunpack.c.l.b16 %v770
    %v1471 = vunpack.c.h.b16 %v770
    %v1472 = vunpack.c.l.b16 %v771
    %v1473 = vunpack.c.h.b16 %v771
    %v1474 = vunpack.c.l.b16 %v772
    %v1475 = vunpack.c.h.b16 %v772
    %v1476 = vunpack.c.l.b16 %v773
    %v1477 = vunpack.c.h.b16 %v773
    %v1478 = vunpack.c.l.b16 %v774
    %v1479 = vunpack.c.h.b16 %v774
    %v1480 = vunpack.c.l.b16 %v775
    %v1481 = vunpack.c.h.b16 %v775
    %v1482 = vunpack.c.l.b16 %v776
    %v1483 = vunpack.c.h.b16 %v776
    %v1484 = vunpack.c.l.b16 %v777
    %v1485 = vunpack.c.h.b16 %v777
    %v1486 = vunpack.c.l.b16 %v778
    %v1487 = vunpack.c.h.b16 %v778
    %v1488 = vunpack.c.l.b16 %v779
    %v1489 = vunpack.c.h.b16 %v779
    %v1490 = vunpack.c.l.b16 %v780
    %v1491 = vunpack.c.h.b16 %v780
    %v1492 = vunpack.c.l.b16 %v781
    %v1493 = vunpack.c.h.b16 %v781
    %v1494 = vunpack.c.l.b16 %v782
    %v1495 = vunpack.c.h.b16 %v782
    %v1496 = vunpack.c.l.b16 %v783
    %v1497 = vunpack.c.h.b16 %v783
    %v1498 = vunpack.c.l.b16 %v784
    %v1499 = vunpack.c.h.b16 %v784
    %v1500 = vunpack.c.l.b16 %v785
    %v1501 = vunpack.c.h.b16 %v785
    %v1502 = vunpack.c.l.b16 %v786
    %v1503 = vunpack.c.h.b16 %v786
    %v1504 = vunpack.c.l.b16 %v787
    %v1505 = vunpack.c.h.b16 %v787
    %v1506 = vunpack.c.l.b16 %v788
    %v1507 = vunpack.c.h.b16 %v788
    %v1508 = vunpack.c.l.b16 %v789
    %v1509 = vunpack.c.h.b16 %v789
    %v1510 = vunpack.c.l.b16 %v790
    %v1511 = vunpack.c.h.b16 %v790
    %v1512 = vunpack.c.l.b16 %v791
    %v1513 = vunpack.c.h.b16 %v791
    %v1514 = vunpack.c.l.b16 %v792
    %v1515 = vunpack.c.h.b16 %v792
    %v1516 = vunpack.c.l.b16 %v793
    %v1517 = vunpack.c.h.b16 %v793
    %v1518 = vunpack.c.l.b16 %v794
    %v1519 = vunpack.c.h.b16 %v794
    %v1520 = vunpack.c.l.b16 %v795
    %v1521 = vunpack.c.h.b16 %v795
    %v1522 = vunpack.c.l.b16 %v796
    %v1523 = vunpack.c.h.b16 %v796
    %v1524 = vunpack.c.l.b16 %v797
    %v1525 = vunpack.c.h.b16 %v797
    %v1526 = vunpack.c.l.b16 %v798
    %v1527 = vunpack.c.h.b16 %v798
    %v1528 = vunpack.c.l.b16 %v799
    %v1529 = vunpack.c.h.b16 %v799
    %v1530 = vunpack.c.l.b16 %v800
    %v1531 = vunpack.c.h.b16 %v800
    %v1532 = vunpack.c.l.b16 %v801
    %v1533 = vunpack.c.h.b16 %v801
    %v1534 = vunpack.c.l.b16 %v802
    %v1535 = vunpack.c.h.b16 %v802
    %v1536 = vunpack.c.l.b16 %v803
    %v1537 = vunpack.c.h.b16 %v803
    %v1538 = vunpack.c.l.b16 %v804
    %v1539 = vunpack.c.h.b16 %v804
    %v1540 = vunpack.c.l.b16 %v805
    %v1541 = vunpack.c.h.b16 %v805
    %v1542 = vunpack.c.l.b16 %v806
    %v1543 = vunpack.c.h.b16 %v806
    %v1544 = vunpack.c.l.b16 %v807
    %v1545 = vunpack.c.h.b16 %v807
    %v1546 = vunpack.c.l.b16 %v808
    %v1547 = vunpack.c.h.b16 %v808
    %v1548 = vunpack.c.l.b16 %v809
    %v1549 = vunpack.c.h.b16 %v809
    %v1550 = vunpack.c.l.b16 %v810
    %v1551 = vunpack.c.h.b16 %v810
    %v1552 = vunpack.c.l.b16 %v811
    %v1553 = vunpack.c.h.b16 %v811
    %v1554 = vunpack.c.l.b16 %v812
    %v1555 = vunpack.c.h.b16 %v812
    %v1556 = vunpack.c.l.b16 %v813
    %v1557 = vunpack.c.h.b16 %v813
    %v1558 = vunpack.c.l.b16 %v814
    %v1559 = vunpack.c.h.b16 %v814
    %v1560 = vunpack.c.l.b16 %v815
    %v1561 = vunpack.c.h.b16 %v815
    %v1562 = vunpack.c.l.b16 %v816
    %v1563 = vunpack.c.h.b16 %v816
    %v1564 = vunpack.c.l.b16 %v817
    %v1565 = vunpack.c.h.b16 %v817
    %v1566 = vunpack.c.l.b16 %v818
    %v1567 = vunpack.c.h.b16 %v818
    %v1568 = vunpack.c.l.b16 %v819
    %v1569 = vunpack.c.h.b16 %v819
    %v1570 = vunpack.c.l.b16 %v820
    %v1571 = vunpack.c.h.b16 %v820
    %v1572 = vunpack.c.l.b16 %v821
    %v1573 = vunpack.c.h.b16 %v821
    %v1574 = vunpack.c.l.b16 %v822
    %v1575 = vunpack.c.h.b16 %v822
    %v1576 = vunpack.c.l.b16 %v823
    %v1577 = vunpack.c.h.b16 %v823
    %v1578 = vunpack.c.l.b16 %v824
    %v1579 = vunpack.c.h.b16 %v824
    %v1580 = vunpack.c.l.b16 %v825
    %v1581 = vunpack.c.h.b16 %v825
    %v1582 = vunpack.c.l.b16 %v826
    %v1583 = vunpack.c.h.b16 %v826
    %v1584 = vunpack.c.l.b16 %v827
    %v1585 = vunpack.c.h.b16 %v827
    %v1586 = vunpack.c.l.b16 %v828
    %v1587 = vunpack.c.h.b16 %v828
    %v1588 = vunpack.c.l.b16 %v829
    %v1589 = vunpack.c.h.b16 %v829
    %v1590 = vunpack.c.l.b16 %v830
    %v1591 = vunpack.c.h.b16 %v830
    %v1592 = vunpack.c.l.b16 %v831
    %v1593 = vunpack.c.h.b16 %v831
    %v1594 = vunpack.c.l.b16 %v832
    %v1595 = vunpack.c.h.b16 %v832
    %v1596 = vunpack.c.l.b16 %v833
    %v1597 = vunpack.c.h.b16 %v833
    %v1598 = vunpack.c.l.b16 %v834
    %v1599 = vunpack.c.h.b16 %v834
    %v1600 = vunpack.c.l.b16 %v835
    %v1601 = vunpack.c.h.b16 %v835
    %v1602 = vunpack.c.l.b16 %v836
    %v1603 = vunpack.c.h.b16 %v836
    %v1604 = vunpack.c.l.b16 %v837
    %v1605 = vunpack.c.h.b16 %v837
    %v1606 = vunpack.c.l.b16 %v838
    %v1607 = vunpack.c.h.b16 %v838
    %v1608 = vunpack.c.l.b16 %v839
    %v1609 = vunpack.c.h.b16 %v839
    %v1610 = vunpack.c.l.b16 %v840
    %v1611 = vunpack.c.h.b16 %v840
    %v1612 = vunpack.c.l.b16 %v841
    %v1613 = vunpack.c.h.b16 %v841
    %v1614 = vunpack.c.l.b16 %v842
    %v1615 = vunpack.c.h.b16 %v842
    %v1616 = vunpack.c.l.b16 %v843
    %v1617 = vunpack.c.h.b16 %v843
    %v1618 = vunpack.c.l.b16 %v844
    %v1619 = vunpack.c.h.b16 %v844
    %v1620 = vunpack.c.l.b16 %v845
    %v1621 = vunpack.c.h.b16 %v845
    %v1622 = vunpack.c.l.b16 %v846
    %v1623 = vunpack.c.h.b16 %v846
    %v1624 = vunpack.c.l.b16 %v847
    %v1625 = vunpack.c.h.b16 %v847
    %v1626 = vpack.c.b16 %v1118, %v1114
    %v1627 = vpack.c.b16 %v1119, %v1115
    %v1628 = vpack.c.b16 %v1120, %v1116
    %v1629 = vpack.c.b16 %v1121, %v1117
    %v1630 = vpack.c.b16 %v1126, %v1122
    %v1631 = vpack.c.b16 %v1127, %v1123
    %v1632 = vpack.c.b16 %v1128, %v1124
    %v1633 = vpack.c.b16 %v1129, %v1125
    %v1634 = vpack.c.b16 %v1134, %v1130
    %v1635 = vpack.c.b16 %v1135, %v1131
    %v1636 = vpack.c.b16 %v1136, %v1132
    %v1637 = vpack.c.b16 %v1137, %v1133
    %v1638 = vpack.c.b16 %v1142, %v1138
    %v1639 = vpack.c.b16 %v1143, %v1139
    %v1640 = vpack.c.b16 %v1144, %v1140
    %v1641 = vpack.c.b16 %v1145, %v1141
    %v1642 = vpack.c.b16 %v1150, %v1146
    %v1643 = vpack.c.b16 %v1151, %v1147
    %v1644 = vpack.c.b16 %v1152, %v1148
    %v1645 = vpack.c.b16 %v1153, %v1149
    %v1646 = vpack.c.b16 %v1158, %v1154
    %v1647 = vpack.c.b16 %v1159, %v1155
    %v1648 = vpack.c.b16 %v1160, %v1156
    %v1649 = vpack.c.b16 %v1161, %v1157
    %v1650 = vpack.c.b16 %v1166, %v1162
    %v1651 = vpack.c.b16 %v1167, %v1163
    %v1652 = vpack.c.b16 %v1168, %v1164
    %v1653 = vpack.c.b16 %v1169, %v1165
    %v1654 = vpack.c.b16 %v1174, %v1170
    %v1655 = vpack.c.b16 %v1175, %v1171
    %v1656 = vpack.c.b16 %v1176, %v1172
    %v1657 = vpack.c.b16 %v1177, %v1173
    %v1658 = vpack.c.b16 %v1182, %v1178
    %v1659 = vpack.c.b16 %v1183, %v1179
    %v1660 = vpack.c.b16 %v1184, %v1180
    %v1661 = vpack.c.b16 %v1185, %v1181
    %v1662 = vpack.c.b16 %v1190, %v1186
    %v1663 = vpack.c.b16 %v1191, %v1187
    %v1664 = vpack.c.b16 %v1192, %v1188
    %v1665 = vpack.c.b16 %v1193, %v1189
    %v1666 = vpack.c.b16 %v1198, %v1194
    %v1667 = vpack.c.b16 %v1199, %v1195
    %v1668 = vpack.c.b16 %v1200, %v1196
    %v1669 = vpack.c.b16 %v1201, %v1197
    %v1670 = vpack.c.b16 %v1206, %v1202
    %v1671 = vpack.c.b16 %v1207, %v1203
    %v1672 = vpack.c.b16 %v1208, %v1204
    %v1673 = vpack.c.b16 %v1209, %v1205
    %v1674 = vpack.c.b16 %v1214, %v1210
    %v1675 = vpack.c.b16 %v1215, %v1211
    %v1676 = vpack.c.b16 %v1216, %v1212
    %v1677 = vpack.c.b16 %v1217, %v1213
    %v1678 = vpack.c.b16 %v1222, %v1218
    %v1679 = vpack.c.b16 %v1223, %v1219
    %v1680 = vpack.c.b16 %v1224, %v1220
    %v1681 = vpack.c.b16 %v1225, %v1221
    %v1682 = vpack.c.b16 %v1230, %v1226
    %v1683 = vpack.c.b16 %v1231, %v1227
    %v1684 = vpack.c.b16 %v1232, %v1228
    %v1685 = vpack.c.b16 %v1233, %v1229
    %v1686 = vpack.c.b16 %v1238, %v1234
    %v1687 = vpack.c.b16 %v1239, %v1235
    %v1688 = vpack.c.b16 %v1240, %v1236
    %v1689 = vpack.c.b16 %v1241, %v1237
    %v1690 = vpack.c.b16 %v1246, %v1242
    %v1691 = vpack.c.b16 %v1247, %v1243
    %v1692 = vpack.c.b16 %v1248, %v1244
    %v1693 = vpack.c.b16 %v1249, %v1245
    %v1694 = vpack.c.b16 %v1254, %v1250
    %v1695 = vpack.c.b16 %v1255, %v1251
    %v1696 = vpack.c.b16 %v1256, %v1252
    %v1697 = vpack.c.b16 %v1257, %v1253
    %v1698 = vpack.c.b16 %v1262, %v1258
    %v1699 = vpack.c.b16 %v1263, %v1259
    %v1700 = vpack.c.b16 %v1264, %v1260
    %v1701 = vpack.c.b16 %v1265, %v1261
    %v1702 = vpack.c.b16 %v1270, %v1266
    %v1703 = vpack.c.b16 %v1271, %v1267
    %v1704 = vpack.c.b16 %v1272, %v1268
    %v1705 = vpack.c.b16 %v1273, %v1269
    %v1706 = vpack.c.b16 %v1278, %v1274
    %v1707 = vpack.c.b16 %v1279, %v1275
    %v1708 = vpack.c.b16 %v1280, %v1276
    %v1709 = vpack.c.b16 %v1281, %v1277
    %v1710 = vpack.c.b16 %v1286, %v1282
    %v1711 = vpack.c.b16 %v1287, %v1283
    %v1712 = vpack.c.b16 %v1288, %v1284
    %v1713 = vpack.c.b16 %v1289, %v1285
    %v1714 = vpack.c.b16 %v1294, %v1290
    %v1715 = vpack.c.b16 %v1295, %v1291
    %v1716 = vpack.c.b16 %v1296, %v1292
    %v1717 = vpack.c.b16 %v1297, %v1293
    %v1718 = vpack.c.b16 %v1302, %v1298
    %v1719 = vpack.c.b16 %v1303, %v1299
    %v1720 = vpack.c.b16 %v1304, %v1300
    %v1721 = vpack.c.b16 %v1305, %v1301
    %v1722 = vpack.c.b16 %v1310, %v1306
    %v1723 = vpack.c.b16 %v1311, %v1307
    %v1724 = vpack.c.b16 %v1312, %v1308
    %v1725 = vpack.c.b16 %v1313, %v1309
    %v1726 = vpack.c.b16 %v1318, %v1314
    %v1727 = vpack.c.b16 %v1319, %v1315
    %v1728 = vpack.c.b16 %v1320, %v1316
    %v1729 = vpack.c.b16 %v1321, %v1317
    %v1730 = vpack.c.b16 %v1326, %v1322
    %v1731 = vpack.c.b16 %v1327, %v1323
    %v1732 = vpack.c.b16 %v1328, %v1324
    %v1733 = vpack.c.b16 %v1329, %v1325
    %v1734 = vpack.c.b16 %v1334, %v1330
    %v1735 = vpack.c.b16 %v1335, %v1331
    %v1736 = vpack.c.b16 %v1336, %v1332
    %v1737 = vpack.c.b16 %v1337, %v1333
    %v1738 = vpack.c.b16 %v1342, %v1338
    %v1739 = vpack.c.b16 %v1343, %v1339
    %v1740 = vpack.c.b16 %v1344, %v1340
    %v1741 = vpack.c.b16 %v1345, %v1341
    %v1742 = vpack.c.b16 %v1350, %v1346
    %v1743 = vpack.c.b16 %v1351, %v1347
    %v1744 = vpack.c.b16 %v1352, %v1348
    %v1745 = vpack.c.b16 %v1353, %v1349
    %v1746 = vpack.c.b16 %v1358, %v1354
    %v1747 = vpack.c.b16 %v1359, %v1355
    %v1748 = vpack.c.b16 %v1360, %v1356
    %v1749 = vpack.c.b16 %v1361, %v1357
    %v1750 = vpack.c.b16 %v1366, %v1362
    %v1751 = vpack.c.b16 %v1367, %v1363
    %v1752 = vpack.c.b16 %v1368, %v1364
    %v1753 = vpack.c.b16 %v1369, %v1365
    %v1754 = vpack.c.b16 %v1374, %v1370
    %v1755 = vpack.c.b16 %v1375, %v1371
    %v1756 = vpack.c.b16 %v1376, %v1372
    %v1757 = vpack.c.b16 %v1377, %v1373
    %v1758 = vpack.c.b16 %v1382, %v1378
    %v1759 = vpack.c.b16 %v1383, %v1379
    %v1760 = vpack.c.b16 %v1384, %v1380
    %v1761 = vpack.c.b16 %v1385, %v1381
    %v1762 = vpack.c.b16 %v1390, %v1386
    %v1763 = vpack.c.b16 %v1391, %v1387
    %v1764 = vpack.c.b16 %v1392, %v1388
    %v1765 = vpack.c.b16 %v1393, %v1389
    %v1766 = vpack.c.b16 %v1398, %v1394
    %v1767 = vpack.c.b16 %v1399, %v1395
    %v1768 = vpack.c.b16 %v1400, %v1396
    %v1769 = vpack.c.b16 %v1401, %v1397
    %v1770 = vpack.c.b16 %v1406, %v1402
    %v1771 = vpack.c.b16 %v1407, %v1403
    %v1772 = vpack.c.b16 %v1408, %v1404
    %v1773 = vpack.c.b16 %v1409, %v1405
    %v1774 = vpack.c.b16 %v1414, %v1410
    %v1775 = vpack.c.b16 %v1415, %v1411
    %v1776 = vpack.c.b16 %v1416, %v1412
    %v1777 = vpack.c.b16 %v1417, %v1413
    %v1778 = vpack.c.b16 %v1422, %v1418
    %v1779 = vpack.c.b16 %v1423, %v1419
    %v1780 = vpack.c.b16 %v1424, %v1420
    %v1781 = vpack.c.b16 %v1425, %v1421
    %v1782 = vpack.c.b16 %v1430, %v1426
    %v1783 = vpack.c.b16 %v1431, %v1427
    %v1784 = vpack.c.b16 %v1432, %v1428
    %v1785 = vpack.c.b16 %v1433, %v1429
    %v1786 = vpack.c.b16 %v1438, %v1434
    %v1787 = vpack.c.b16 %v1439, %v1435
    %v1788 = vpack.c.b16 %v1440, %v1436
    %v1789 = vpack.c.b16 %v1441, %v1437
    %v1790 = vpack.c.b16 %v1446, %v1442
    %v1791 = vpack.c.b16 %v1447, %v1443
    %v1792 = vpack.c.b16 %v1448, %v1444
    %v1793 = vpack.c.b16 %v1449, %v1445
    %v1794 = vpack.c.b16 %v1454, %v1450
    %v1795 = vpack.c.b16 %v1455, %v1451
    %v1796 = vpack.c.b16 %v1456, %v1452
    %v1797 = vpack.c.b16 %v1457, %v1453
    %v1798 = vpack.c.b16 %v1462, %v1458
    %v1799 = vpack.c.b16 %v1463, %v1459
    %v1800 = vpack.c.b16 %v1464, %v1460
    %v1801 = vpack.c.b16 %v1465, %v1461
    %v1802 = vpack.c.b16 %v1470, %v1466
    %v1803 = vpack.c.b16 %v1471, %v1467
    %v1804 = vpack.c.b16 %v1472, %v1468
    %v1805 = vpack.c.b16 %v1473, %v1469
    %v1806 = vpack.c.b16 %v1478, %v1474
    %v1807 = vpack.c.b16 %v1479, %v1475
    %v1808 = vpack.c.b16 %v1480, %v1476
    %v1809 = vpack.c.b16 %v1481, %v1477
    %v1810 = vpack.c.b16 %v1486, %v1482
    %v1811 = vpack.c.b16 %v1487, %v1483
    %v1812 = vpack.c.b16 %v1488, %v1484
    %v1813 = vpack.c.b16 %v1489, %v1485
    %v1814 = vpack.c.b16 %v1494, %v1490
    %v1815 = vpack.c.b16 %v1495, %v1491
    %v1816 = vpack.c.b16 %v1496, %v1492
    %v1817 = vpack.c.b16 %v1497, %v1493
    %v1818 = vpack.c.b16 %v1502, %v1498
    %v1819 = vpack.c.b16 %v1503, %v1499
    %v1820 = vpack.c.b16 %v1504, %v1500
    %v1821 = vpack.c.b16 %v1505, %v1501
    %v1822 = vpack.c.b16 %v1510, %v1506
    %v1823 = vpack.c.b16 %v1511, %v1507
    %v1824 = vpack.c.b16 %v1512, %v1508
    %v1825 = vpack.c.b16 %v1513, %v1509
    %v1826 = vpack.c.b16 %v1518, %v1514
    %v1827 = vpack.c.b16 %v1519, %v1515
    %v1828 = vpack.c.b16 %v1520, %v1516
    %v1829 = vpack.c.b16 %v1521, %v1517
    %v1830 = vpack.c.b16 %v1526, %v1522
    %v1831 = vpack.c.b16 %v1527, %v1523
    %v1832 = vpack.c.b16 %v1528, %v1524
    %v1833 = vpack.c.b16 %v1529, %v1525
    %v1834 = vpack.c.b16 %v1534, %v1530
    %v1835 = vpack.c.b16 %v1535, %v1531
    %v1836 = vpack.c.b16 %v1536, %v1532
    %v1837 = vpack.c.b16 %v1537, %v1533
    %v1838 = vpack.c.b16 %v1542, %v1538
    %v1839 = vpack.c.b16 %v1543, %v1539
    %v1840 = vpack.c.b16 %v1544, %v1540
    %v1841 = vpack.c.b16 %v1545, %v1541
    %v1842 = vpack.c.b16 %v1550, %v1546
    %v1843 = vpack.c.b16 %v1551, %v1547
    %v1844 = vpack.c.b16 %v1552, %v1548
    %v1845 = vpack.c.b16 %v1553, %v1549
    %v1846 = vpack.c.b16 %v1558, %v1554
    %v1847 = vpack.c.b16 %v1559, %v1555
    %v1848 = vpack.c.b16 %v1560, %v1556
    %v1849 = vpack.c.b16 %v1561, %v1557
    %v1850 = vpack.c.b16 %v1566, %v1562
    %v1851 = vpack.c.b16 %v1567, %v1563
    %v1852 = vpack.c.b16 %v1568, %v1564
    %v1853 = vpack.c.b16 %v1569, %v1565
    %v1854 = vpack.c.b16 %v1574, %v1570
    %v1855 = vpack.c.b16 %v1575, %v1571
    %v1856 = vpack.c.b16 %v1576, %v1572
    %v1857 = vpack.c.b16 %v1577, %v1573
    %v1858 = vpack.c.b16 %v1582, %v1578
    %v1859 = vpack.c.b16 %v1583, %v1579
    %v1860 = vpack.c.b16 %v1584, %v1580
    %v1861 = vpack.c.b16 %v1585, %v1581
    %v1862 = vpack.c.b16 %v1590, %v1586
    %v1863 = vpack.c.b16 %v1591, %v1587
    %v1864 = vpack.c.b16 %v1592, %v1588
    %v1865 = vpack.c.b16 %v1593, %v1589
    %v1866 = vpack.c.b16 %v1598, %v1594
    %v1867 = vpack.c.b16 %v1599, %v1595
    %v1868 = vpack.c.b16 %v1600, %v1596
    %v1869 = vpack.c.b16 %v1601, %v1597
    %v1870 = vpack.c.b16 %v1606, %v1602
    %v1871 = vpack.c.b16 %v1607, %v1603
    %v1872 = vpack.c.b16 %v1608, %v1604
    %v1873 = vpack.c.b16 %v1609, %v1605
    %v1874 = vpack.c.b16 %v1614, %v1610
    %v1875 = vpack.c.b16 %v1615, %v1611
    %v1876 = vpack.c.b16 %v1616, %v1612
    %v1877 = vpack.c.b16 %v1617, %v1613
    %v1878 = vpack.c.b16 %v1622, %v1618
    %v1879 = vpack.c.b16 %v1623, %v1619
    %v1880 = vpack.c.b16 %v1624, %v1620
    %v1881 = vpack.c.b16 %v1625, %v1621
    %2138 = vmatpush.bf16.msra.mxu0 %v1654
    %2139 = vmatpush.bf16.msra.mxu0 %v1650
    %2140 = vmatpush.bf16.msra.mxu0 %v1646
    %2141 = vmatpush.bf16.msra.mxu0 %v1642
    %2142 = vmatpush.bf16.msra.mxu0 %v1638
    %2143 = vmatpush.bf16.msra.mxu0 %v1634
    %2144 = vmatpush.bf16.msra.mxu0 %v1630
    %2145 = vmatpush.bf16.msra.mxu0 %v1626
    %2146 = vmatmul.bf16.gmra.mxu0 %v584
    %v2147 = vpop.f32.mrf.mxu0
    %v2148 = vadd.f32 %v850, %v2147
    %v2149 = vpop.f32.mrf.mxu0
    %2150 = vdwg.mxu0
    %2151 = vmatpush.bf16.msra.mxu0 %v1686
    %2152 = vmatpush.bf16.msra.mxu0 %v1682
    %2153 = vmatpush.bf16.msra.mxu0 %v1678
    %2154 = vmatpush.bf16.msra.mxu0 %v1674
    %2155 = vmatpush.bf16.msra.mxu0 %v1670
    %2156 = vmatpush.bf16.msra.mxu0 %v1666
    %2157 = vmatpush.bf16.msra.mxu0 %v1662
    %2158 = vmatpush.bf16.msra.mxu0 %v1658
    %2159 = vmatmul.bf16.gmra.mxu0 %v585
    %v2160 = vpop.f32.mrf.mxu0
    %v2161 = vadd.f32 %v2148, %v2160
    %v2162 = vpop.f32.mrf.mxu0
    %2163 = vdwg.mxu0
    %2164 = vmatpush.bf16.msra.mxu0 %v1718
    %2165 = vmatpush.bf16.msra.mxu0 %v1714
    %2166 = vmatpush.bf16.msra.mxu0 %v1710
    %2167 = vmatpush.bf16.msra.mxu0 %v1706
    %2168 = vmatpush.bf16.msra.mxu0 %v1702
    %2169 = vmatpush.bf16.msra.mxu0 %v1698
    %2170 = vmatpush.bf16.msra.mxu0 %v1694
    %2171 = vmatpush.bf16.msra.mxu0 %v1690
    %2172 = vmatmul.bf16.gmra.mxu0 %v586
    %v2173 = vpop.f32.mrf.mxu0
    %v2174 = vadd.f32 %v2161, %v2173
    %v2175 = vpop.f32.mrf.mxu0
    %2176 = vdwg.mxu0
    %2177 = vmatpush.bf16.msra.mxu0 %v1750
    %2178 = vmatpush.bf16.msra.mxu0 %v1746
    %2179 = vmatpush.bf16.msra.mxu0 %v1742
    %2180 = vmatpush.bf16.msra.mxu0 %v1738
    %2181 = vmatpush.bf16.msra.mxu0 %v1734
    %2182 = vmatpush.bf16.msra.mxu0 %v1730
    %2183 = vmatpush.bf16.msra.mxu0 %v1726
    %2184 = vmatpush.bf16.msra.mxu0 %v1722
    %2185 = vmatmul.bf16.gmra.mxu0 %v587
    %v2186 = vpop.f32.mrf.mxu0
    %v2187 = vadd.f32 %v2174, %v2186
    %v2188 = vpop.f32.mrf.mxu0
    %2189 = vdwg.mxu0
    %2190 = vmatpush.bf16.msra.mxu0 %v1782
    %2191 = vmatpush.bf16.msra.mxu0 %v1778
    %2192 = vmatpush.bf16.msra.mxu0 %v1774
    %2193 = vmatpush.bf16.msra.mxu0 %v1770
    %2194 = vmatpush.bf16.msra.mxu0 %v1766
    %2195 = vmatpush.bf16.msra.mxu0 %v1762
    %2196 = vmatpush.bf16.msra.mxu0 %v1758
    %2197 = vmatpush.bf16.msra.mxu0 %v1754
    %2198 = vmatmul.bf16.gmra.mxu0 %v588
    %v2199 = vpop.f32.mrf.mxu0
    %v2200 = vadd.f32 %v2187, %v2199
    %v2201 = vpop.f32.mrf.mxu0
    %2202 = vdwg.mxu0
    %2203 = vmatpush.bf16.msra.mxu0 %v1814
    %2204 = vmatpush.bf16.msra.mxu0 %v1810
    %2205 = vmatpush.bf16.msra.mxu0 %v1806
    %2206 = vmatpush.bf16.msra.mxu0 %v1802
    %2207 = vmatpush.bf16.msra.mxu0 %v1798
    %2208 = vmatpush.bf16.msra.mxu0 %v1794
    %2209 = vmatpush.bf16.msra.mxu0 %v1790
    %2210 = vmatpush.bf16.msra.mxu0 %v1786
    %2211 = vmatmul.bf16.gmra.mxu0 %v589
    %v2212 = vpop.f32.mrf.mxu0
    %v2213 = vadd.f32 %v2200, %v2212
    %v2214 = vpop.f32.mrf.mxu0
    %2215 = vdwg.mxu0
    %2216 = vmatpush.bf16.msra.mxu0 %v1846
    %2217 = vmatpush.bf16.msra.mxu0 %v1842
    %2218 = vmatpush.bf16.msra.mxu0 %v1838
    %2219 = vmatpush.bf16.msra.mxu0 %v1834
    %2220 = vmatpush.bf16.msra.mxu0 %v1830
    %2221 = vmatpush.bf16.msra.mxu0 %v1826
    %2222 = vmatpush.bf16.msra.mxu0 %v1822
    %2223 = vmatpush.bf16.msra.mxu0 %v1818
    %2224 = vmatmul.bf16.gmra.mxu0 %v590
    %v2225 = vpop.f32.mrf.mxu0
    %v2226 = vadd.f32 %v2213, %v2225
    %v2227 = vpop.f32.mrf.mxu0
    %2228 = vdwg.mxu0
    %2229 = vmatpush.bf16.msra.mxu0 %v1878
    %2230 = vmatpush.bf16.msra.mxu0 %v1874
    %2231 = vmatpush.bf16.msra.mxu0 %v1870
    %2232 = vmatpush.bf16.msra.mxu0 %v1866
    %2233 = vmatpush.bf16.msra.mxu0 %v1862
    %2234 = vmatpush.bf16.msra.mxu0 %v1858
    %2235 = vmatpush.bf16.msra.mxu0 %v1854
    %2236 = vmatpush.bf16.msra.mxu0 %v1850
    %2237 = vmatmul.bf16.gmra.mxu0 %v591
    %v2238 = vpop.f32.mrf.mxu0
    %v2239 = vadd.f32 %v2226, %v2238
    %v2240 = vpop.f32.mrf.mxu0
    %2241 = vdwg.mxu0
    %2242 = vmatpush.bf16.msra.mxu0 %v1655
    %2243 = vmatpush.bf16.msra.mxu0 %v1651
    %2244 = vmatpush.bf16.msra.mxu0 %v1647
    %2245 = vmatpush.bf16.msra.mxu0 %v1643
    %2246 = vmatpush.bf16.msra.mxu0 %v1639
    %2247 = vmatpush.bf16.msra.mxu0 %v1635
    %2248 = vmatpush.bf16.msra.mxu0 %v1631
    %2249 = vmatpush.bf16.msra.mxu0 %v1627
    %2250 = vmatmul.bf16.gmra.mxu0 %v584
    %v2251 = vpop.f32.mrf.mxu0
    %v2252 = vadd.f32 %v851, %v2251
    %v2253 = vpop.f32.mrf.mxu0
    %2254 = vdwg.mxu0
    %2255 = vmatpush.bf16.msra.mxu0 %v1687
    %2256 = vmatpush.bf16.msra.mxu0 %v1683
    %2257 = vmatpush.bf16.msra.mxu0 %v1679
    %2258 = vmatpush.bf16.msra.mxu0 %v1675
    %2259 = vmatpush.bf16.msra.mxu0 %v1671
    %2260 = vmatpush.bf16.msra.mxu0 %v1667
    %2261 = vmatpush.bf16.msra.mxu0 %v1663
    %2262 = vmatpush.bf16.msra.mxu0 %v1659
    %2263 = vmatmul.bf16.gmra.mxu0 %v585
    %v2264 = vpop.f32.mrf.mxu0
    %v2265 = vadd.f32 %v2252, %v2264
    %v2266 = vpop.f32.mrf.mxu0
    %2267 = vdwg.mxu0
    %2268 = vmatpush.bf16.msra.mxu0 %v1719
    %2269 = vmatpush.bf16.msra.mxu0 %v1715
    %2270 = vmatpush.bf16.msra.mxu0 %v1711
    %2271 = vmatpush.bf16.msra.mxu0 %v1707
    %2272 = vmatpush.bf16.msra.mxu0 %v1703
    %2273 = vmatpush.bf16.msra.mxu0 %v1699
    %2274 = vmatpush.bf16.msra.mxu0 %v1695
    %2275 = vmatpush.bf16.msra.mxu0 %v1691
    %2276 = vmatmul.bf16.gmra.mxu0 %v586
    %v2277 = vpop.f32.mrf.mxu0
    %v2278 = vadd.f32 %v2265, %v2277
    %v2279 = vpop.f32.mrf.mxu0
    %2280 = vdwg.mxu0
    %2281 = vmatpush.bf16.msra.mxu0 %v1751
    %2282 = vmatpush.bf16.msra.mxu0 %v1747
    %2283 = vmatpush.bf16.msra.mxu0 %v1743
    %2284 = vmatpush.bf16.msra.mxu0 %v1739
    %2285 = vmatpush.bf16.msra.mxu0 %v1735
    %2286 = vmatpush.bf16.msra.mxu0 %v1731
    %2287 = vmatpush.bf16.msra.mxu0 %v1727
    %2288 = vmatpush.bf16.msra.mxu0 %v1723
    %2289 = vmatmul.bf16.gmra.mxu0 %v587
    %v2290 = vpop.f32.mrf.mxu0
    %v2291 = vadd.f32 %v2278, %v2290
    %v2292 = vpop.f32.mrf.mxu0
    %2293 = vdwg.mxu0
    %2294 = vmatpush.bf16.msra.mxu0 %v1783
    %2295 = vmatpush.bf16.msra.mxu0 %v1779
    %2296 = vmatpush.bf16.msra.mxu0 %v1775
    %2297 = vmatpush.bf16.msra.mxu0 %v1771
    %2298 = vmatpush.bf16.msra.mxu0 %v1767
    %2299 = vmatpush.bf16.msra.mxu0 %v1763
    %2300 = vmatpush.bf16.msra.mxu0 %v1759
    %2301 = vmatpush.bf16.msra.mxu0 %v1755
    %2302 = vmatmul.bf16.gmra.mxu0 %v588
    %v2303 = vpop.f32.mrf.mxu0
    %v2304 = vadd.f32 %v2291, %v2303
    %v2305 = vpop.f32.mrf.mxu0
    %2306 = vdwg.mxu0
    %2307 = vmatpush.bf16.msra.mxu0 %v1815
    %2308 = vmatpush.bf16.msra.mxu0 %v1811
    %2309 = vmatpush.bf16.msra.mxu0 %v1807
    %2310 = vmatpush.bf16.msra.mxu0 %v1803
    %2311 = vmatpush.bf16.msra.mxu0 %v1799
    %2312 = vmatpush.bf16.msra.mxu0 %v1795
    %2313 = vmatpush.bf16.msra.mxu0 %v1791
    %2314 = vmatpush.bf16.msra.mxu0 %v1787
    %2315 = vmatmul.bf16.gmra.mxu0 %v589
    %v2316 = vpop.f32.mrf.mxu0
    %v2317 = vadd.f32 %v2304, %v2316
    %v2318 = vpop.f32.mrf.mxu0
    %2319 = vdwg.mxu0
    %2320 = vmatpush.bf16.msra.mxu0 %v1847
    %2321 = vmatpush.bf16.msra.mxu0 %v1843
    %2322 = vmatpush.bf16.msra.mxu0 %v1839
    %2323 = vmatpush.bf16.msra.mxu0 %v1835
    %2324 = vmatpush.bf16.msra.mxu0 %v1831
    %2325 = vmatpush.bf16.msra.mxu0 %v1827
    %2326 = vmatpush.bf16.msra.mxu0 %v1823
    %2327 = vmatpush.bf16.msra.mxu0 %v1819
    %2328 = vmatmul.bf16.gmra.mxu0 %v590
    %v2329 = vpop.f32.mrf.mxu0
    %v2330 = vadd.f32 %v2317, %v2329
    %v2331 = vpop.f32.mrf.mxu0
    %2332 = vdwg.mxu0
    %2333 = vmatpush.bf16.msra.mxu0 %v1879
    %2334 = vmatpush.bf16.msra.mxu0 %v1875
    %2335 = vmatpush.bf16.msra.mxu0 %v1871
    %2336 = vmatpush.bf16.msra.mxu0 %v1867
    %2337 = vmatpush.bf16.msra.mxu0 %v1863
    %2338 = vmatpush.bf16.msra.mxu0 %v1859
    %2339 = vmatpush.bf16.msra.mxu0 %v1855
    %2340 = vmatpush.bf16.msra.mxu0 %v1851
    %2341 = vmatmul.bf16.gmra.mxu0 %v591
    %v2342 = vpop.f32.mrf.mxu0
    %v2343 = vadd.f32 %v2330, %v2342
    %v2344 = vpop.f32.mrf.mxu0
    %2345 = vdwg.mxu0
    %2346 = vmatpush.bf16.msra.mxu0 %v1656
    %2347 = vmatpush.bf16.msra.mxu0 %v1652
    %2348 = vmatpush.bf16.msra.mxu0 %v1648
    %2349 = vmatpush.bf16.msra.mxu0 %v1644
    %2350 = vmatpush.bf16.msra.mxu0 %v1640
    %2351 = vmatpush.bf16.msra.mxu0 %v1636
    %2352 = vmatpush.bf16.msra.mxu0 %v1632
    %2353 = vmatpush.bf16.msra.mxu0 %v1628
    %2354 = vmatmul.bf16.gmra.mxu0 %v584
    %v2355 = vpop.f32.mrf.mxu0
    %v2356 = vadd.f32 %v852, %v2355
    %v2357 = vpop.f32.mrf.mxu0
    %2358 = vdwg.mxu0
    %2359 = vmatpush.bf16.msra.mxu0 %v1688
    %2360 = vmatpush.bf16.msra.mxu0 %v1684
    %2361 = vmatpush.bf16.msra.mxu0 %v1680
    %2362 = vmatpush.bf16.msra.mxu0 %v1676
    %2363 = vmatpush.bf16.msra.mxu0 %v1672
    %2364 = vmatpush.bf16.msra.mxu0 %v1668
    %2365 = vmatpush.bf16.msra.mxu0 %v1664
    %2366 = vmatpush.bf16.msra.mxu0 %v1660
    %2367 = vmatmul.bf16.gmra.mxu0 %v585
    %v2368 = vpop.f32.mrf.mxu0
    %v2369 = vadd.f32 %v2356, %v2368
    %v2370 = vpop.f32.mrf.mxu0
    %2371 = vdwg.mxu0
    %2372 = vmatpush.bf16.msra.mxu0 %v1720
    %2373 = vmatpush.bf16.msra.mxu0 %v1716
    %2374 = vmatpush.bf16.msra.mxu0 %v1712
    %2375 = vmatpush.bf16.msra.mxu0 %v1708
    %2376 = vmatpush.bf16.msra.mxu0 %v1704
    %2377 = vmatpush.bf16.msra.mxu0 %v1700
    %2378 = vmatpush.bf16.msra.mxu0 %v1696
    %2379 = vmatpush.bf16.msra.mxu0 %v1692
    %2380 = vmatmul.bf16.gmra.mxu0 %v586
    %v2381 = vpop.f32.mrf.mxu0
    %v2382 = vadd.f32 %v2369, %v2381
    %v2383 = vpop.f32.mrf.mxu0
    %2384 = vdwg.mxu0
    %2385 = vmatpush.bf16.msra.mxu0 %v1752
    %2386 = vmatpush.bf16.msra.mxu0 %v1748
    %2387 = vmatpush.bf16.msra.mxu0 %v1744
    %2388 = vmatpush.bf16.msra.mxu0 %v1740
    %2389 = vmatpush.bf16.msra.mxu0 %v1736
    %2390 = vmatpush.bf16.msra.mxu0 %v1732
    %2391 = vmatpush.bf16.msra.mxu0 %v1728
    %2392 = vmatpush.bf16.msra.mxu0 %v1724
    %2393 = vmatmul.bf16.gmra.mxu0 %v587
    %v2394 = vpop.f32.mrf.mxu0
    %v2395 = vadd.f32 %v2382, %v2394
    %v2396 = vpop.f32.mrf.mxu0
    %2397 = vdwg.mxu0
    %2398 = vmatpush.bf16.msra.mxu0 %v1784
    %2399 = vmatpush.bf16.msra.mxu0 %v1780
    %2400 = vmatpush.bf16.msra.mxu0 %v1776
    %2401 = vmatpush.bf16.msra.mxu0 %v1772
    %2402 = vmatpush.bf16.msra.mxu0 %v1768
    %2403 = vmatpush.bf16.msra.mxu0 %v1764
    %2404 = vmatpush.bf16.msra.mxu0 %v1760
    %2405 = vmatpush.bf16.msra.mxu0 %v1756
    %2406 = vmatmul.bf16.gmra.mxu0 %v588
    %v2407 = vpop.f32.mrf.mxu0
    %v2408 = vadd.f32 %v2395, %v2407
    %v2409 = vpop.f32.mrf.mxu0
    %2410 = vdwg.mxu0
    %2411 = vmatpush.bf16.msra.mxu0 %v1816
    %2412 = vmatpush.bf16.msra.mxu0 %v1812
    %2413 = vmatpush.bf16.msra.mxu0 %v1808
    %2414 = vmatpush.bf16.msra.mxu0 %v1804
    %2415 = vmatpush.bf16.msra.mxu0 %v1800
    %2416 = vmatpush.bf16.msra.mxu0 %v1796
    %2417 = vmatpush.bf16.msra.mxu0 %v1792
    %2418 = vmatpush.bf16.msra.mxu0 %v1788
    %2419 = vmatmul.bf16.gmra.mxu0 %v589
    %v2420 = vpop.f32.mrf.mxu0
    %v2421 = vadd.f32 %v2408, %v2420
    %v2422 = vpop.f32.mrf.mxu0
    %2423 = vdwg.mxu0
    %2424 = vmatpush.bf16.msra.mxu0 %v1848
    %2425 = vmatpush.bf16.msra.mxu0 %v1844
    %2426 = vmatpush.bf16.msra.mxu0 %v1840
    %2427 = vmatpush.bf16.msra.mxu0 %v1836
    %2428 = vmatpush.bf16.msra.mxu0 %v1832
    %2429 = vmatpush.bf16.msra.mxu0 %v1828
    %2430 = vmatpush.bf16.msra.mxu0 %v1824
    %2431 = vmatpush.bf16.msra.mxu0 %v1820
    %2432 = vmatmul.bf16.gmra.mxu0 %v590
    %v2433 = vpop.f32.mrf.mxu0
    %v2434 = vadd.f32 %v2421, %v2433
    %v2435 = vpop.f32.mrf.mxu0
    %2436 = vdwg.mxu0
    %2437 = vmatpush.bf16.msra.mxu0 %v1880
    %2438 = vmatpush.bf16.msra.mxu0 %v1876
    %2439 = vmatpush.bf16.msra.mxu0 %v1872
    %2440 = vmatpush.bf16.msra.mxu0 %v1868
    %2441 = vmatpush.bf16.msra.mxu0 %v1864
    %2442 = vmatpush.bf16.msra.mxu0 %v1860
    %2443 = vmatpush.bf16.msra.mxu0 %v1856
    %2444 = vmatpush.bf16.msra.mxu0 %v1852
    %2445 = vmatmul.bf16.gmra.mxu0 %v591
    %v2446 = vpop.f32.mrf.mxu0
    %v2447 = vadd.f32 %v2434, %v2446
    %v2448 = vpop.f32.mrf.mxu0
    %2449 = vdwg.mxu0
    %2450 = vmatpush.bf16.msra.mxu0 %v1657
    %2451 = vmatpush.bf16.msra.mxu0 %v1653
    %2452 = vmatpush.bf16.msra.mxu0 %v1649
    %2453 = vmatpush.bf16.msra.mxu0 %v1645
    %2454 = vmatpush.bf16.msra.mxu0 %v1641
    %2455 = vmatpush.bf16.msra.mxu0 %v1637
    %2456 = vmatpush.bf16.msra.mxu0 %v1633
    %2457 = vmatpush.bf16.msra.mxu0 %v1629
    %2458 = vmatmul.bf16.gmra.mxu0 %v584
    %v2459 = vpop.f32.mrf.mxu0
    %v2460 = vadd.f32 %v853, %v2459
    %v2461 = vpop.f32.mrf.mxu0
    %2462 = vdwg.mxu0
    %2463 = vmatpush.bf16.msra.mxu0 %v1689
    %2464 = vmatpush.bf16.msra.mxu0 %v1685
    %2465 = vmatpush.bf16.msra.mxu0 %v1681
    %2466 = vmatpush.bf16.msra.mxu0 %v1677
    %2467 = vmatpush.bf16.msra.mxu0 %v1673
    %2468 = vmatpush.bf16.msra.mxu0 %v1669
    %2469 = vmatpush.bf16.msra.mxu0 %v1665
    %2470 = vmatpush.bf16.msra.mxu0 %v1661
    %2471 = vmatmul.bf16.gmra.mxu0 %v585
    %v2472 = vpop.f32.mrf.mxu0
    %v2473 = vadd.f32 %v2460, %v2472
    %v2474 = vpop.f32.mrf.mxu0
    %2475 = vdwg.mxu0
    %2476 = vmatpush.bf16.msra.mxu0 %v1721
    %2477 = vmatpush.bf16.msra.mxu0 %v1717
    %2478 = vmatpush.bf16.msra.mxu0 %v1713
    %2479 = vmatpush.bf16.msra.mxu0 %v1709
    %2480 = vmatpush.bf16.msra.mxu0 %v1705
    %2481 = vmatpush.bf16.msra.mxu0 %v1701
    %2482 = vmatpush.bf16.msra.mxu0 %v1697
    %2483 = vmatpush.bf16.msra.mxu0 %v1693
    %2484 = vmatmul.bf16.gmra.mxu0 %v586
    %v2485 = vpop.f32.mrf.mxu0
    %v2486 = vadd.f32 %v2473, %v2485
    %v2487 = vpop.f32.mrf.mxu0
    %2488 = vdwg.mxu0
    %2489 = vmatpush.bf16.msra.mxu0 %v1753
    %2490 = vmatpush.bf16.msra.mxu0 %v1749
    %2491 = vmatpush.bf16.msra.mxu0 %v1745
    %2492 = vmatpush.bf16.msra.mxu0 %v1741
    %2493 = vmatpush.bf16.msra.mxu0 %v1737
    %2494 = vmatpush.bf16.msra.mxu0 %v1733
    %2495 = vmatpush.bf16.msra.mxu0 %v1729
    %2496 = vmatpush.bf16.msra.mxu0 %v1725
    %2497 = vmatmul.bf16.gmra.mxu0 %v587
    %v2498 = vpop.f32.mrf.mxu0
    %v2499 = vadd.f32 %v2486, %v2498
    %v2500 = vpop.f32.mrf.mxu0
    %2501 = vdwg.mxu0
    %2502 = vmatpush.bf16.msra.mxu0 %v1785
    %2503 = vmatpush.bf16.msra.mxu0 %v1781
    %2504 = vmatpush.bf16.msra.mxu0 %v1777
    %2505 = vmatpush.bf16.msra.mxu0 %v1773
    %2506 = vmatpush.bf16.msra.mxu0 %v1769
    %2507 = vmatpush.bf16.msra.mxu0 %v1765
    %2508 = vmatpush.bf16.msra.mxu0 %v1761
    %2509 = vmatpush.bf16.msra.mxu0 %v1757
    %2510 = vmatmul.bf16.gmra.mxu0 %v588
    %v2511 = vpop.f32.mrf.mxu0
    %v2512 = vadd.f32 %v2499, %v2511
    %v2513 = vpop.f32.mrf.mxu0
    %2514 = vdwg.mxu0
    %2515 = vmatpush.bf16.msra.mxu0 %v1817
    %2516 = vmatpush.bf16.msra.mxu0 %v1813
    %2517 = vmatpush.bf16.msra.mxu0 %v1809
    %2518 = vmatpush.bf16.msra.mxu0 %v1805
    %2519 = vmatpush.bf16.msra.mxu0 %v1801
    %2520 = vmatpush.bf16.msra.mxu0 %v1797
    %2521 = vmatpush.bf16.msra.mxu0 %v1793
    %2522 = vmatpush.bf16.msra.mxu0 %v1789
    %2523 = vmatmul.bf16.gmra.mxu0 %v589
    %v2524 = vpop.f32.mrf.mxu0
    %v2525 = vadd.f32 %v2512, %v2524
    %v2526 = vpop.f32.mrf.mxu0
    %2527 = vdwg.mxu0
    %2528 = vmatpush.bf16.msra.mxu0 %v1849
    %2529 = vmatpush.bf16.msra.mxu0 %v1845
    %2530 = vmatpush.bf16.msra.mxu0 %v1841
    %2531 = vmatpush.bf16.msra.mxu0 %v1837
    %2532 = vmatpush.bf16.msra.mxu0 %v1833
    %2533 = vmatpush.bf16.msra.mxu0 %v1829
    %2534 = vmatpush.bf16.msra.mxu0 %v1825
    %2535 = vmatpush.bf16.msra.mxu0 %v1821
    %2536 = vmatmul.bf16.gmra.mxu0 %v590
    %v2537 = vpop.f32.mrf.mxu0
    %v2538 = vadd.f32 %v2525, %v2537
    %v2539 = vpop.f32.mrf.mxu0
    %2540 = vdwg.mxu0
    %2541 = vmatpush.bf16.msra.mxu0 %v1881
    %2542 = vmatpush.bf16.msra.mxu0 %v1877
    %2543 = vmatpush.bf16.msra.mxu0 %v1873
    %2544 = vmatpush.bf16.msra.mxu0 %v1869
    %2545 = vmatpush.bf16.msra.mxu0 %v1865
    %2546 = vmatpush.bf16.msra.mxu0 %v1861
    %2547 = vmatpush.bf16.msra.mxu0 %v1857
    %2548 = vmatpush.bf16.msra.mxu0 %v1853
    %2549 = vmatmul.bf16.gmra.mxu0 %v591
    %v2550 = vpop.f32.mrf.mxu0
    %v2551 = vadd.f32 %v2538, %v2550
    %v2552 = vpop.f32.mrf.mxu0
    %2553 = vdwg.mxu0
    %v2554 = vmul.f32 %v2239, 0.2
    %v2555 = vmul.f32 %v2343, 0.2
    %v2556 = vmul.f32 %v2447, 0.2
    %v2557 = vmul.f32 %v2551, 0.2
    %v2558 = vmax.f32 %v2239, %v2554
    %v2559 = vmax.f32 %v2343, %v2555
    %v2560 = vmax.f32 %v2447, %v2556
    %v2561 = vmax.f32 %v2551, %v2557
    %s2562 = sxor.u32 %s113, 320440878
    %v2563 = vmul.u32 %v452, 512
    %v2564 = vadd.s32 %v2563, %v454
    %v2565 = vadd.s32 %v2563, %v455
    %v2566 = vadd.s32 %v2563, %v456
    %v2567 = vadd.s32 %v2563, %v457
    %v2568 = vstv %s2562
    %v2569 = vadd.s32 %v2564, %v2568
    %v2570 = vadd.s32 %v2565, %v2568
    %v2571 = vadd.s32 %v2566, %v2568
    %v2572 = vadd.s32 %v2567, %v2568
    %v2573 = vmul.u32 %v2569, 2654435769
    %v2574 = vmul.u32 %v2570, 2654435769
    %v2575 = vmul.u32 %v2571, 2654435769
    %v2576 = vmul.u32 %v2572, 2654435769
    %v2577 = vshrl.u32 %v2573, 16
    %v2578 = vshrl.u32 %v2574, 16
    %v2579 = vshrl.u32 %v2575, 16
    %v2580 = vshrl.u32 %v2576, 16
    %v2581 = vxor.u32 %v2573, %v2577
    %v2582 = vxor.u32 %v2574, %v2578
    %v2583 = vxor.u32 %v2575, %v2579
    %v2584 = vxor.u32 %v2576, %v2580
    %v2585 = vmul.u32 %v2581, 2146121005
    %v2586 = vmul.u32 %v2582, 2146121005
    %v2587 = vmul.u32 %v2583, 2146121005
    %v2588 = vmul.u32 %v2584, 2146121005
    %v2589 = vshrl.u32 %v2585, 15
    %v2590 = vshrl.u32 %v2586, 15
    %v2591 = vshrl.u32 %v2587, 15
    %v2592 = vshrl.u32 %v2588, 15
    %v2593 = vxor.u32 %v2585, %v2589
    %v2594 = vxor.u32 %v2586, %v2590
    %v2595 = vxor.u32 %v2587, %v2591
    %v2596 = vxor.u32 %v2588, %v2592
    %v2597 = vmul.u32 %v2593, 2221713035
    %v2598 = vmul.u32 %v2594, 2221713035
    %v2599 = vmul.u32 %v2595, 2221713035
    %v2600 = vmul.u32 %v2596, 2221713035
    %v2601 = vshrl.u32 %v2597, 16
    %v2602 = vshrl.u32 %v2598, 16
    %v2603 = vshrl.u32 %v2599, 16
    %v2604 = vshrl.u32 %v2600, 16
    %v2605 = vxor.u32 %v2597, %v2601
    %v2606 = vxor.u32 %v2598, %v2602
    %v2607 = vxor.u32 %v2599, %v2603
    %v2608 = vxor.u32 %v2600, %v2604
    %v2609 = vadd.s32 %v2605, 2147483648
    %vm2611 = vcmp.lt.s32.totalorder %v2609, 858993459
    %v2612 = vadd.s32 %v2606, 2147483648
    %vm2614 = vcmp.lt.s32.totalorder %v2612, 858993459
    %v2615 = vadd.s32 %v2607, 2147483648
    %vm2617 = vcmp.lt.s32.totalorder %v2615, 858993459
    %v2618 = vadd.s32 %v2608, 2147483648
    %vm2620 = vcmp.lt.s32.totalorder %v2618, 858993459
    %v2621 = vsel %vm2611, %v2558, 0.0
    %v2622 = vsel %vm2614, %v2559, 0.0
    %v2623 = vsel %vm2617, %v2560, 0.0
    %v2624 = vsel %vm2620, %v2561, 0.0
    %v2625 = vpack.c.bf16 %v2621, %v2621
    %v2626 = vpack.c.bf16 %v2622, %v2622
    %v2627 = vpack.c.bf16 %v2623, %v2623
    %v2628 = vpack.c.bf16 %v2624, %v2624
    %v2629 = vld [vmem:[#allocation12] sm:$0xff]
    %v2630 = vld [vmem:[#allocation12 + $0x8] sm:$0xff]
    %v2631 = vld [vmem:[#allocation12 + $0x10] sm:$0xff]
    %v2632 = vld [vmem:[#allocation12 + $0x18] sm:$0xff]
    %v2633 = vld [vmem:[#allocation12 + $0x20] sm:$0xff]
    %v2634 = vld [vmem:[#allocation12 + $0x28] sm:$0xff]
    %v2635 = vld [vmem:[#allocation12 + $0x30] sm:$0xff]
    %v2636 = vld [vmem:[#allocation12 + $0x38] sm:$0xff]
    %v2637 = vld [vmem:[#allocation12 + $0x40] sm:$0xff]
    %v2638 = vld [vmem:[#allocation12 + $0x48] sm:$0xff]
    %v2639 = vld [vmem:[#allocation12 + $0x50] sm:$0xff]
    %v2640 = vld [vmem:[#allocation12 + $0x58] sm:$0xff]
    %v2641 = vld [vmem:[#allocation12 + $0x60] sm:$0xff]
    %v2642 = vld [vmem:[#allocation12 + $0x68] sm:$0xff]
    %v2643 = vld [vmem:[#allocation12 + $0x70] sm:$0xff]
    %v2644 = vld [vmem:[#allocation12 + $0x78] sm:$0xff]
    %v2645 = vld [vmem:[#allocation12 + $0x80] sm:$0xff]
    %v2646 = vld [vmem:[#allocation12 + $0x88] sm:$0xff]
    %v2647 = vld [vmem:[#allocation12 + $0x90] sm:$0xff]
    %v2648 = vld [vmem:[#allocation12 + $0x98] sm:$0xff]
    %v2649 = vld [vmem:[#allocation12 + $0xa0] sm:$0xff]
    %v2650 = vld [vmem:[#allocation12 + $0xa8] sm:$0xff]
    %v2651 = vld [vmem:[#allocation12 + $0xb0] sm:$0xff]
    %v2652 = vld [vmem:[#allocation12 + $0xb8] sm:$0xff]
    %v2653 = vld [vmem:[#allocation12 + $0xc0] sm:$0xff]
    %v2654 = vld [vmem:[#allocation12 + $0xc8] sm:$0xff]
    %v2655 = vld [vmem:[#allocation12 + $0xd0] sm:$0xff]
    %v2656 = vld [vmem:[#allocation12 + $0xd8] sm:$0xff]
    %v2657 = vld [vmem:[#allocation12 + $0xe0] sm:$0xff]
    %v2658 = vld [vmem:[#allocation12 + $0xe8] sm:$0xff]
    %v2659 = vld [vmem:[#allocation12 + $0xf0] sm:$0xff]
    %v2660 = vld [vmem:[#allocation12 + $0xf8] sm:$0xff]
    %v2661 = vld [vmem:[#allocation12 + $0x100] sm:$0xff]
    %v2662 = vld [vmem:[#allocation12 + $0x108] sm:$0xff]
    %v2663 = vld [vmem:[#allocation12 + $0x110] sm:$0xff]
    %v2664 = vld [vmem:[#allocation12 + $0x118] sm:$0xff]
    %v2665 = vld [vmem:[#allocation12 + $0x120] sm:$0xff]
    %v2666 = vld [vmem:[#allocation12 + $0x128] sm:$0xff]
    %v2667 = vld [vmem:[#allocation12 + $0x130] sm:$0xff]
    %v2668 = vld [vmem:[#allocation12 + $0x138] sm:$0xff]
    %v2669 = vld [vmem:[#allocation12 + $0x140] sm:$0xff]
    %v2670 = vld [vmem:[#allocation12 + $0x148] sm:$0xff]
    %v2671 = vld [vmem:[#allocation12 + $0x150] sm:$0xff]
    %v2672 = vld [vmem:[#allocation12 + $0x158] sm:$0xff]
    %v2673 = vld [vmem:[#allocation12 + $0x160] sm:$0xff]
    %v2674 = vld [vmem:[#allocation12 + $0x168] sm:$0xff]
    %v2675 = vld [vmem:[#allocation12 + $0x170] sm:$0xff]
    %v2676 = vld [vmem:[#allocation12 + $0x178] sm:$0xff]
    %v2677 = vld [vmem:[#allocation12 + $0x180] sm:$0xff]
    %v2678 = vld [vmem:[#allocation12 + $0x188] sm:$0xff]
    %v2679 = vld [vmem:[#allocation12 + $0x190] sm:$0xff]
    %v2680 = vld [vmem:[#allocation12 + $0x198] sm:$0xff]
    %v2681 = vld [vmem:[#allocation12 + $0x1a0] sm:$0xff]
    %v2682 = vld [vmem:[#allocation12 + $0x1a8] sm:$0xff]
    %v2683 = vld [vmem:[#allocation12 + $0x1b0] sm:$0xff]
    %v2684 = vld [vmem:[#allocation12 + $0x1b8] sm:$0xff]
    %v2685 = vld [vmem:[#allocation12 + $0x1c0] sm:$0xff]
    %v2686 = vld [vmem:[#allocation12 + $0x1c8] sm:$0xff]
    %v2687 = vld [vmem:[#allocation12 + $0x1d0] sm:$0xff]
    %v2688 = vld [vmem:[#allocation12 + $0x1d8] sm:$0xff]
    %v2689 = vld [vmem:[#allocation12 + $0x1e0] sm:$0xff]
    %v2690 = vld [vmem:[#allocation12 + $0x1e8] sm:$0xff]
    %v2691 = vld [vmem:[#allocation12 + $0x1f0] sm:$0xff]
    %v2692 = vld [vmem:[#allocation12 + $0x1f8] sm:$0xff]
    %v2693 = vld [vmem:[%s7] sm:$0x3]
    %v2695 = vperm.slane %v2693, 0
    %v2696 = vperm.slane %v2693, 1
    %v2763 = vunpack.c.l.b16 %v2629
    %v2764 = vunpack.c.h.b16 %v2629
    %v2765 = vunpack.c.l.b16 %v2630
    %v2766 = vunpack.c.h.b16 %v2630
    %v2767 = vunpack.c.l.b16 %v2631
    %v2768 = vunpack.c.h.b16 %v2631
    %v2769 = vunpack.c.l.b16 %v2632
    %v2770 = vunpack.c.h.b16 %v2632
    %v2771 = vunpack.c.l.b16 %v2633
    %v2772 = vunpack.c.h.b16 %v2633
    %v2773 = vunpack.c.l.b16 %v2634
    %v2774 = vunpack.c.h.b16 %v2634
    %v2775 = vunpack.c.l.b16 %v2635
    %v2776 = vunpack.c.h.b16 %v2635
    %v2777 = vunpack.c.l.b16 %v2636
    %v2778 = vunpack.c.h.b16 %v2636
    %v2779 = vunpack.c.l.b16 %v2637
    %v2780 = vunpack.c.h.b16 %v2637
    %v2781 = vunpack.c.l.b16 %v2638
    %v2782 = vunpack.c.h.b16 %v2638
    %v2783 = vunpack.c.l.b16 %v2639
    %v2784 = vunpack.c.h.b16 %v2639
    %v2785 = vunpack.c.l.b16 %v2640
    %v2786 = vunpack.c.h.b16 %v2640
    %v2787 = vunpack.c.l.b16 %v2641
    %v2788 = vunpack.c.h.b16 %v2641
    %v2789 = vunpack.c.l.b16 %v2642
    %v2790 = vunpack.c.h.b16 %v2642
    %v2791 = vunpack.c.l.b16 %v2643
    %v2792 = vunpack.c.h.b16 %v2643
    %v2793 = vunpack.c.l.b16 %v2644
    %v2794 = vunpack.c.h.b16 %v2644
    %v2795 = vunpack.c.l.b16 %v2645
    %v2796 = vunpack.c.h.b16 %v2645
    %v2797 = vunpack.c.l.b16 %v2646
    %v2798 = vunpack.c.h.b16 %v2646
    %v2799 = vunpack.c.l.b16 %v2647
    %v2800 = vunpack.c.h.b16 %v2647
    %v2801 = vunpack.c.l.b16 %v2648
    %v2802 = vunpack.c.h.b16 %v2648
    %v2803 = vunpack.c.l.b16 %v2649
    %v2804 = vunpack.c.h.b16 %v2649
    %v2805 = vunpack.c.l.b16 %v2650
    %v2806 = vunpack.c.h.b16 %v2650
    %v2807 = vunpack.c.l.b16 %v2651
    %v2808 = vunpack.c.h.b16 %v2651
    %v2809 = vunpack.c.l.b16 %v2652
    %v2810 = vunpack.c.h.b16 %v2652
    %v2811 = vunpack.c.l.b16 %v2653
    %v2812 = vunpack.c.h.b16 %v2653
    %v2813 = vunpack.c.l.b16 %v2654
    %v2814 = vunpack.c.h.b16 %v2654
    %v2815 = vunpack.c.l.b16 %v2655
    %v2816 = vunpack.c.h.b16 %v2655
    %v2817 = vunpack.c.l.b16 %v2656
    %v2818 = vunpack.c.h.b16 %v2656
    %v2819 = vunpack.c.l.b16 %v2657
    %v2820 = vunpack.c.h.b16 %v2657
    %v2821 = vunpack.c.l.b16 %v2658
    %v2822 = vunpack.c.h.b16 %v2658
    %v2823 = vunpack.c.l.b16 %v2659
    %v2824 = vunpack.c.h.b16 %v2659
    %v2825 = vunpack.c.l.b16 %v2660
    %v2826 = vunpack.c.h.b16 %v2660
    %v2827 = vunpack.c.l.b16 %v2661
    %v2828 = vunpack.c.h.b16 %v2661
    %v2829 = vunpack.c.l.b16 %v2662
    %v2830 = vunpack.c.h.b16 %v2662
    %v2831 = vunpack.c.l.b16 %v2663
    %v2832 = vunpack.c.h.b16 %v2663
    %v2833 = vunpack.c.l.b16 %v2664
    %v2834 = vunpack.c.h.b16 %v2664
    %v2835 = vunpack.c.l.b16 %v2665
    %v2836 = vunpack.c.h.b16 %v2665
    %v2837 = vunpack.c.l.b16 %v2666
    %v2838 = vunpack.c.h.b16 %v2666
    %v2839 = vunpack.c.l.b16 %v2667
    %v2840 = vunpack.c.h.b16 %v2667
    %v2841 = vunpack.c.l.b16 %v2668
    %v2842 = vunpack.c.h.b16 %v2668
    %v2843 = vunpack.c.l.b16 %v2669
    %v2844 = vunpack.c.h.b16 %v2669
    %v2845 = vunpack.c.l.b16 %v2670
    %v2846 = vunpack.c.h.b16 %v2670
    %v2847 = vunpack.c.l.b16 %v2671
    %v2848 = vunpack.c.h.b16 %v2671
    %v2849 = vunpack.c.l.b16 %v2672
    %v2850 = vunpack.c.h.b16 %v2672
    %v2851 = vunpack.c.l.b16 %v2673
    %v2852 = vunpack.c.h.b16 %v2673
    %v2853 = vunpack.c.l.b16 %v2674
    %v2854 = vunpack.c.h.b16 %v2674
    %v2855 = vunpack.c.l.b16 %v2675
    %v2856 = vunpack.c.h.b16 %v2675
    %v2857 = vunpack.c.l.b16 %v2676
    %v2858 = vunpack.c.h.b16 %v2676
    %v2859 = vunpack.c.l.b16 %v2677
    %v2860 = vunpack.c.h.b16 %v2677
    %v2861 = vunpack.c.l.b16 %v2678
    %v2862 = vunpack.c.h.b16 %v2678
    %v2863 = vunpack.c.l.b16 %v2679
    %v2864 = vunpack.c.h.b16 %v2679
    %v2865 = vunpack.c.l.b16 %v2680
    %v2866 = vunpack.c.h.b16 %v2680
    %v2867 = vunpack.c.l.b16 %v2681
    %v2868 = vunpack.c.h.b16 %v2681
    %v2869 = vunpack.c.l.b16 %v2682
    %v2870 = vunpack.c.h.b16 %v2682
    %v2871 = vunpack.c.l.b16 %v2683
    %v2872 = vunpack.c.h.b16 %v2683
    %v2873 = vunpack.c.l.b16 %v2684
    %v2874 = vunpack.c.h.b16 %v2684
    %v2875 = vunpack.c.l.b16 %v2685
    %v2876 = vunpack.c.h.b16 %v2685
    %v2877 = vunpack.c.l.b16 %v2686
    %v2878 = vunpack.c.h.b16 %v2686
    %v2879 = vunpack.c.l.b16 %v2687
    %v2880 = vunpack.c.h.b16 %v2687
    %v2881 = vunpack.c.l.b16 %v2688
    %v2882 = vunpack.c.h.b16 %v2688
    %v2883 = vunpack.c.l.b16 %v2689
    %v2884 = vunpack.c.h.b16 %v2689
    %v2885 = vunpack.c.l.b16 %v2690
    %v2886 = vunpack.c.h.b16 %v2690
    %v2887 = vunpack.c.l.b16 %v2691
    %v2888 = vunpack.c.h.b16 %v2691
    %v2889 = vunpack.c.l.b16 %v2692
    %v2890 = vunpack.c.h.b16 %v2692
    %v2891 = vpack.c.b16 %v2765, %v2763
    %v2892 = vpack.c.b16 %v2766, %v2764
    %v2893 = vpack.c.b16 %v2769, %v2767
    %v2894 = vpack.c.b16 %v2770, %v2768
    %v2895 = vpack.c.b16 %v2773, %v2771
    %v2896 = vpack.c.b16 %v2774, %v2772
    %v2897 = vpack.c.b16 %v2777, %v2775
    %v2898 = vpack.c.b16 %v2778, %v2776
    %v2899 = vpack.c.b16 %v2781, %v2779
    %v2900 = vpack.c.b16 %v2782, %v2780
    %v2901 = vpack.c.b16 %v2785, %v2783
    %v2902 = vpack.c.b16 %v2786, %v2784
    %v2903 = vpack.c.b16 %v2789, %v2787
    %v2904 = vpack.c.b16 %v2790, %v2788
    %v2905 = vpack.c.b16 %v2793, %v2791
    %v2906 = vpack.c.b16 %v2794, %v2792
    %v2907 = vpack.c.b16 %v2797, %v2795
    %v2908 = vpack.c.b16 %v2798, %v2796
    %v2909 = vpack.c.b16 %v2801, %v2799
    %v2910 = vpack.c.b16 %v2802, %v2800
    %v2911 = vpack.c.b16 %v2805, %v2803
    %v2912 = vpack.c.b16 %v2806, %v2804
    %v2913 = vpack.c.b16 %v2809, %v2807
    %v2914 = vpack.c.b16 %v2810, %v2808
    %v2915 = vpack.c.b16 %v2813, %v2811
    %v2916 = vpack.c.b16 %v2814, %v2812
    %v2917 = vpack.c.b16 %v2817, %v2815
    %v2918 = vpack.c.b16 %v2818, %v2816
    %v2919 = vpack.c.b16 %v2821, %v2819
    %v2920 = vpack.c.b16 %v2822, %v2820
    %v2921 = vpack.c.b16 %v2825, %v2823
    %v2922 = vpack.c.b16 %v2826, %v2824
    %v2923 = vpack.c.b16 %v2829, %v2827
    %v2924 = vpack.c.b16 %v2830, %v2828
    %v2925 = vpack.c.b16 %v2833, %v2831
    %v2926 = vpack.c.b16 %v2834, %v2832
    %v2927 = vpack.c.b16 %v2837, %v2835
    %v2928 = vpack.c.b16 %v2838, %v2836
    %v2929 = vpack.c.b16 %v2841, %v2839
    %v2930 = vpack.c.b16 %v2842, %v2840
    %v2931 = vpack.c.b16 %v2845, %v2843
    %v2932 = vpack.c.b16 %v2846, %v2844
    %v2933 = vpack.c.b16 %v2849, %v2847
    %v2934 = vpack.c.b16 %v2850, %v2848
    %v2935 = vpack.c.b16 %v2853, %v2851
    %v2936 = vpack.c.b16 %v2854, %v2852
    %v2937 = vpack.c.b16 %v2857, %v2855
    %v2938 = vpack.c.b16 %v2858, %v2856
    %v2939 = vpack.c.b16 %v2861, %v2859
    %v2940 = vpack.c.b16 %v2862, %v2860
    %v2941 = vpack.c.b16 %v2865, %v2863
    %v2942 = vpack.c.b16 %v2866, %v2864
    %v2943 = vpack.c.b16 %v2869, %v2867
    %v2944 = vpack.c.b16 %v2870, %v2868
    %v2945 = vpack.c.b16 %v2873, %v2871
    %v2946 = vpack.c.b16 %v2874, %v2872
    %v2947 = vpack.c.b16 %v2877, %v2875
    %v2948 = vpack.c.b16 %v2878, %v2876
    %v2949 = vpack.c.b16 %v2881, %v2879
    %v2950 = vpack.c.b16 %v2882, %v2880
    %v2951 = vpack.c.b16 %v2885, %v2883
    %v2952 = vpack.c.b16 %v2886, %v2884
    %v2953 = vpack.c.b16 %v2889, %v2887
    %v2954 = vpack.c.b16 %v2890, %v2888
    %3019 = vmatpush.bf16.msra.mxu0 %v2905
    %3020 = vmatpush.bf16.msra.mxu0 %v2903
    %3021 = vmatpush.bf16.msra.mxu0 %v2901
    %3022 = vmatpush.bf16.msra.mxu0 %v2899
    %3023 = vmatpush.bf16.msra.mxu0 %v2897
    %3024 = vmatpush.bf16.msra.mxu0 %v2895
    %3025 = vmatpush.bf16.msra.mxu0 %v2893
    %3026 = vmatpush.bf16.msra.mxu0 %v2891
    %3027 = vmatmul.bf16.gmra.mxu0 %v2625
    %v3028 = vpop.f32.mrf.mxu0
    %v3029 = vadd.f32 %v2695, %v3028
    %v3030 = vpop.f32.mrf.mxu0
    %3031 = vdwg.mxu0
    %3032 = vmatpush.bf16.msra.mxu0 %v2921
    %3033 = vmatpush.bf16.msra.mxu0 %v2919
    %3034 = vmatpush.bf16.msra.mxu0 %v2917
    %3035 = vmatpush.bf16.msra.mxu0 %v2915
    %3036 = vmatpush.bf16.msra.mxu0 %v2913
    %3037 = vmatpush.bf16.msra.mxu0 %v2911
    %3038 = vmatpush.bf16.msra.mxu0 %v2909
    %3039 = vmatpush.bf16.msra.mxu0 %v2907
    %3040 = vmatmul.bf16.gmra.mxu0 %v2626
    %v3041 = vpop.f32.mrf.mxu0
    %v3042 = vadd.f32 %v3029, %v3041
    %v3043 = vpop.f32.mrf.mxu0
    %3044 = vdwg.mxu0
    %3045 = vmatpush.bf16.msra.mxu0 %v2937
    %3046 = vmatpush.bf16.msra.mxu0 %v2935
    %3047 = vmatpush.bf16.msra.mxu0 %v2933
    %3048 = vmatpush.bf16.msra.mxu0 %v2931
    %3049 = vmatpush.bf16.msra.mxu0 %v2929
    %3050 = vmatpush.bf16.msra.mxu0 %v2927
    %3051 = vmatpush.bf16.msra.mxu0 %v2925
    %3052 = vmatpush.bf16.msra.mxu0 %v2923
    %3053 = vmatmul.bf16.gmra.mxu0 %v2627
    %v3054 = vpop.f32.mrf.mxu0
    %v3055 = vadd.f32 %v3042, %v3054
    %v3056 = vpop.f32.mrf.mxu0
    %3057 = vdwg.mxu0
    %3058 = vmatpush.bf16.msra.mxu0 %v2953
    %3059 = vmatpush.bf16.msra.mxu0 %v2951
    %3060 = vmatpush.bf16.msra.mxu0 %v2949
    %3061 = vmatpush.bf16.msra.mxu0 %v2947
    %3062 = vmatpush.bf16.msra.mxu0 %v2945
    %3063 = vmatpush.bf16.msra.mxu0 %v2943
    %3064 = vmatpush.bf16.msra.mxu0 %v2941
    %3065 = vmatpush.bf16.msra.mxu0 %v2939
    %3066 = vmatmul.bf16.gmra.mxu0 %v2628
    %v3067 = vpop.f32.mrf.mxu0
    %v3068 = vadd.f32 %v3055, %v3067
    %v3069 = vpop.f32.mrf.mxu0
    %3070 = vdwg.mxu0
    %3071 = vmatpush.bf16.msra.mxu0 %v2906
    %3072 = vmatpush.bf16.msra.mxu0 %v2904
    %3073 = vmatpush.bf16.msra.mxu0 %v2902
    %3074 = vmatpush.bf16.msra.mxu0 %v2900
    %3075 = vmatpush.bf16.msra.mxu0 %v2898
    %3076 = vmatpush.bf16.msra.mxu0 %v2896
    %3077 = vmatpush.bf16.msra.mxu0 %v2894
    %3078 = vmatpush.bf16.msra.mxu0 %v2892
    %3079 = vmatmul.bf16.gmra.mxu0 %v2625
    %v3080 = vpop.f32.mrf.mxu0
    %v3081 = vadd.f32 %v2696, %v3080
    %v3082 = vpop.f32.mrf.mxu0
    %3083 = vdwg.mxu0
    %3084 = vmatpush.bf16.msra.mxu0 %v2922
    %3085 = vmatpush.bf16.msra.mxu0 %v2920
    %3086 = vmatpush.bf16.msra.mxu0 %v2918
    %3087 = vmatpush.bf16.msra.mxu0 %v2916
    %3088 = vmatpush.bf16.msra.mxu0 %v2914
    %3089 = vmatpush.bf16.msra.mxu0 %v2912
    %3090 = vmatpush.bf16.msra.mxu0 %v2910
    %3091 = vmatpush.bf16.msra.mxu0 %v2908
    %3092 = vmatmul.bf16.gmra.mxu0 %v2626
    %v3093 = vpop.f32.mrf.mxu0
    %v3094 = vadd.f32 %v3081, %v3093
    %v3095 = vpop.f32.mrf.mxu0
    %3096 = vdwg.mxu0
    %3097 = vmatpush.bf16.msra.mxu0 %v2938
    %3098 = vmatpush.bf16.msra.mxu0 %v2936
    %3099 = vmatpush.bf16.msra.mxu0 %v2934
    %3100 = vmatpush.bf16.msra.mxu0 %v2932
    %3101 = vmatpush.bf16.msra.mxu0 %v2930
    %3102 = vmatpush.bf16.msra.mxu0 %v2928
    %3103 = vmatpush.bf16.msra.mxu0 %v2926
    %3104 = vmatpush.bf16.msra.mxu0 %v2924
    %3105 = vmatmul.bf16.gmra.mxu0 %v2627
    %v3106 = vpop.f32.mrf.mxu0
    %v3107 = vadd.f32 %v3094, %v3106
    %v3108 = vpop.f32.mrf.mxu0
    %3109 = vdwg.mxu0
    %3110 = vmatpush.bf16.msra.mxu0 %v2954
    %3111 = vmatpush.bf16.msra.mxu0 %v2952
    %3112 = vmatpush.bf16.msra.mxu0 %v2950
    %3113 = vmatpush.bf16.msra.mxu0 %v2948
    %3114 = vmatpush.bf16.msra.mxu0 %v2946
    %3115 = vmatpush.bf16.msra.mxu0 %v2944
    %3116 = vmatpush.bf16.msra.mxu0 %v2942
    %3117 = vmatpush.bf16.msra.mxu0 %v2940
    %3118 = vmatmul.bf16.gmra.mxu0 %v2628
    %v3119 = vpop.f32.mrf.mxu0
    %v3120 = vadd.f32 %v3107, %v3119
    %v3121 = vpop.f32.mrf.mxu0
    %3122 = vdwg.mxu0
    %v3123 = vmul.f32 %v3068, 0.2
    %v3124 = vmul.f32 %v3120, 0.2
    %v3125 = vmax.f32 %v3068, %v3123
    %v3126 = vmax.f32 %v3120, %v3124
    %s3127 = sxor.u32 %s113, 923219018
    %v3128 = vmul.u32 %v452, 256
    %v3129 = vadd.s32 %v3128, %v454
    %v3130 = vadd.s32 %v3128, %v455
    %v3131 = vstv %s3127
    %v3132 = vadd.s32 %v3129, %v3131
    %v3133 = vadd.s32 %v3130, %v3131
    %v3134 = vmul.u32 %v3132, 2654435769
    %v3135 = vmul.u32 %v3133, 2654435769
    %v3136 = vshrl.u32 %v3134, 16
    %v3137 = vshrl.u32 %v3135, 16
    %v3138 = vxor.u32 %v3134, %v3136
    %v3139 = vxor.u32 %v3135, %v3137
    %v3140 = vmul.u32 %v3138, 2146121005
    %v3141 = vmul.u32 %v3139, 2146121005
    %v3142 = vshrl.u32 %v3140, 15
    %v3143 = vshrl.u32 %v3141, 15
    %v3144 = vxor.u32 %v3140, %v3142
    %v3145 = vxor.u32 %v3141, %v3143
    %v3146 = vmul.u32 %v3144, 2221713035
    %v3147 = vmul.u32 %v3145, 2221713035
    %v3148 = vshrl.u32 %v3146, 16
    %v3149 = vshrl.u32 %v3147, 16
    %v3150 = vxor.u32 %v3146, %v3148
    %v3151 = vxor.u32 %v3147, %v3149
    %v3152 = vadd.s32 %v3150, 2147483648
    %vm3154 = vcmp.lt.s32.totalorder %v3152, 858993459
    %v3155 = vadd.s32 %v3151, 2147483648
    %vm3157 = vcmp.lt.s32.totalorder %v3155, 858993459
    %v3158 = vsel %vm3154, %v3125, 0.0
    %v3159 = vsel %vm3157, %v3126, 0.0
    %v3160 = vld [vmem:[%s8] sm:$0x3]
    %v3162 = vperm.slane %v3160, 0
    %v3163 = vperm.slane %v3160, 1
    %v3166 = vmul.f32 %v3158, %v3162
    %v3167 = vmul.f32 %v3159, %v3163
    %v3168 = vadd.f32 %v3166, %v3167
    %3169 = vadd.xlane.f32.xlu0 %v3168
    %v3170 = vpop.xlane.xlu0 %3169
    %v3171 = vld [vmem:[#allocation4] sm:$0x1]
    %v3173 = vperm.slane %v3171, 0
    %v3175 = vadd.f32 %v3170, %v3173
    %v3176 = vxor.u32 %v3175, 2147483648
    %v3177 = vmul.f32 %v3176, 1.442695
    %v3178 = vpow.pop %v3177
    %v3179 = vadd.f32 %v3178, 1.0
    %v3180 = vrcp.pop %v3179
    %v3181 = vmul.f32 %v3179, %v3180
    %v3182 = vsub.f32 1.0, %v3181
    %v3183 = vmul.f32 %v3180, %v3182
    %v3184 = vadd.f32 %v3180, %v3183
    %vm3185 = vweird.f32 %v3179
    %vm3186 = vweird.f32 %v3180
    %vm3187 = vmor %vm3185, %vm3186
    %v3188 = vsel %vm3187, %v3180, %v3184
    %v3189 = vand.u32 2147483647, %v3179
    %vm3190 = vcmp.eq.f32.partialorder %v3189, 8.507059e+37
    %v3191 = vand.u32 %v3179, 2147483648
    %v3192 = vor.u32 1.1754944e-38, %v3191
    %v3193 = vsel %vm3190, %v3192, %v3188
    %v3194 = vmul.f32 1.0, %v3193
    %vm3195 = vcmask 7168
    %3196 = vst.msk [vmem:[%s10] sm:$0xff] %vm3195, %v3194
    // Predicated region
    $region58: #{tpu_custom_call.1} parent=1 // pred_check
      _
    $region59: #{tpu_custom_call.1} parent=1 // pred_check_branch
      %3198 = sbr.rel (0) target = $region61
    $region60: #{tpu_custom_call.1} parent=1 // pred_region
      _
    $region61: #{tpu_custom_call.1} parent=1 // pred_fallthru
      _
    // Predicated region
    $region62: #{tpu_custom_call.1} parent=1 // pred_check
      _
    $region63: #{tpu_custom_call.1} parent=1 // pred_check_branch
      %3200 = sbr.rel (0) target = $region65
    $region64: #{tpu_custom_call.1} parent=1 // pred_region
      _
    $region65: #{tpu_custom_call.1} parent=1 // pred_fallthru
      _
    %3201 = vsyncpa [#allocation6], 1
    %3202 = vsyncpa [#allocation8], 1
    %3203 = vsyncpa [#allocation11], 1

</llo_original>
